<compile_context>
chip_gen: v5e
topology: v5e:2x2
jax: 0.10.0
libtpu: 0.0.40
codegen_flags: <defaults>
</compile_context>

<pallas_src>
import jax
import jax.numpy as jnp
from jax.experimental import pallas as pl
from jax.experimental.pallas import tpu as pltpu


def _round_up(x, m):
    return (x + m - 1) // m * m


# ----------------------------------------------------------------------------
# Fused kernel: all layers, all timesteps, one pallas_call.
# ----------------------------------------------------------------------------
def _make_fused_gru_kernel(*, T, Bp, Hp, L, unroll):
    """Builds the kernel body for static (T, Bp, Hp, L).

    Ref layout (positional):
      gi0_ref   : (T*Bp, 3*Hp)  layer-0 input projection (biases folded in)
      whh0_ref  : (Hp, 3*Hp)    layer-0 hidden->hidden fused weights
      bhhn0_ref : (1, Hp)       layer-0 b_hh_n
      for each layer l = 1..L-1:
        wih_ref  : (Hp, 3*Hp)   input->hidden fused weights
        bfold_ref: (1, 3*Hp)    b_ih + [b_hh_r, b_hh_z, 0]
        whh_ref  : (Hp, 3*Hp)
        bhhn_ref : (1, Hp)
      out_ref   : (Bp, Hp)      final hidden state of the top layer
      (if L > 1) seq_scr (T*Bp, Hp), gi_scr (T*Bp, 3*Hp) VMEM scratch
    """

    def kernel(*refs):
        idx = 0
        gi0_ref = refs[idx]; idx += 1
        whh0_ref = refs[idx]; idx += 1
        bhhn0_ref = refs[idx]; idx += 1
        upper = []
        for _ in range(L - 1):
            upper.append(refs[idx:idx + 4])
            idx += 4
        out_ref = refs[idx]; idx += 1
        if L > 1:
            seq_scr = refs[idx]; idx += 1
            gi_scr = refs[idx]; idx += 1
        else:
            seq_scr = None
            gi_scr = None

        def run_layer(gi_ref, whh_ref, bhhn_ref, write_seq):
            whh = whh_ref[...]          # (Hp, 3*Hp), loop-invariant, VMEM
            bhhn = bhhn_ref[...]        # (1, Hp)

            def step(t, h):
                row = pl.multiple_of(t * Bp, Bp)
                gi_t = gi_ref[pl.ds(row, Bp), :]                     # (Bp, 3*Hp)
                gh = jnp.dot(h, whh, preferred_element_type=jnp.float32)
                r = jax.nn.sigmoid(gi_t[:, 0:Hp] + gh[:, 0:Hp])
                z = jax.nn.sigmoid(gi_t[:, Hp:2 * Hp] + gh[:, Hp:2 * Hp])
                n = jnp.tanh(gi_t[:, 2 * Hp:] + r * (gh[:, 2 * Hp:] + bhhn))
                h_new = (1.0 - z) * n + z * h
                if write_seq:
                    seq_scr[pl.ds(row, Bp), :] = h_new
                return h_new

            h0 = jnp.zeros((Bp, Hp), jnp.float32)
            return jax.lax.fori_loop(0, T, step, h0, unroll=unroll)

        # Layer 0: GI already precomputed (wrapper GEMM).
        h = run_layer(gi0_ref, whh0_ref, bhhn0_ref, write_seq=(L > 1))

        # Layers 1..L-1: hoist the input projection of the whole sequence into
        # one big GEMM, then run the cheap recurrence.
        for li, (wih_ref, bfold_ref, whh_ref, bhhn_ref) in enumerate(upper):
            gi_scr[...] = (
                jnp.dot(seq_scr[...], wih_ref[...],
                        preferred_element_type=jnp.float32)
                + bfold_ref[...]
            )
            h = run_layer(gi_scr, whh_ref, bhhn_ref, write_seq=(li < L - 2))

        out_ref[...] = h

    return kernel


# ----------------------------------------------------------------------------
# Parameter packing / padding (wrapper-side XLA).
# ----------------------------------------------------------------------------
def _fuse_pad_w(w, din_p, h_p):
    """(3, Din, H) gate-stacked -> (din_p, 3*h_p) fused, zero-padded."""
    _, din, h = w.shape
    w = jnp.transpose(w, (1, 0, 2))                       # (Din, 3, H)
    w = jnp.pad(w, ((0, din_p - din), (0, 0), (0, h_p - h)))
    return w.reshape(din_p, 3 * h_p)


def _fold_pad_bias(bih, bhh, h_p):
    """b_ih + [b_hh_r, b_hh_z, 0]  ->  (1, 3*h_p)."""
    mask = jnp.array([1.0, 1.0, 0.0], jnp.float32).reshape(3, 1, 1)
    bf = (bih + bhh * mask)[:, 0, :]                      # (3, H)
    bf = jnp.pad(bf, ((0, 0), (0, h_p - bf.shape[-1])))   # (3, h_p)
    return bf.reshape(1, 3 * h_p)


def _pad_bhh_n(bhh, h_p):
    b = bhh[2]                                            # (1, H)
    return jnp.pad(b, ((0, 0), (0, h_p - b.shape[-1])))   # (1, h_p)


def _layer0_gi(x_btd, wih0, bih0, bhh0, b_p, h_p):
    """One big GEMM for layer 0's input projection, padded to (T*Bp, 3*Hp)."""
    B, T, _ = x_btd.shape
    H = wih0.shape[-1]
    x_flat = jnp.transpose(x_btd, (1, 0, 2)).astype(jnp.float32).reshape(T * B, -1)
    gi = jnp.einsum("nd,gdh->ngh", x_flat, wih0)          # (T*B, 3, H)
    mask = jnp.array([1.0, 1.0, 0.0], jnp.float32).reshape(3, 1, 1)
    bf = (bih0 + bhh0 * mask)[:, 0, :]                    # (3, H)
    gi = gi + bf[None]
    gi = gi.reshape(T, B, 3, H)
    gi = jnp.pad(gi, ((0, 0), (0, b_p - B), (0, 0), (0, h_p - H)))
    return gi.reshape(T * b_p, 3 * h_p)


# ----------------------------------------------------------------------------
# Forward pass: RNNEncoder.forward(x)  ->  output[:, -1]
# ----------------------------------------------------------------------------
@jax.jit
def rnn_encoder_forward(x_btd, params):
    """x (B, T, input_dim) -> y (B, hidden_size)."""
    B, T, _ = x_btd.shape
    H = params[0][1].shape[-1]          # whh: (3, H, H)
    L = len(params)
    Bp = _round_up(max(B, 8), 8)        # f32 sublane
    Hp = _round_up(max(H, 128), 128)    # lane
    G = 3 * Hp

    wih0, whh0, bih0, bhh0 = params[0]
    kernel_inputs = [
        _layer0_gi(x_btd, wih0, bih0, bhh0, Bp, Hp),
        _fuse_pad_w(whh0, Hp, Hp),
        _pad_bhh_n(bhh0, Hp),
    ]
    for (wih, whh, bih, bhh) in params[1:]:
        kernel_inputs += [
            _fuse_pad_w(wih, Hp, Hp),
            _fold_pad_bias(bih, bhh, Hp),
            _fuse_pad_w(whh, Hp, Hp),
            _pad_bhh_n(bhh, Hp),
        ]

    scratch = []
    if L > 1:
        scratch = [
            pltpu.VMEM((T * Bp, Hp), jnp.float32),   # previous layer's sequence
            pltpu.VMEM((T * Bp, G), jnp.float32),    # current layer's GI
        ]

    kernel = _make_fused_gru_kernel(T=T, Bp=Bp, Hp=Hp, L=L, unroll=(T <= 16))

    out = pl.pallas_call(
        kernel,
        out_shape=jax.ShapeDtypeStruct((Bp, Hp), jnp.float32),
        in_specs=[pl.BlockSpec(memory_space=pltpu.MemorySpace.VMEM)]
        * len(kernel_inputs),
        out_specs=pl.BlockSpec(memory_space=pltpu.MemorySpace.VMEM),
        scratch_shapes=scratch,
    )(*kernel_inputs)

    return out[:B, :H]


# ----------------------------------------------------------------------------
# Parameter init (PyTorch nn.GRU shapes, gate order r, z, n) and reference.
# ----------------------------------------------------------------------------
def init_gru_params(key, input_dim, hidden_size, num_layers):
    """Per-layer (wih (3,Din,H), whh (3,H,H), bih (3,1,H), bhh (3,1,H)),
    pre-transposed so x @ W works."""
    params = []
    k = 1.0 / jnp.sqrt(float(hidden_size))
    for layer in range(num_layers):
        din = input_dim if layer == 0 else hidden_size
        key, k1, k2, k3, k4 = jax.random.split(key, 5)
        w_ih = jax.random.uniform(k1, (3, hidden_size, din), jnp.float32, -k, k)
        w_hh = jax.random.uniform(k2, (3, hidden_size, hidden_size), jnp.float32, -k, k)
        b_ih = jax.random.uniform(k3, (3, 1, hidden_size), jnp.float32, -k, k)
        b_hh = jax.random.uniform(k4, (3, 1, hidden_size), jnp.float32, -k, k)
        params.append(
            (
                jnp.transpose(w_ih, (0, 2, 1)),  # (3, Din, H)
                jnp.transpose(w_hh, (0, 2, 1)),  # (3, H, H)
                b_ih,
                b_hh,
            )
        )
    return params


def rnn_encoder_reference(x_btd, params):
    """Pure-JAX reference (lax.scan), matches PyTorch nn.GRU math."""
    x = jnp.transpose(x_btd, (1, 0, 2)).astype(jnp.float32)
    for (wih, whh, bih, bhh) in params:
        H = whh.shape[-1]
        B = x.shape[1]

        def step(h, xt, wih=wih, whh=whh, bih=bih, bhh=bhh):
            gi_r = xt @ wih[0] + bih[0]
            gi_z = xt @ wih[1] + bih[1]
            gi_n = xt @ wih[2] + bih[2]
            gh_r = h @ whh[0] + bhh[0]
            gh_z = h @ whh[1] + bhh[1]
            gh_n = h @ whh[2] + bhh[2]
            r = jax.nn.sigmoid(gi_r + gh_r)
            z = jax.nn.sigmoid(gi_z + gh_z)
            n = jnp.tanh(gi_n + r * gh_n)
            h_new = (1.0 - z) * n + z * h
            return h_new, h_new

        h0 = jnp.zeros((B, H), jnp.float32)
        _, ys = jax.lax.scan(step, h0, x)
        x = ys
    return x[-1]


if __name__ == "__main__":
    # Small shapes consistent with the module: input [batch, seq, input_dim].
    B, T, INPUT_DIM, HIDDEN, NUM_LAYERS = 2, 8, 16, 32, 2

    key = jax.random.PRNGKey(0)
    key, xk = jax.random.split(key)
    x = jax.random.normal(xk, (B, T, INPUT_DIM), jnp.float32)

    params = init_gru_params(key, INPUT_DIM, HIDDEN, NUM_LAYERS)

    y = rnn_encoder_forward(x, params)
    y = jax.block_until_ready(y)
    assert y.shape == (B, HIDDEN), y.shape

    y_ref = rnn_encoder_reference(x, params)
    err = float(jnp.max(jnp.abs(y - y_ref)))
    assert jnp.allclose(y, y_ref, atol=1e-4, rtol=1e-4), err

    print("KERNEL_OK")
</pallas_src>

<mosaic_0001>
module attributes {stable_mosaic.version = 11 : i64} {
  func.func @kernel(%arg0: memref<64x384xf32, #tpu.memory_space<vmem>>, %arg1: memref<128x384xf32, #tpu.memory_space<vmem>>, %arg2: memref<1x128xf32, #tpu.memory_space<vmem>>, %arg3: memref<128x384xf32, #tpu.memory_space<vmem>>, %arg4: memref<1x384xf32, #tpu.memory_space<vmem>>, %arg5: memref<128x384xf32, #tpu.memory_space<vmem>>, %arg6: memref<1x128xf32, #tpu.memory_space<vmem>>, %arg7: memref<8x128xf32, #tpu.memory_space<vmem>>, %arg8: memref<64x128xf32, #tpu.memory_space<vmem>>, %arg9: memref<64x384xf32, #tpu.memory_space<vmem>>) attributes {dimension_semantics = [], scalar_prefetch = 0 : i64, scratch_operands = 2 : i64, tpu.core_type = #tpu.core_type<tc>} {
    %c0 = arith.constant 0 : index
    %c0_0 = arith.constant 0 : index
    %0 = vector.load %arg1[%c0, %c0_0] : memref<128x384xf32, #tpu.memory_space<vmem>>, vector<128x384xf32>
    %c0_1 = arith.constant 0 : index
    %c0_2 = arith.constant 0 : index
    %1 = vector.load %arg2[%c0_1, %c0_2] : memref<1x128xf32, #tpu.memory_space<vmem>>, vector<1x128xf32>
    %cst = arith.constant 0.000000e+00 : f32
    %2 = vector.broadcast %cst : f32 to vector<8x128xf32>
    %c0_i32 = arith.constant 0 : i32
    %c8_i32 = arith.constant 8 : i32
    %3 = arith.muli %c0_i32, %c8_i32 : i32
    %4 = tpu.assume_multiple %3, 8 : i32
    %5 = arith.index_cast %4 : i32 to index
    %c0_3 = arith.constant 0 : index
    %6 = vector.load %arg0[%5, %c0_3] : memref<64x384xf32, #tpu.memory_space<vmem>>, vector<8x384xf32>
    %cst_4 = arith.constant dense<0.000000e+00> : vector<8x384xf32>
    %7 = tpu.matmul %2, %0, %cst_4 {dimension_numbers = #tpu.dot_dimension_numbers<[1], [0], [0], [1], [0, 0, 1, 1], [], []>} : vector<8x128xf32>, vector<128x384xf32>, vector<8x384xf32> -> vector<8x384xf32>
    %8 = vector.extract_strided_slice %6 {offsets = [0, 0], sizes = [8, 128], strides = [1, 1]} : vector<8x384xf32> to vector<8x128xf32>
    %9 = vector.extract_strided_slice %7 {offsets = [0, 0], sizes = [8, 128], strides = [1, 1]} : vector<8x384xf32> to vector<8x128xf32>
    %10 = arith.addf %8, %9 : vector<8x128xf32>
    %11 = arith.negf %10 : vector<8x128xf32>
    %12 = math.exp %11 : vector<8x128xf32>
    %cst_5 = arith.constant 1.000000e+00 : f32
    %13 = vector.broadcast %cst_5 : f32 to vector<8x128xf32>
    %14 = arith.addf %13, %12 : vector<8x128xf32>
    %15 = arith.divf %13, %14 : vector<8x128xf32>
    %16 = vector.extract_strided_slice %6 {offsets = [0, 128], sizes = [8, 128], strides = [1, 1]} : vector<8x384xf32> to vector<8x128xf32>
    %17 = vector.extract_strided_slice %7 {offsets = [0, 128], sizes = [8, 128], strides = [1, 1]} : vector<8x384xf32> to vector<8x128xf32>
    %18 = arith.addf %16, %17 : vector<8x128xf32>
    %19 = arith.negf %18 : vector<8x128xf32>
    %20 = math.exp %19 : vector<8x128xf32>
    %cst_6 = arith.constant 1.000000e+00 : f32
    %21 = vector.broadcast %cst_6 : f32 to vector<8x128xf32>
    %22 = arith.addf %21, %20 : vector<8x128xf32>
    %23 = arith.divf %21, %22 : vector<8x128xf32>
    %24 = vector.extract_strided_slice %6 {offsets = [0, 256], sizes = [8, 128], strides = [1, 1]} : vector<8x384xf32> to vector<8x128xf32>
    %25 = vector.extract_strided_slice %7 {offsets = [0, 256], sizes = [8, 128], strides = [1, 1]} : vector<8x384xf32> to vector<8x128xf32>
    %26 = vector.broadcast %1 : vector<1x128xf32> to vector<8x128xf32>
    %27 = arith.addf %25, %26 : vector<8x128xf32>
    %28 = arith.mulf %15, %27 : vector<8x128xf32>
    %29 = arith.addf %24, %28 : vector<8x128xf32>
    %30 = math.tanh %29 : vector<8x128xf32>
    %cst_7 = arith.constant 1.000000e+00 : f32
    %31 = vector.broadcast %cst_7 : f32 to vector<8x128xf32>
    %32 = arith.subf %31, %23 : vector<8x128xf32>
    %33 = arith.mulf %32, %30 : vector<8x128xf32>
    %34 = arith.mulf %23, %2 : vector<8x128xf32>
    %35 = arith.addf %33, %34 : vector<8x128xf32>
    %36 = arith.index_cast %4 : i32 to index
    %c0_8 = arith.constant 0 : index
    %37 = vector.load %arg8[%36, %c0_8] : memref<64x128xf32, #tpu.memory_space<vmem>>, vector<8x128xf32>
    tpu.vector_store %arg8[%36, %c0_8], %35 {strides = array<i32>} : memref<64x128xf32, #tpu.memory_space<vmem>>, vector<8x128xf32>,
    %c1_i32 = arith.constant 1 : i32
    %c8_i32_9 = arith.constant 8 : i32
    %38 = arith.muli %c1_i32, %c8_i32_9 : i32
    %39 = tpu.assume_multiple %38, 8 : i32
    %40 = arith.index_cast %39 : i32 to index
    %c0_10 = arith.constant 0 : index
    %41 = vector.load %arg0[%40, %c0_10] : memref<64x384xf32, #tpu.memory_space<vmem>>, vector<8x384xf32>
    %cst_11 = arith.constant dense<0.000000e+00> : vector<8x384xf32>
    %42 = tpu.matmul %35, %0, %cst_11 {dimension_numbers = #tpu.dot_dimension_numbers<[1], [0], [0], [1], [0, 0, 1, 1], [], []>} : vector<8x128xf32>, vector<128x384xf32>, vector<8x384xf32> -> vector<8x384xf32>
    %43 = vector.extract_strided_slice %41 {offsets = [0, 0], sizes = [8, 128], strides = [1, 1]} : vector<8x384xf32> to vector<8x128xf32>
    %44 = vector.extract_strided_slice %42 {offsets = [0, 0], sizes = [8, 128], strides = [1, 1]} : vector<8x384xf32> to vector<8x128xf32>
    %45 = arith.addf %43, %44 : vector<8x128xf32>
    %46 = arith.negf %45 : vector<8x128xf32>
    %47 = math.exp %46 : vector<8x128xf32>
    %cst_12 = arith.constant 1.000000e+00 : f32
    %48 = vector.broadcast %cst_12 : f32 to vector<8x128xf32>
    %49 = arith.addf %48, %47 : vector<8x128xf32>
    %50 = arith.divf %48, %49 : vector<8x128xf32>
    %51 = vector.extract_strided_slice %41 {offsets = [0, 128], sizes = [8, 128], strides = [1, 1]} : vector<8x384xf32> to vector<8x128xf32>
    %52 = vector.extract_strided_slice %42 {offsets = [0, 128], sizes = [8, 128], strides = [1, 1]} : vector<8x384xf32> to vector<8x128xf32>
    %53 = arith.addf %51, %52 : vector<8x128xf32>
    %54 = arith.negf %53 : vector<8x128xf32>
    %55 = math.exp %54 : vector<8x128xf32>
    %cst_13 = arith.constant 1.000000e+00 : f32
    %56 = vector.broadcast %cst_13 : f32 to vector<8x128xf32>
    %57 = arith.addf %56, %55 : vector<8x128xf32>
    %58 = arith.divf %56, %57 : vector<8x128xf32>
    %59 = vector.extract_strided_slice %41 {offsets = [0, 256], sizes = [8, 128], strides = [1, 1]} : vector<8x384xf32> to vector<8x128xf32>
    %60 = vector.extract_strided_slice %42 {offsets = [0, 256], sizes = [8, 128], strides = [1, 1]} : vector<8x384xf32> to vector<8x128xf32>
    %61 = vector.broadcast %1 : vector<1x128xf32> to vector<8x128xf32>
    %62 = arith.addf %60, %61 : vector<8x128xf32>
    %63 = arith.mulf %50, %62 : vector<8x128xf32>
    %64 = arith.addf %59, %63 : vector<8x128xf32>
    %65 = math.tanh %64 : vector<8x128xf32>
    %cst_14 = arith.constant 1.000000e+00 : f32
    %66 = vector.broadcast %cst_14 : f32 to vector<8x128xf32>
    %67 = arith.subf %66, %58 : vector<8x128xf32>
    %68 = arith.mulf %67, %65 : vector<8x128xf32>
    %69 = arith.mulf %58, %35 : vector<8x128xf32>
    %70 = arith.addf %68, %69 : vector<8x128xf32>
    %71 = arith.index_cast %39 : i32 to index
    %c0_15 = arith.constant 0 : index
    %72 = vector.load %arg8[%71, %c0_15] : memref<64x128xf32, #tpu.memory_space<vmem>>, vector<8x128xf32>
    tpu.vector_store %arg8[%71, %c0_15], %70 {strides = array<i32>} : memref<64x128xf32, #tpu.memory_space<vmem>>, vector<8x128xf32>,
    %c2_i32 = arith.constant 2 : i32
    %c8_i32_16 = arith.constant 8 : i32
    %73 = arith.muli %c2_i32, %c8_i32_16 : i32
    %74 = tpu.assume_multiple %73, 8 : i32
    %75 = arith.index_cast %74 : i32 to index
    %c0_17 = arith.constant 0 : index
    %76 = vector.load %arg0[%75, %c0_17] : memref<64x384xf32, #tpu.memory_space<vmem>>, vector<8x384xf32>
    %cst_18 = arith.constant dense<0.000000e+00> : vector<8x384xf32>
    %77 = tpu.matmul %70, %0, %cst_18 {dimension_numbers = #tpu.dot_dimension_numbers<[1], [0], [0], [1], [0, 0, 1, 1], [], []>} : vector<8x128xf32>, vector<128x384xf32>, vector<8x384xf32> -> vector<8x384xf32>
    %78 = vector.extract_strided_slice %76 {offsets = [0, 0], sizes = [8, 128], strides = [1, 1]} : vector<8x384xf32> to vector<8x128xf32>
    %79 = vector.extract_strided_slice %77 {offsets = [0, 0], sizes = [8, 128], strides = [1, 1]} : vector<8x384xf32> to vector<8x128xf32>
    %80 = arith.addf %78, %79 : vector<8x128xf32>
    %81 = arith.negf %80 : vector<8x128xf32>
    %82 = math.exp %81 : vector<8x128xf32>
    %cst_19 = arith.constant 1.000000e+00 : f32
    %83 = vector.broadcast %cst_19 : f32 to vector<8x128xf32>
    %84 = arith.addf %83, %82 : vector<8x128xf32>
    %85 = arith.divf %83, %84 : vector<8x128xf32>
    %86 = vector.extract_strided_slice %76 {offsets = [0, 128], sizes = [8, 128], strides = [1, 1]} : vector<8x384xf32> to vector<8x128xf32>
    %87 = vector.extract_strided_slice %77 {offsets = [0, 128], sizes = [8, 128], strides = [1, 1]} : vector<8x384xf32> to vector<8x128xf32>
    %88 = arith.addf %86, %87 : vector<8x128xf32>
    %89 = arith.negf %88 : vector<8x128xf32>
    %90 = math.exp %89 : vector<8x128xf32>
    %cst_20 = arith.constant 1.000000e+00 : f32
    %91 = vector.broadcast %cst_20 : f32 to vector<8x128xf32>
    %92 = arith.addf %91, %90 : vector<8x128xf32>
    %93 = arith.divf %91, %92 : vector<8x128xf32>
    %94 = vector.extract_strided_slice %76 {offsets = [0, 256], sizes = [8, 128], strides = [1, 1]} : vector<8x384xf32> to vector<8x128xf32>
    %95 = vector.extract_strided_slice %77 {offsets = [0, 256], sizes = [8, 128], strides = [1, 1]} : vector<8x384xf32> to vector<8x128xf32>
    %96 = vector.broadcast %1 : vector<1x128xf32> to vector<8x128xf32>
    %97 = arith.addf %95, %96 : vector<8x128xf32>
    %98 = arith.mulf %85, %97 : vector<8x128xf32>
    %99 = arith.addf %94, %98 : vector<8x128xf32>
    %100 = math.tanh %99 : vector<8x128xf32>
    %cst_21 = arith.constant 1.000000e+00 : f32
    %101 = vector.broadcast %cst_21 : f32 to vector<8x128xf32>
    %102 = arith.subf %101, %93 : vector<8x128xf32>
    %103 = arith.mulf %102, %100 : vector<8x128xf32>
    %104 = arith.mulf %93, %70 : vector<8x128xf32>
    %105 = arith.addf %103, %104 : vector<8x128xf32>
    %106 = arith.index_cast %74 : i32 to index
    %c0_22 = arith.constant 0 : index
    %107 = vector.load %arg8[%106, %c0_22] : memref<64x128xf32, #tpu.memory_space<vmem>>, vector<8x128xf32>
    tpu.vector_store %arg8[%106, %c0_22], %105 {strides = array<i32>} : memref<64x128xf32, #tpu.memory_space<vmem>>, vector<8x128xf32>,
    %c3_i32 = arith.constant 3 : i32
    %c8_i32_23 = arith.constant 8 : i32
    %108 = arith.muli %c3_i32, %c8_i32_23 : i32
    %109 = tpu.assume_multiple %108, 8 : i32
    %110 = arith.index_cast %109 : i32 to index
    %c0_24 = arith.constant 0 : index
    %111 = vector.load %arg0[%110, %c0_24] : memref<64x384xf32, #tpu.memory_space<vmem>>, vector<8x384xf32>
    %cst_25 = arith.constant dense<0.000000e+00> : vector<8x384xf32>
    %112 = tpu.matmul %105, %0, %cst_25 {dimension_numbers = #tpu.dot_dimension_numbers<[1], [0], [0], [1], [0, 0, 1, 1], [], []>} : vector<8x128xf32>, vector<128x384xf32>, vector<8x384xf32> -> vector<8x384xf32>
    %113 = vector.extract_strided_slice %111 {offsets = [0, 0], sizes = [8, 128], strides = [1, 1]} : vector<8x384xf32> to vector<8x128xf32>
    %114 = vector.extract_strided_slice %112 {offsets = [0, 0], sizes = [8, 128], strides = [1, 1]} : vector<8x384xf32> to vector<8x128xf32>
    %115 = arith.addf %113, %114 : vector<8x128xf32>
    %116 = arith.negf %115 : vector<8x128xf32>
    %117 = math.exp %116 : vector<8x128xf32>
    %cst_26 = arith.constant 1.000000e+00 : f32
    %118 = vector.broadcast %cst_26 : f32 to vector<8x128xf32>
    %119 = arith.addf %118, %117 : vector<8x128xf32>
    %120 = arith.divf %118, %119 : vector<8x128xf32>
    %121 = vector.extract_strided_slice %111 {offsets = [0, 128], sizes = [8, 128], strides = [1, 1]} : vector<8x384xf32> to vector<8x128xf32>
    %122 = vector.extract_strided_slice %112 {offsets = [0, 128], sizes = [8, 128], strides = [1, 1]} : vector<8x384xf32> to vector<8x128xf32>
    %123 = arith.addf %121, %122 : vector<8x128xf32>
    %124 = arith.negf %123 : vector<8x128xf32>
    %125 = math.exp %124 : vector<8x128xf32>
    %cst_27 = arith.constant 1.000000e+00 : f32
    %126 = vector.broadcast %cst_27 : f32 to vector<8x128xf32>
    %127 = arith.addf %126, %125 : vector<8x128xf32>
    %128 = arith.divf %126, %127 : vector<8x128xf32>
    %129 = vector.extract_strided_slice %111 {offsets = [0, 256], sizes = [8, 128], strides = [1, 1]} : vector<8x384xf32> to vector<8x128xf32>
    %130 = vector.extract_strided_slice %112 {offsets = [0, 256], sizes = [8, 128], strides = [1, 1]} : vector<8x384xf32> to vector<8x128xf32>
    %131 = vector.broadcast %1 : vector<1x128xf32> to vector<8x128xf32>
    %132 = arith.addf %130, %131 : vector<8x128xf32>
    %133 = arith.mulf %120, %132 : vector<8x128xf32>
    %134 = arith.addf %129, %133 : vector<8x128xf32>
    %135 = math.tanh %134 : vector<8x128xf32>
    %cst_28 = arith.constant 1.000000e+00 : f32
    %136 = vector.broadcast %cst_28 : f32 to vector<8x128xf32>
    %137 = arith.subf %136, %128 : vector<8x128xf32>
    %138 = arith.mulf %137, %135 : vector<8x128xf32>
    %139 = arith.mulf %128, %105 : vector<8x128xf32>
    %140 = arith.addf %138, %139 : vector<8x128xf32>
    %141 = arith.index_cast %109 : i32 to index
    %c0_29 = arith.constant 0 : index
    %142 = vector.load %arg8[%141, %c0_29] : memref<64x128xf32, #tpu.memory_space<vmem>>, vector<8x128xf32>
    tpu.vector_store %arg8[%141, %c0_29], %140 {strides = array<i32>} : memref<64x128xf32, #tpu.memory_space<vmem>>, vector<8x128xf32>,
    %c4_i32 = arith.constant 4 : i32
    %c8_i32_30 = arith.constant 8 : i32
    %143 = arith.muli %c4_i32, %c8_i32_30 : i32
    %144 = tpu.assume_multiple %143, 8 : i32
    %145 = arith.index_cast %144 : i32 to index
    %c0_31 = arith.constant 0 : index
    %146 = vector.load %arg0[%145, %c0_31] : memref<64x384xf32, #tpu.memory_space<vmem>>, vector<8x384xf32>
    %cst_32 = arith.constant dense<0.000000e+00> : vector<8x384xf32>
    %147 = tpu.matmul %140, %0, %cst_32 {dimension_numbers = #tpu.dot_dimension_numbers<[1], [0], [0], [1], [0, 0, 1, 1], [], []>} : vector<8x128xf32>, vector<128x384xf32>, vector<8x384xf32> -> vector<8x384xf32>
    %148 = vector.extract_strided_slice %146 {offsets = [0, 0], sizes = [8, 128], strides = [1, 1]} : vector<8x384xf32> to vector<8x128xf32>
    %149 = vector.extract_strided_slice %147 {offsets = [0, 0], sizes = [8, 128], strides = [1, 1]} : vector<8x384xf32> to vector<8x128xf32>
    %150 = arith.addf %148, %149 : vector<8x128xf32>
    %151 = arith.negf %150 : vector<8x128xf32>
    %152 = math.exp %151 : vector<8x128xf32>
    %cst_33 = arith.constant 1.000000e+00 : f32
    %153 = vector.broadcast %cst_33 : f32 to vector<8x128xf32>
    %154 = arith.addf %153, %152 : vector<8x128xf32>
    %155 = arith.divf %153, %154 : vector<8x128xf32>
    %156 = vector.extract_strided_slice %146 {offsets = [0, 128], sizes = [8, 128], strides = [1, 1]} : vector<8x384xf32> to vector<8x128xf32>
    %157 = vector.extract_strided_slice %147 {offsets = [0, 128], sizes = [8, 128], strides = [1, 1]} : vector<8x384xf32> to vector<8x128xf32>
    %158 = arith.addf %156, %157 : vector<8x128xf32>
    %159 = arith.negf %158 : vector<8x128xf32>
    %160 = math.exp %159 : vector<8x128xf32>
    %cst_34 = arith.constant 1.000000e+00 : f32
    %161 = vector.broadcast %cst_34 : f32 to vector<8x128xf32>
    %162 = arith.addf %161, %160 : vector<8x128xf32>
    %163 = arith.divf %161, %162 : vector<8x128xf32>
    %164 = vector.extract_strided_slice %146 {offsets = [0, 256], sizes = [8, 128], strides = [1, 1]} : vector<8x384xf32> to vector<8x128xf32>
    %165 = vector.extract_strided_slice %147 {offsets = [0, 256], sizes = [8, 128], strides = [1, 1]} : vector<8x384xf32> to vector<8x128xf32>
    %166 = vector.broadcast %1 : vector<1x128xf32> to vector<8x128xf32>
    %167 = arith.addf %165, %166 : vector<8x128xf32>
    %168 = arith.mulf %155, %167 : vector<8x128xf32>
    %169 = arith.addf %164, %168 : vector<8x128xf32>
    %170 = math.tanh %169 : vector<8x128xf32>
    %cst_35 = arith.constant 1.000000e+00 : f32
    %171 = vector.broadcast %cst_35 : f32 to vector<8x128xf32>
    %172 = arith.subf %171, %163 : vector<8x128xf32>
    %173 = arith.mulf %172, %170 : vector<8x128xf32>
    %174 = arith.mulf %163, %140 : vector<8x128xf32>
    %175 = arith.addf %173, %174 : vector<8x128xf32>
    %176 = arith.index_cast %144 : i32 to index
    %c0_36 = arith.constant 0 : index
    %177 = vector.load %arg8[%176, %c0_36] : memref<64x128xf32, #tpu.memory_space<vmem>>, vector<8x128xf32>
    tpu.vector_store %arg8[%176, %c0_36], %175 {strides = array<i32>} : memref<64x128xf32, #tpu.memory_space<vmem>>, vector<8x128xf32>,
    %c5_i32 = arith.constant 5 : i32
    %c8_i32_37 = arith.constant 8 : i32
    %178 = arith.muli %c5_i32, %c8_i32_37 : i32
    %179 = tpu.assume_multiple %178, 8 : i32
    %180 = arith.index_cast %179 : i32 to index
    %c0_38 = arith.constant 0 : index
    %181 = vector.load %arg0[%180, %c0_38] : memref<64x384xf32, #tpu.memory_space<vmem>>, vector<8x384xf32>
    %cst_39 = arith.constant dense<0.000000e+00> : vector<8x384xf32>
    %182 = tpu.matmul %175, %0, %cst_39 {dimension_numbers = #tpu.dot_dimension_numbers<[1], [0], [0], [1], [0, 0, 1, 1], [], []>} : vector<8x128xf32>, vector<128x384xf32>, vector<8x384xf32> -> vector<8x384xf32>
    %183 = vector.extract_strided_slice %181 {offsets = [0, 0], sizes = [8, 128], strides = [1, 1]} : vector<8x384xf32> to vector<8x128xf32>
    %184 = vector.extract_strided_slice %182 {offsets = [0, 0], sizes = [8, 128], strides = [1, 1]} : vector<8x384xf32> to vector<8x128xf32>
    %185 = arith.addf %183, %184 : vector<8x128xf32>
    %186 = arith.negf %185 : vector<8x128xf32>
    %187 = math.exp %186 : vector<8x128xf32>
    %cst_40 = arith.constant 1.000000e+00 : f32
    %188 = vector.broadcast %cst_40 : f32 to vector<8x128xf32>
    %189 = arith.addf %188, %187 : vector<8x128xf32>
    %190 = arith.divf %188, %189 : vector<8x128xf32>
    %191 = vector.extract_strided_slice %181 {offsets = [0, 128], sizes = [8, 128], strides = [1, 1]} : vector<8x384xf32> to vector<8x128xf32>
    %192 = vector.extract_strided_slice %182 {offsets = [0, 128], sizes = [8, 128], strides = [1, 1]} : vector<8x384xf32> to vector<8x128xf32>
    %193 = arith.addf %191, %192 : vector<8x128xf32>
    %194 = arith.negf %193 : vector<8x128xf32>
    %195 = math.exp %194 : vector<8x128xf32>
    %cst_41 = arith.constant 1.000000e+00 : f32
    %196 = vector.broadcast %cst_41 : f32 to vector<8x128xf32>
    %197 = arith.addf %196, %195 : vector<8x128xf32>
    %198 = arith.divf %196, %197 : vector<8x128xf32>
    %199 = vector.extract_strided_slice %181 {offsets = [0, 256], sizes = [8, 128], strides = [1, 1]} : vector<8x384xf32> to vector<8x128xf32>
    %200 = vector.extract_strided_slice %182 {offsets = [0, 256], sizes = [8, 128], strides = [1, 1]} : vector<8x384xf32> to vector<8x128xf32>
    %201 = vector.broadcast %1 : vector<1x128xf32> to vector<8x128xf32>
    %202 = arith.addf %200, %201 : vector<8x128xf32>
    %203 = arith.mulf %190, %202 : vector<8x128xf32>
    %204 = arith.addf %199, %203 : vector<8x128xf32>
    %205 = math.tanh %204 : vector<8x128xf32>
    %cst_42 = arith.constant 1.000000e+00 : f32
    %206 = vector.broadcast %cst_42 : f32 to vector<8x128xf32>
    %207 = arith.subf %206, %198 : vector<8x128xf32>
    %208 = arith.mulf %207, %205 : vector<8x128xf32>
    %209 = arith.mulf %198, %175 : vector<8x128xf32>
    %210 = arith.addf %208, %209 : vector<8x128xf32>
    %211 = arith.index_cast %179 : i32 to index
    %c0_43 = arith.constant 0 : index
    %212 = vector.load %arg8[%211, %c0_43] : memref<64x128xf32, #tpu.memory_space<vmem>>, vector<8x128xf32>
    tpu.vector_store %arg8[%211, %c0_43], %210 {strides = array<i32>} : memref<64x128xf32, #tpu.memory_space<vmem>>, vector<8x128xf32>,
    %c6_i32 = arith.constant 6 : i32
    %c8_i32_44 = arith.constant 8 : i32
    %213 = arith.muli %c6_i32, %c8_i32_44 : i32
    %214 = tpu.assume_multiple %213, 8 : i32
    %215 = arith.index_cast %214 : i32 to index
    %c0_45 = arith.constant 0 : index
    %216 = vector.load %arg0[%215, %c0_45] : memref<64x384xf32, #tpu.memory_space<vmem>>, vector<8x384xf32>
    %cst_46 = arith.constant dense<0.000000e+00> : vector<8x384xf32>
    %217 = tpu.matmul %210, %0, %cst_46 {dimension_numbers = #tpu.dot_dimension_numbers<[1], [0], [0], [1], [0, 0, 1, 1], [], []>} : vector<8x128xf32>, vector<128x384xf32>, vector<8x384xf32> -> vector<8x384xf32>
    %218 = vector.extract_strided_slice %216 {offsets = [0, 0], sizes = [8, 128], strides = [1, 1]} : vector<8x384xf32> to vector<8x128xf32>
    %219 = vector.extract_strided_slice %217 {offsets = [0, 0], sizes = [8, 128], strides = [1, 1]} : vector<8x384xf32> to vector<8x128xf32>
    %220 = arith.addf %218, %219 : vector<8x128xf32>
    %221 = arith.negf %220 : vector<8x128xf32>
    %222 = math.exp %221 : vector<8x128xf32>
    %cst_47 = arith.constant 1.000000e+00 : f32
    %223 = vector.broadcast %cst_47 : f32 to vector<8x128xf32>
    %224 = arith.addf %223, %222 : vector<8x128xf32>
    %225 = arith.divf %223, %224 : vector<8x128xf32>
    %226 = vector.extract_strided_slice %216 {offsets = [0, 128], sizes = [8, 128], strides = [1, 1]} : vector<8x384xf32> to vector<8x128xf32>
    %227 = vector.extract_strided_slice %217 {offsets = [0, 128], sizes = [8, 128], strides = [1, 1]} : vector<8x384xf32> to vector<8x128xf32>
    %228 = arith.addf %226, %227 : vector<8x128xf32>
    %229 = arith.negf %228 : vector<8x128xf32>
    %230 = math.exp %229 : vector<8x128xf32>
    %cst_48 = arith.constant 1.000000e+00 : f32
    %231 = vector.broadcast %cst_48 : f32 to vector<8x128xf32>
    %232 = arith.addf %231, %230 : vector<8x128xf32>
    %233 = arith.divf %231, %232 : vector<8x128xf32>
    %234 = vector.extract_strided_slice %216 {offsets = [0, 256], sizes = [8, 128], strides = [1, 1]} : vector<8x384xf32> to vector<8x128xf32>
    %235 = vector.extract_strided_slice %217 {offsets = [0, 256], sizes = [8, 128], strides = [1, 1]} : vector<8x384xf32> to vector<8x128xf32>
    %236 = vector.broadcast %1 : vector<1x128xf32> to vector<8x128xf32>
    %237 = arith.addf %235, %236 : vector<8x128xf32>
    %238 = arith.mulf %225, %237 : vector<8x128xf32>
    %239 = arith.addf %234, %238 : vector<8x128xf32>
    %240 = math.tanh %239 : vector<8x128xf32>
    %cst_49 = arith.constant 1.000000e+00 : f32
    %241 = vector.broadcast %cst_49 : f32 to vector<8x128xf32>
    %242 = arith.subf %241, %233 : vector<8x128xf32>
    %243 = arith.mulf %242, %240 : vector<8x128xf32>
    %244 = arith.mulf %233, %210 : vector<8x128xf32>
    %245 = arith.addf %243, %244 : vector<8x128xf32>
    %246 = arith.index_cast %214 : i32 to index
    %c0_50 = arith.constant 0 : index
    %247 = vector.load %arg8[%246, %c0_50] : memref<64x128xf32, #tpu.memory_space<vmem>>, vector<8x128xf32>
    tpu.vector_store %arg8[%246, %c0_50], %245 {strides = array<i32>} : memref<64x128xf32, #tpu.memory_space<vmem>>, vector<8x128xf32>,
    %c7_i32 = arith.constant 7 : i32
    %c8_i32_51 = arith.constant 8 : i32
    %248 = arith.muli %c7_i32, %c8_i32_51 : i32
    %249 = tpu.assume_multiple %248, 8 : i32
    %250 = arith.index_cast %249 : i32 to index
    %c0_52 = arith.constant 0 : index
    %251 = vector.load %arg0[%250, %c0_52] : memref<64x384xf32, #tpu.memory_space<vmem>>, vector<8x384xf32>
    %cst_53 = arith.constant dense<0.000000e+00> : vector<8x384xf32>
    %252 = tpu.matmul %245, %0, %cst_53 {dimension_numbers = #tpu.dot_dimension_numbers<[1], [0], [0], [1], [0, 0, 1, 1], [], []>} : vector<8x128xf32>, vector<128x384xf32>, vector<8x384xf32> -> vector<8x384xf32>
    %253 = vector.extract_strided_slice %251 {offsets = [0, 0], sizes = [8, 128], strides = [1, 1]} : vector<8x384xf32> to vector<8x128xf32>
    %254 = vector.extract_strided_slice %252 {offsets = [0, 0], sizes = [8, 128], strides = [1, 1]} : vector<8x384xf32> to vector<8x128xf32>
    %255 = arith.addf %253, %254 : vector<8x128xf32>
    %256 = arith.negf %255 : vector<8x128xf32>
    %257 = math.exp %256 : vector<8x128xf32>
    %cst_54 = arith.constant 1.000000e+00 : f32
    %258 = vector.broadcast %cst_54 : f32 to vector<8x128xf32>
    %259 = arith.addf %258, %257 : vector<8x128xf32>
    %260 = arith.divf %258, %259 : vector<8x128xf32>
    %261 = vector.extract_strided_slice %251 {offsets = [0, 128], sizes = [8, 128], strides = [1, 1]} : vector<8x384xf32> to vector<8x128xf32>
    %262 = vector.extract_strided_slice %252 {offsets = [0, 128], sizes = [8, 128], strides = [1, 1]} : vector<8x384xf32> to vector<8x128xf32>
    %263 = arith.addf %261, %262 : vector<8x128xf32>
    %264 = arith.negf %263 : vector<8x128xf32>
    %265 = math.exp %264 : vector<8x128xf32>
    %cst_55 = arith.constant 1.000000e+00 : f32
    %266 = vector.broadcast %cst_55 : f32 to vector<8x128xf32>
    %267 = arith.addf %266, %265 : vector<8x128xf32>
    %268 = arith.divf %266, %267 : vector<8x128xf32>
    %269 = vector.extract_strided_slice %251 {offsets = [0, 256], sizes = [8, 128], strides = [1, 1]} : vector<8x384xf32> to vector<8x128xf32>
    %270 = vector.extract_strided_slice %252 {offsets = [0, 256], sizes = [8, 128], strides = [1, 1]} : vector<8x384xf32> to vector<8x128xf32>
    %271 = vector.broadcast %1 : vector<1x128xf32> to vector<8x128xf32>
    %272 = arith.addf %270, %271 : vector<8x128xf32>
    %273 = arith.mulf %260, %272 : vector<8x128xf32>
    %274 = arith.addf %269, %273 : vector<8x128xf32>
    %275 = math.tanh %274 : vector<8x128xf32>
    %cst_56 = arith.constant 1.000000e+00 : f32
    %276 = vector.broadcast %cst_56 : f32 to vector<8x128xf32>
    %277 = arith.subf %276, %268 : vector<8x128xf32>
    %278 = arith.mulf %277, %275 : vector<8x128xf32>
    %279 = arith.mulf %268, %245 : vector<8x128xf32>
    %280 = arith.addf %278, %279 : vector<8x128xf32>
    %281 = arith.index_cast %249 : i32 to index
    %c0_57 = arith.constant 0 : index
    %282 = vector.load %arg8[%281, %c0_57] : memref<64x128xf32, #tpu.memory_space<vmem>>, vector<8x128xf32>
    tpu.vector_store %arg8[%281, %c0_57], %280 {strides = array<i32>} : memref<64x128xf32, #tpu.memory_space<vmem>>, vector<8x128xf32>,
    %c8_i32_58 = arith.constant 8 : i32
    %c0_59 = arith.constant 0 : index
    %c0_60 = arith.constant 0 : index
    %283 = vector.load %arg8[%c0_59, %c0_60] : memref<64x128xf32, #tpu.memory_space<vmem>>, vector<64x128xf32>
    %c0_61 = arith.constant 0 : index
    %c0_62 = arith.constant 0 : index
    %284 = vector.load %arg3[%c0_61, %c0_62] : memref<128x384xf32, #tpu.memory_space<vmem>>, vector<128x384xf32>
    %cst_63 = arith.constant dense<0.000000e+00> : vector<64x384xf32>
    %285 = tpu.matmul %283, %284, %cst_63 {dimension_numbers = #tpu.dot_dimension_numbers<[1], [0], [0], [1], [0, 0, 1, 1], [], []>} : vector<64x128xf32>, vector<128x384xf32>, vector<64x384xf32> -> vector<64x384xf32>
    %c0_64 = arith.constant 0 : index
    %c0_65 = arith.constant 0 : index
    %286 = vector.load %arg4[%c0_64, %c0_65] : memref<1x384xf32, #tpu.memory_space<vmem>>, vector<1x384xf32>
    %287 = vector.broadcast %286 : vector<1x384xf32> to vector<64x384xf32>
    %288 = arith.addf %285, %287 : vector<64x384xf32>
    %c0_66 = arith.constant 0 : index
    %c0_67 = arith.constant 0 : index
    %289 = vector.load %arg9[%c0_66, %c0_67] : memref<64x384xf32, #tpu.memory_space<vmem>>, vector<64x384xf32>
    tpu.vector_store %arg9[%c0_66, %c0_67], %288 {strides = array<i32>} : memref<64x384xf32, #tpu.memory_space<vmem>>, vector<64x384xf32>,
    %c0_68 = arith.constant 0 : index
    %c0_69 = arith.constant 0 : index
    %290 = vector.load %arg5[%c0_68, %c0_69] : memref<128x384xf32, #tpu.memory_space<vmem>>, vector<128x384xf32>
    %c0_70 = arith.constant 0 : index
    %c0_71 = arith.constant 0 : index
    %291 = vector.load %arg6[%c0_70, %c0_71] : memref<1x128xf32, #tpu.memory_space<vmem>>, vector<1x128xf32>
    %cst_72 = arith.constant 0.000000e+00 : f32
    %292 = vector.broadcast %cst_72 : f32 to vector<8x128xf32>
    %c0_i32_73 = arith.constant 0 : i32
    %c8_i32_74 = arith.constant 8 : i32
    %293 = arith.muli %c0_i32_73, %c8_i32_74 : i32
    %294 = tpu.assume_multiple %293, 8 : i32
    %295 = arith.index_cast %294 : i32 to index
    %c0_75 = arith.constant 0 : index
    %296 = vector.load %arg9[%295, %c0_75] : memref<64x384xf32, #tpu.memory_space<vmem>>, vector<8x384xf32>
    %cst_76 = arith.constant dense<0.000000e+00> : vector<8x384xf32>
    %297 = tpu.matmul %292, %290, %cst_76 {dimension_numbers = #tpu.dot_dimension_numbers<[1], [0], [0], [1], [0, 0, 1, 1], [], []>} : vector<8x128xf32>, vector<128x384xf32>, vector<8x384xf32> -> vector<8x384xf32>
    %298 = vector.extract_strided_slice %296 {offsets = [0, 0], sizes = [8, 128], strides = [1, 1]} : vector<8x384xf32> to vector<8x128xf32>
    %299 = vector.extract_strided_slice %297 {offsets = [0, 0], sizes = [8, 128], strides = [1, 1]} : vector<8x384xf32> to vector<8x128xf32>
    %300 = arith.addf %298, %299 : vector<8x128xf32>
    %301 = arith.negf %300 : vector<8x128xf32>
    %302 = math.exp %301 : vector<8x128xf32>
    %cst_77 = arith.constant 1.000000e+00 : f32
    %303 = vector.broadcast %cst_77 : f32 to vector<8x128xf32>
    %304 = arith.addf %303, %302 : vector<8x128xf32>
    %305 = arith.divf %303, %304 : vector<8x128xf32>
    %306 = vector.extract_strided_slice %296 {offsets = [0, 128], sizes = [8, 128], strides = [1, 1]} : vector<8x384xf32> to vector<8x128xf32>
    %307 = vector.extract_strided_slice %297 {offsets = [0, 128], sizes = [8, 128], strides = [1, 1]} : vector<8x384xf32> to vector<8x128xf32>
    %308 = arith.addf %306, %307 : vector<8x128xf32>
    %309 = arith.negf %308 : vector<8x128xf32>
    %310 = math.exp %309 : vector<8x128xf32>
    %cst_78 = arith.constant 1.000000e+00 : f32
    %311 = vector.broadcast %cst_78 : f32 to vector<8x128xf32>
    %312 = arith.addf %311, %310 : vector<8x128xf32>
    %313 = arith.divf %311, %312 : vector<8x128xf32>
    %314 = vector.extract_strided_slice %296 {offsets = [0, 256], sizes = [8, 128], strides = [1, 1]} : vector<8x384xf32> to vector<8x128xf32>
    %315 = vector.extract_strided_slice %297 {offsets = [0, 256], sizes = [8, 128], strides = [1, 1]} : vector<8x384xf32> to vector<8x128xf32>
    %316 = vector.broadcast %291 : vector<1x128xf32> to vector<8x128xf32>
    %317 = arith.addf %315, %316 : vector<8x128xf32>
    %318 = arith.mulf %305, %317 : vector<8x128xf32>
    %319 = arith.addf %314, %318 : vector<8x128xf32>
    %320 = math.tanh %319 : vector<8x128xf32>
    %cst_79 = arith.constant 1.000000e+00 : f32
    %321 = vector.broadcast %cst_79 : f32 to vector<8x128xf32>
    %322 = arith.subf %321, %313 : vector<8x128xf32>
    %323 = arith.mulf %322, %320 : vector<8x128xf32>
    %324 = arith.mulf %313, %292 : vector<8x128xf32>
    %325 = arith.addf %323, %324 : vector<8x128xf32>
    %c1_i32_80 = arith.constant 1 : i32
    %c8_i32_81 = arith.constant 8 : i32
    %326 = arith.muli %c1_i32_80, %c8_i32_81 : i32
    %327 = tpu.assume_multiple %326, 8 : i32
    %328 = arith.index_cast %327 : i32 to index
    %c0_82 = arith.constant 0 : index
    %329 = vector.load %arg9[%328, %c0_82] : memref<64x384xf32, #tpu.memory_space<vmem>>, vector<8x384xf32>
    %cst_83 = arith.constant dense<0.000000e+00> : vector<8x384xf32>
    %330 = tpu.matmul %325, %290, %cst_83 {dimension_numbers = #tpu.dot_dimension_numbers<[1], [0], [0], [1], [0, 0, 1, 1], [], []>} : vector<8x128xf32>, vector<128x384xf32>, vector<8x384xf32> -> vector<8x384xf32>
    %331 = vector.extract_strided_slice %329 {offsets = [0, 0], sizes = [8, 128], strides = [1, 1]} : vector<8x384xf32> to vector<8x128xf32>
    %332 = vector.extract_strided_slice %330 {offsets = [0, 0], sizes = [8, 128], strides = [1, 1]} : vector<8x384xf32> to vector<8x128xf32>
    %333 = arith.addf %331, %332 : vector<8x128xf32>
    %334 = arith.negf %333 : vector<8x128xf32>
    %335 = math.exp %334 : vector<8x128xf32>
    %cst_84 = arith.constant 1.000000e+00 : f32
    %336 = vector.broadcast %cst_84 : f32 to vector<8x128xf32>
    %337 = arith.addf %336, %335 : vector<8x128xf32>
    %338 = arith.divf %336, %337 : vector<8x128xf32>
    %339 = vector.extract_strided_slice %329 {offsets = [0, 128], sizes = [8, 128], strides = [1, 1]} : vector<8x384xf32> to vector<8x128xf32>
    %340 = vector.extract_strided_slice %330 {offsets = [0, 128], sizes = [8, 128], strides = [1, 1]} : vector<8x384xf32> to vector<8x128xf32>
    %341 = arith.addf %339, %340 : vector<8x128xf32>
    %342 = arith.negf %341 : vector<8x128xf32>
    %343 = math.exp %342 : vector<8x128xf32>
    %cst_85 = arith.constant 1.000000e+00 : f32
    %344 = vector.broadcast %cst_85 : f32 to vector<8x128xf32>
    %345 = arith.addf %344, %343 : vector<8x128xf32>
    %346 = arith.divf %344, %345 : vector<8x128xf32>
    %347 = vector.extract_strided_slice %329 {offsets = [0, 256], sizes = [8, 128], strides = [1, 1]} : vector<8x384xf32> to vector<8x128xf32>
    %348 = vector.extract_strided_slice %330 {offsets = [0, 256], sizes = [8, 128], strides = [1, 1]} : vector<8x384xf32> to vector<8x128xf32>
    %349 = vector.broadcast %291 : vector<1x128xf32> to vector<8x128xf32>
    %350 = arith.addf %348, %349 : vector<8x128xf32>
    %351 = arith.mulf %338, %350 : vector<8x128xf32>
    %352 = arith.addf %347, %351 : vector<8x128xf32>
    %353 = math.tanh %352 : vector<8x128xf32>
    %cst_86 = arith.constant 1.000000e+00 : f32
    %354 = vector.broadcast %cst_86 : f32 to vector<8x128xf32>
    %355 = arith.subf %354, %346 : vector<8x128xf32>
    %356 = arith.mulf %355, %353 : vector<8x128xf32>
    %357 = arith.mulf %346, %325 : vector<8x128xf32>
    %358 = arith.addf %356, %357 : vector<8x128xf32>
    %c2_i32_87 = arith.constant 2 : i32
    %c8_i32_88 = arith.constant 8 : i32
    %359 = arith.muli %c2_i32_87, %c8_i32_88 : i32
    %360 = tpu.assume_multiple %359, 8 : i32
    %361 = arith.index_cast %360 : i32 to index
    %c0_89 = arith.constant 0 : index
    %362 = vector.load %arg9[%361, %c0_89] : memref<64x384xf32, #tpu.memory_space<vmem>>, vector<8x384xf32>
    %cst_90 = arith.constant dense<0.000000e+00> : vector<8x384xf32>
    %363 = tpu.matmul %358, %290, %cst_90 {dimension_numbers = #tpu.dot_dimension_numbers<[1], [0], [0], [1], [0, 0, 1, 1], [], []>} : vector<8x128xf32>, vector<128x384xf32>, vector<8x384xf32> -> vector<8x384xf32>
    %364 = vector.extract_strided_slice %362 {offsets = [0, 0], sizes = [8, 128], strides = [1, 1]} : vector<8x384xf32> to vector<8x128xf32>
    %365 = vector.extract_strided_slice %363 {offsets = [0, 0], sizes = [8, 128], strides = [1, 1]} : vector<8x384xf32> to vector<8x128xf32>
    %366 = arith.addf %364, %365 : vector<8x128xf32>
    %367 = arith.negf %366 : vector<8x128xf32>
    %368 = math.exp %367 : vector<8x128xf32>
    %cst_91 = arith.constant 1.000000e+00 : f32
    %369 = vector.broadcast %cst_91 : f32 to vector<8x128xf32>
    %370 = arith.addf %369, %368 : vector<8x128xf32>
    %371 = arith.divf %369, %370 : vector<8x128xf32>
    %372 = vector.extract_strided_slice %362 {offsets = [0, 128], sizes = [8, 128], strides = [1, 1]} : vector<8x384xf32> to vector<8x128xf32>
    %373 = vector.extract_strided_slice %363 {offsets = [0, 128], sizes = [8, 128], strides = [1, 1]} : vector<8x384xf32> to vector<8x128xf32>
    %374 = arith.addf %372, %373 : vector<8x128xf32>
    %375 = arith.negf %374 : vector<8x128xf32>
    %376 = math.exp %375 : vector<8x128xf32>
    %cst_92 = arith.constant 1.000000e+00 : f32
    %377 = vector.broadcast %cst_92 : f32 to vector<8x128xf32>
    %378 = arith.addf %377, %376 : vector<8x128xf32>
    %379 = arith.divf %377, %378 : vector<8x128xf32>
    %380 = vector.extract_strided_slice %362 {offsets = [0, 256], sizes = [8, 128], strides = [1, 1]} : vector<8x384xf32> to vector<8x128xf32>
    %381 = vector.extract_strided_slice %363 {offsets = [0, 256], sizes = [8, 128], strides = [1, 1]} : vector<8x384xf32> to vector<8x128xf32>
    %382 = vector.broadcast %291 : vector<1x128xf32> to vector<8x128xf32>
    %383 = arith.addf %381, %382 : vector<8x128xf32>
    %384 = arith.mulf %371, %383 : vector<8x128xf32>
    %385 = arith.addf %380, %384 : vector<8x128xf32>
    %386 = math.tanh %385 : vector<8x128xf32>
    %cst_93 = arith.constant 1.000000e+00 : f32
    %387 = vector.broadcast %cst_93 : f32 to vector<8x128xf32>
    %388 = arith.subf %387, %379 : vector<8x128xf32>
    %389 = arith.mulf %388, %386 : vector<8x128xf32>
    %390 = arith.mulf %379, %358 : vector<8x128xf32>
    %391 = arith.addf %389, %390 : vector<8x128xf32>
    %c3_i32_94 = arith.constant 3 : i32
    %c8_i32_95 = arith.constant 8 : i32
    %392 = arith.muli %c3_i32_94, %c8_i32_95 : i32
    %393 = tpu.assume_multiple %392, 8 : i32
    %394 = arith.index_cast %393 : i32 to index
    %c0_96 = arith.constant 0 : index
    %395 = vector.load %arg9[%394, %c0_96] : memref<64x384xf32, #tpu.memory_space<vmem>>, vector<8x384xf32>
    %cst_97 = arith.constant dense<0.000000e+00> : vector<8x384xf32>
    %396 = tpu.matmul %391, %290, %cst_97 {dimension_numbers = #tpu.dot_dimension_numbers<[1], [0], [0], [1], [0, 0, 1, 1], [], []>} : vector<8x128xf32>, vector<128x384xf32>, vector<8x384xf32> -> vector<8x384xf32>
    %397 = vector.extract_strided_slice %395 {offsets = [0, 0], sizes = [8, 128], strides = [1, 1]} : vector<8x384xf32> to vector<8x128xf32>
    %398 = vector.extract_strided_slice %396 {offsets = [0, 0], sizes = [8, 128], strides = [1, 1]} : vector<8x384xf32> to vector<8x128xf32>
    %399 = arith.addf %397, %398 : vector<8x128xf32>
    %400 = arith.negf %399 : vector<8x128xf32>
    %401 = math.exp %400 : vector<8x128xf32>
    %cst_98 = arith.constant 1.000000e+00 : f32
    %402 = vector.broadcast %cst_98 : f32 to vector<8x128xf32>
    %403 = arith.addf %402, %401 : vector<8x128xf32>
    %404 = arith.divf %402, %403 : vector<8x128xf32>
    %405 = vector.extract_strided_slice %395 {offsets = [0, 128], sizes = [8, 128], strides = [1, 1]} : vector<8x384xf32> to vector<8x128xf32>
    %406 = vector.extract_strided_slice %396 {offsets = [0, 128], sizes = [8, 128], strides = [1, 1]} : vector<8x384xf32> to vector<8x128xf32>
    %407 = arith.addf %405, %406 : vector<8x128xf32>
    %408 = arith.negf %407 : vector<8x128xf32>
    %409 = math.exp %408 : vector<8x128xf32>
    %cst_99 = arith.constant 1.000000e+00 : f32
    %410 = vector.broadcast %cst_99 : f32 to vector<8x128xf32>
    %411 = arith.addf %410, %409 : vector<8x128xf32>
    %412 = arith.divf %410, %411 : vector<8x128xf32>
    %413 = vector.extract_strided_slice %395 {offsets = [0, 256], sizes = [8, 128], strides = [1, 1]} : vector<8x384xf32> to vector<8x128xf32>
    %414 = vector.extract_strided_slice %396 {offsets = [0, 256], sizes = [8, 128], strides = [1, 1]} : vector<8x384xf32> to vector<8x128xf32>
    %415 = vector.broadcast %291 : vector<1x128xf32> to vector<8x128xf32>
    %416 = arith.addf %414, %415 : vector<8x128xf32>
    %417 = arith.mulf %404, %416 : vector<8x128xf32>
    %418 = arith.addf %413, %417 : vector<8x128xf32>
    %419 = math.tanh %418 : vector<8x128xf32>
    %cst_100 = arith.constant 1.000000e+00 : f32
    %420 = vector.broadcast %cst_100 : f32 to vector<8x128xf32>
    %421 = arith.subf %420, %412 : vector<8x128xf32>
    %422 = arith.mulf %421, %419 : vector<8x128xf32>
    %423 = arith.mulf %412, %391 : vector<8x128xf32>
    %424 = arith.addf %422, %423 : vector<8x128xf32>
    %c4_i32_101 = arith.constant 4 : i32
    %c8_i32_102 = arith.constant 8 : i32
    %425 = arith.muli %c4_i32_101, %c8_i32_102 : i32
    %426 = tpu.assume_multiple %425, 8 : i32
    %427 = arith.index_cast %426 : i32 to index
    %c0_103 = arith.constant 0 : index
    %428 = vector.load %arg9[%427, %c0_103] : memref<64x384xf32, #tpu.memory_space<vmem>>, vector<8x384xf32>
    %cst_104 = arith.constant dense<0.000000e+00> : vector<8x384xf32>
    %429 = tpu.matmul %424, %290, %cst_104 {dimension_numbers = #tpu.dot_dimension_numbers<[1], [0], [0], [1], [0, 0, 1, 1], [], []>} : vector<8x128xf32>, vector<128x384xf32>, vector<8x384xf32> -> vector<8x384xf32>
    %430 = vector.extract_strided_slice %428 {offsets = [0, 0], sizes = [8, 128], strides = [1, 1]} : vector<8x384xf32> to vector<8x128xf32>
    %431 = vector.extract_strided_slice %429 {offsets = [0, 0], sizes = [8, 128], strides = [1, 1]} : vector<8x384xf32> to vector<8x128xf32>
    %432 = arith.addf %430, %431 : vector<8x128xf32>
    %433 = arith.negf %432 : vector<8x128xf32>
    %434 = math.exp %433 : vector<8x128xf32>
    %cst_105 = arith.constant 1.000000e+00 : f32
    %435 = vector.broadcast %cst_105 : f32 to vector<8x128xf32>
    %436 = arith.addf %435, %434 : vector<8x128xf32>
    %437 = arith.divf %435, %436 : vector<8x128xf32>
    %438 = vector.extract_strided_slice %428 {offsets = [0, 128], sizes = [8, 128], strides = [1, 1]} : vector<8x384xf32> to vector<8x128xf32>
    %439 = vector.extract_strided_slice %429 {offsets = [0, 128], sizes = [8, 128], strides = [1, 1]} : vector<8x384xf32> to vector<8x128xf32>
    %440 = arith.addf %438, %439 : vector<8x128xf32>
    %441 = arith.negf %440 : vector<8x128xf32>
    %442 = math.exp %441 : vector<8x128xf32>
    %cst_106 = arith.constant 1.000000e+00 : f32
    %443 = vector.broadcast %cst_106 : f32 to vector<8x128xf32>
    %444 = arith.addf %443, %442 : vector<8x128xf32>
    %445 = arith.divf %443, %444 : vector<8x128xf32>
    %446 = vector.extract_strided_slice %428 {offsets = [0, 256], sizes = [8, 128], strides = [1, 1]} : vector<8x384xf32> to vector<8x128xf32>
    %447 = vector.extract_strided_slice %429 {offsets = [0, 256], sizes = [8, 128], strides = [1, 1]} : vector<8x384xf32> to vector<8x128xf32>
    %448 = vector.broadcast %291 : vector<1x128xf32> to vector<8x128xf32>
    %449 = arith.addf %447, %448 : vector<8x128xf32>
    %450 = arith.mulf %437, %449 : vector<8x128xf32>
    %451 = arith.addf %446, %450 : vector<8x128xf32>
    %452 = math.tanh %451 : vector<8x128xf32>
    %cst_107 = arith.constant 1.000000e+00 : f32
    %453 = vector.broadcast %cst_107 : f32 to vector<8x128xf32>
    %454 = arith.subf %453, %445 : vector<8x128xf32>
    %455 = arith.mulf %454, %452 : vector<8x128xf32>
    %456 = arith.mulf %445, %424 : vector<8x128xf32>
    %457 = arith.addf %455, %456 : vector<8x128xf32>
    %c5_i32_108 = arith.constant 5 : i32
    %c8_i32_109 = arith.constant 8 : i32
    %458 = arith.muli %c5_i32_108, %c8_i32_109 : i32
    %459 = tpu.assume_multiple %458, 8 : i32
    %460 = arith.index_cast %459 : i32 to index
    %c0_110 = arith.constant 0 : index
    %461 = vector.load %arg9[%460, %c0_110] : memref<64x384xf32, #tpu.memory_space<vmem>>, vector<8x384xf32>
    %cst_111 = arith.constant dense<0.000000e+00> : vector<8x384xf32>
    %462 = tpu.matmul %457, %290, %cst_111 {dimension_numbers = #tpu.dot_dimension_numbers<[1], [0], [0], [1], [0, 0, 1, 1], [], []>} : vector<8x128xf32>, vector<128x384xf32>, vector<8x384xf32> -> vector<8x384xf32>
    %463 = vector.extract_strided_slice %461 {offsets = [0, 0], sizes = [8, 128], strides = [1, 1]} : vector<8x384xf32> to vector<8x128xf32>
    %464 = vector.extract_strided_slice %462 {offsets = [0, 0], sizes = [8, 128], strides = [1, 1]} : vector<8x384xf32> to vector<8x128xf32>
    %465 = arith.addf %463, %464 : vector<8x128xf32>
    %466 = arith.negf %465 : vector<8x128xf32>
    %467 = math.exp %466 : vector<8x128xf32>
    %cst_112 = arith.constant 1.000000e+00 : f32
    %468 = vector.broadcast %cst_112 : f32 to vector<8x128xf32>
    %469 = arith.addf %468, %467 : vector<8x128xf32>
    %470 = arith.divf %468, %469 : vector<8x128xf32>
    %471 = vector.extract_strided_slice %461 {offsets = [0, 128], sizes = [8, 128], strides = [1, 1]} : vector<8x384xf32> to vector<8x128xf32>
    %472 = vector.extract_strided_slice %462 {offsets = [0, 128], sizes = [8, 128], strides = [1, 1]} : vector<8x384xf32> to vector<8x128xf32>
    %473 = arith.addf %471, %472 : vector<8x128xf32>
    %474 = arith.negf %473 : vector<8x128xf32>
    %475 = math.exp %474 : vector<8x128xf32>
    %cst_113 = arith.constant 1.000000e+00 : f32
    %476 = vector.broadcast %cst_113 : f32 to vector<8x128xf32>
    %477 = arith.addf %476, %475 : vector<8x128xf32>
    %478 = arith.divf %476, %477 : vector<8x128xf32>
    %479 = vector.extract_strided_slice %461 {offsets = [0, 256], sizes = [8, 128], strides = [1, 1]} : vector<8x384xf32> to vector<8x128xf32>
    %480 = vector.extract_strided_slice %462 {offsets = [0, 256], sizes = [8, 128], strides = [1, 1]} : vector<8x384xf32> to vector<8x128xf32>
    %481 = vector.broadcast %291 : vector<1x128xf32> to vector<8x128xf32>
    %482 = arith.addf %480, %481 : vector<8x128xf32>
    %483 = arith.mulf %470, %482 : vector<8x128xf32>
    %484 = arith.addf %479, %483 : vector<8x128xf32>
    %485 = math.tanh %484 : vector<8x128xf32>
    %cst_114 = arith.constant 1.000000e+00 : f32
    %486 = vector.broadcast %cst_114 : f32 to vector<8x128xf32>
    %487 = arith.subf %486, %478 : vector<8x128xf32>
    %488 = arith.mulf %487, %485 : vector<8x128xf32>
    %489 = arith.mulf %478, %457 : vector<8x128xf32>
    %490 = arith.addf %488, %489 : vector<8x128xf32>
    %c6_i32_115 = arith.constant 6 : i32
    %c8_i32_116 = arith.constant 8 : i32
    %491 = arith.muli %c6_i32_115, %c8_i32_116 : i32
    %492 = tpu.assume_multiple %491, 8 : i32
    %493 = arith.index_cast %492 : i32 to index
    %c0_117 = arith.constant 0 : index
    %494 = vector.load %arg9[%493, %c0_117] : memref<64x384xf32, #tpu.memory_space<vmem>>, vector<8x384xf32>
    %cst_118 = arith.constant dense<0.000000e+00> : vector<8x384xf32>
    %495 = tpu.matmul %490, %290, %cst_118 {dimension_numbers = #tpu.dot_dimension_numbers<[1], [0], [0], [1], [0, 0, 1, 1], [], []>} : vector<8x128xf32>, vector<128x384xf32>, vector<8x384xf32> -> vector<8x384xf32>
    %496 = vector.extract_strided_slice %494 {offsets = [0, 0], sizes = [8, 128], strides = [1, 1]} : vector<8x384xf32> to vector<8x128xf32>
    %497 = vector.extract_strided_slice %495 {offsets = [0, 0], sizes = [8, 128], strides = [1, 1]} : vector<8x384xf32> to vector<8x128xf32>
    %498 = arith.addf %496, %497 : vector<8x128xf32>
    %499 = arith.negf %498 : vector<8x128xf32>
    %500 = math.exp %499 : vector<8x128xf32>
    %cst_119 = arith.constant 1.000000e+00 : f32
    %501 = vector.broadcast %cst_119 : f32 to vector<8x128xf32>
    %502 = arith.addf %501, %500 : vector<8x128xf32>
    %503 = arith.divf %501, %502 : vector<8x128xf32>
    %504 = vector.extract_strided_slice %494 {offsets = [0, 128], sizes = [8, 128], strides = [1, 1]} : vector<8x384xf32> to vector<8x128xf32>
    %505 = vector.extract_strided_slice %495 {offsets = [0, 128], sizes = [8, 128], strides = [1, 1]} : vector<8x384xf32> to vector<8x128xf32>
    %506 = arith.addf %504, %505 : vector<8x128xf32>
    %507 = arith.negf %506 : vector<8x128xf32>
    %508 = math.exp %507 : vector<8x128xf32>
    %cst_120 = arith.constant 1.000000e+00 : f32
    %509 = vector.broadcast %cst_120 : f32 to vector<8x128xf32>
    %510 = arith.addf %509, %508 : vector<8x128xf32>
    %511 = arith.divf %509, %510 : vector<8x128xf32>
    %512 = vector.extract_strided_slice %494 {offsets = [0, 256], sizes = [8, 128], strides = [1, 1]} : vector<8x384xf32> to vector<8x128xf32>
    %513 = vector.extract_strided_slice %495 {offsets = [0, 256], sizes = [8, 128], strides = [1, 1]} : vector<8x384xf32> to vector<8x128xf32>
    %514 = vector.broadcast %291 : vector<1x128xf32> to vector<8x128xf32>
    %515 = arith.addf %513, %514 : vector<8x128xf32>
    %516 = arith.mulf %503, %515 : vector<8x128xf32>
    %517 = arith.addf %512, %516 : vector<8x128xf32>
    %518 = math.tanh %517 : vector<8x128xf32>
    %cst_121 = arith.constant 1.000000e+00 : f32
    %519 = vector.broadcast %cst_121 : f32 to vector<8x128xf32>
    %520 = arith.subf %519, %511 : vector<8x128xf32>
    %521 = arith.mulf %520, %518 : vector<8x128xf32>
    %522 = arith.mulf %511, %490 : vector<8x128xf32>
    %523 = arith.addf %521, %522 : vector<8x128xf32>
    %c7_i32_122 = arith.constant 7 : i32
    %c8_i32_123 = arith.constant 8 : i32
    %524 = arith.muli %c7_i32_122, %c8_i32_123 : i32
    %525 = tpu.assume_multiple %524, 8 : i32
    %526 = arith.index_cast %525 : i32 to index
    %c0_124 = arith.constant 0 : index
    %527 = vector.load %arg9[%526, %c0_124] : memref<64x384xf32, #tpu.memory_space<vmem>>, vector<8x384xf32>
    %cst_125 = arith.constant dense<0.000000e+00> : vector<8x384xf32>
    %528 = tpu.matmul %523, %290, %cst_125 {dimension_numbers = #tpu.dot_dimension_numbers<[1], [0], [0], [1], [0, 0, 1, 1], [], []>} : vector<8x128xf32>, vector<128x384xf32>, vector<8x384xf32> -> vector<8x384xf32>
    %529 = vector.extract_strided_slice %527 {offsets = [0, 0], sizes = [8, 128], strides = [1, 1]} : vector<8x384xf32> to vector<8x128xf32>
    %530 = vector.extract_strided_slice %528 {offsets = [0, 0], sizes = [8, 128], strides = [1, 1]} : vector<8x384xf32> to vector<8x128xf32>
    %531 = arith.addf %529, %530 : vector<8x128xf32>
    %532 = arith.negf %531 : vector<8x128xf32>
    %533 = math.exp %532 : vector<8x128xf32>
    %cst_126 = arith.constant 1.000000e+00 : f32
    %534 = vector.broadcast %cst_126 : f32 to vector<8x128xf32>
    %535 = arith.addf %534, %533 : vector<8x128xf32>
    %536 = arith.divf %534, %535 : vector<8x128xf32>
    %537 = vector.extract_strided_slice %527 {offsets = [0, 128], sizes = [8, 128], strides = [1, 1]} : vector<8x384xf32> to vector<8x128xf32>
    %538 = vector.extract_strided_slice %528 {offsets = [0, 128], sizes = [8, 128], strides = [1, 1]} : vector<8x384xf32> to vector<8x128xf32>
    %539 = arith.addf %537, %538 : vector<8x128xf32>
    %540 = arith.negf %539 : vector<8x128xf32>
    %541 = math.exp %540 : vector<8x128xf32>
    %cst_127 = arith.constant 1.000000e+00 : f32
    %542 = vector.broadcast %cst_127 : f32 to vector<8x128xf32>
    %543 = arith.addf %542, %541 : vector<8x128xf32>
    %544 = arith.divf %542, %543 : vector<8x128xf32>
    %545 = vector.extract_strided_slice %527 {offsets = [0, 256], sizes = [8, 128], strides = [1, 1]} : vector<8x384xf32> to vector<8x128xf32>
    %546 = vector.extract_strided_slice %528 {offsets = [0, 256], sizes = [8, 128], strides = [1, 1]} : vector<8x384xf32> to vector<8x128xf32>
    %547 = vector.broadcast %291 : vector<1x128xf32> to vector<8x128xf32>
    %548 = arith.addf %546, %547 : vector<8x128xf32>
    %549 = arith.mulf %536, %548 : vector<8x128xf32>
    %550 = arith.addf %545, %549 : vector<8x128xf32>
    %551 = math.tanh %550 : vector<8x128xf32>
    %cst_128 = arith.constant 1.000000e+00 : f32
    %552 = vector.broadcast %cst_128 : f32 to vector<8x128xf32>
    %553 = arith.subf %552, %544 : vector<8x128xf32>
    %554 = arith.mulf %553, %551 : vector<8x128xf32>
    %555 = arith.mulf %544, %523 : vector<8x128xf32>
    %556 = arith.addf %554, %555 : vector<8x128xf32>
    %c8_i32_129 = arith.constant 8 : i32
    %c0_130 = arith.constant 0 : index
    %c0_131 = arith.constant 0 : index
    %557 = vector.load %arg7[%c0_130, %c0_131] : memref<8x128xf32, #tpu.memory_space<vmem>>, vector<8x128xf32>
    tpu.vector_store %arg7[%c0_130, %c0_131], %556 {strides = array<i32>} : memref<8x128xf32, #tpu.memory_space<vmem>>, vector<8x128xf32>,
    return
  }
}

</mosaic_0001>

<llo_original>
// kernel: rnn_encoder_forward.1
$region0: #{rnn_encoder_forward.1}
  #allocation0 [shape = 'u32[]', space=smem, size = 0x4, offset = 0x4, fixed_abs, tag = 'smem constant byte address 0x4 - core index']
  #allocation1 [shape = 'u32[72,128]{1,0:T(1,128)}', space=vmem, size = 0x9000, scoped, tag = 'internal scratch']
  #allocation2 [shape = 'f32[64,128]{1,0:T(8,128)}', space=vmem, size = 0x8000, scoped, tag = 'scratch operand']
  #allocation3 [shape = 'f32[64,384]{1,0:T(8,128)}', space=vmem, size = 0x18000, scoped, tag = 'scratch operand']
  %s0 = inlined_call_operand.vmem [shape: f32[64,384], index: 0, kind: input, shape index: {}]
  %s1 = inlined_call_operand.vmem [shape: f32[128,384], index: 1, kind: input, shape index: {}]
  %s2 = inlined_call_operand.vmem [shape: f32[1,128], index: 2, kind: input, shape index: {}]
  %s3 = inlined_call_operand.vmem [shape: f32[128,384], index: 3, kind: input, shape index: {}]
  %s4 = inlined_call_operand.vmem [shape: f32[1,384], index: 4, kind: input, shape index: {}]
  %s5 = inlined_call_operand.vmem [shape: f32[128,384], index: 5, kind: input, shape index: {}]
  %s6 = inlined_call_operand.vmem [shape: f32[1,128], index: 6, kind: input, shape index: {}]
  %s7 = inlined_call_operand.vmem [shape: f32[8,128], index: 7, kind: output, shape index: {}]
  %s8 = sld [smem:[#allocation0]]
  $region38: #{rnn_encoder_forward.1} parent=0
    _
  %s10 = ssub.s32 1, %s8
  %s11 = scalar_select 0, %s10, %s8
  // Predicated region
  $region2: #{rnn_encoder_forward.1} parent=0 // pred_check
    _
  $region3: #{rnn_encoder_forward.1} parent=0 // pred_check_branch
    %13 = sbr.rel (0) target = $region5
  $region4: #{rnn_encoder_forward.1} parent=0 // pred_region
    _
  $region5: #{rnn_encoder_forward.1} parent=0 // pred_fallthru
    _
  // Predicated region
  $region6: #{rnn_encoder_forward.1} parent=0 // pred_check
    _
  $region7: #{rnn_encoder_forward.1} parent=0 // pred_check_branch
    %15 = sbr.rel (0) target = $region9
  $region8: #{rnn_encoder_forward.1} parent=0 // pred_region
    _
  $region9: #{rnn_encoder_forward.1} parent=0 // pred_fallthru
    _
  // Predicated region
  $region10: #{rnn_encoder_forward.1} parent=0 // pred_check
    _
  $region11: #{rnn_encoder_forward.1} parent=0 // pred_check_branch
    %17 = sbr.rel (0) target = $region13
  $region12: #{rnn_encoder_forward.1} parent=0 // pred_region
    _
  $region13: #{rnn_encoder_forward.1} parent=0 // pred_fallthru
    _
  // Predicated region
  $region14: #{rnn_encoder_forward.1} parent=0 // pred_check
    _
  $region15: #{rnn_encoder_forward.1} parent=0 // pred_check_branch
    %19 = sbr.rel (0) target = $region17
  $region16: #{rnn_encoder_forward.1} parent=0 // pred_region
    _
  $region17: #{rnn_encoder_forward.1} parent=0 // pred_fallthru
    _
  // Predicated region
  $region18: #{rnn_encoder_forward.1} parent=0 // pred_check
    _
  $region19: #{rnn_encoder_forward.1} parent=0 // pred_check_branch
    %21 = sbr.rel (0) target = $region21
  $region20: #{rnn_encoder_forward.1} parent=0 // pred_region
    _
  $region21: #{rnn_encoder_forward.1} parent=0 // pred_fallthru
    _
  // Predicated region
  $region22: #{rnn_encoder_forward.1} parent=0 // pred_check
    _
  $region23: #{rnn_encoder_forward.1} parent=0 // pred_check_branch
    %23 = sbr.rel (0) target = $region25
  $region24: #{rnn_encoder_forward.1} parent=0 // pred_region
    _
  $region25: #{rnn_encoder_forward.1} parent=0 // pred_fallthru
    _
  // Predicated region
  $region26: #{rnn_encoder_forward.1} parent=0 // pred_check
    _
  $region27: #{rnn_encoder_forward.1} parent=0 // pred_check_branch
    %25 = sbr.rel (0) target = $region29
  $region28: #{rnn_encoder_forward.1} parent=0 // pred_region
    _
  $region29: #{rnn_encoder_forward.1} parent=0 // pred_fallthru
    _
  %v26 = vld [vmem:[%s1] sm:$0xff]
  %v27 = vld [vmem:[%s1 + $0x8] sm:$0xff]
  %v28 = vld [vmem:[%s1 + $0x10] sm:$0xff]
  %v29 = vld [vmem:[%s1 + $0x18] sm:$0xff]
  %v30 = vld [vmem:[%s1 + $0x20] sm:$0xff]
  %v31 = vld [vmem:[%s1 + $0x28] sm:$0xff]
  %v32 = vld [vmem:[%s1 + $0x30] sm:$0xff]
  %v33 = vld [vmem:[%s1 + $0x38] sm:$0xff]
  %v34 = vld [vmem:[%s1 + $0x40] sm:$0xff]
  %v35 = vld [vmem:[%s1 + $0x48] sm:$0xff]
  %v36 = vld [vmem:[%s1 + $0x50] sm:$0xff]
  %v37 = vld [vmem:[%s1 + $0x58] sm:$0xff]
  %v38 = vld [vmem:[%s1 + $0x60] sm:$0xff]
  %v39 = vld [vmem:[%s1 + $0x68] sm:$0xff]
  %v40 = vld [vmem:[%s1 + $0x70] sm:$0xff]
  %v41 = vld [vmem:[%s1 + $0x78] sm:$0xff]
  %v42 = vld [vmem:[%s1 + $0x80] sm:$0xff]
  %v43 = vld [vmem:[%s1 + $0x88] sm:$0xff]
  %v44 = vld [vmem:[%s1 + $0x90] sm:$0xff]
  %v45 = vld [vmem:[%s1 + $0x98] sm:$0xff]
  %v46 = vld [vmem:[%s1 + $0xa0] sm:$0xff]
  %v47 = vld [vmem:[%s1 + $0xa8] sm:$0xff]
  %v48 = vld [vmem:[%s1 + $0xb0] sm:$0xff]
  %v49 = vld [vmem:[%s1 + $0xb8] sm:$0xff]
  %v50 = vld [vmem:[%s1 + $0xc0] sm:$0xff]
  %v51 = vld [vmem:[%s1 + $0xc8] sm:$0xff]
  %v52 = vld [vmem:[%s1 + $0xd0] sm:$0xff]
  %v53 = vld [vmem:[%s1 + $0xd8] sm:$0xff]
  %v54 = vld [vmem:[%s1 + $0xe0] sm:$0xff]
  %v55 = vld [vmem:[%s1 + $0xe8] sm:$0xff]
  %v56 = vld [vmem:[%s1 + $0xf0] sm:$0xff]
  %v57 = vld [vmem:[%s1 + $0xf8] sm:$0xff]
  %v58 = vld [vmem:[%s1 + $0x100] sm:$0xff]
  %v59 = vld [vmem:[%s1 + $0x108] sm:$0xff]
  %v60 = vld [vmem:[%s1 + $0x110] sm:$0xff]
  %v61 = vld [vmem:[%s1 + $0x118] sm:$0xff]
  %v62 = vld [vmem:[%s1 + $0x120] sm:$0xff]
  %v63 = vld [vmem:[%s1 + $0x128] sm:$0xff]
  %v64 = vld [vmem:[%s1 + $0x130] sm:$0xff]
  %v65 = vld [vmem:[%s1 + $0x138] sm:$0xff]
  %v66 = vld [vmem:[%s1 + $0x140] sm:$0xff]
  %v67 = vld [vmem:[%s1 + $0x148] sm:$0xff]
  %v68 = vld [vmem:[%s1 + $0x150] sm:$0xff]
  %v69 = vld [vmem:[%s1 + $0x158] sm:$0xff]
  %v70 = vld [vmem:[%s1 + $0x160] sm:$0xff]
  %v71 = vld [vmem:[%s1 + $0x168] sm:$0xff]
  %v72 = vld [vmem:[%s1 + $0x170] sm:$0xff]
  %v73 = vld [vmem:[%s1 + $0x178] sm:$0xff]
  %v74 = vld [vmem:[%s2] sm:$0x1]
  %s75 = smul.u32 0, 3
  %s76 = smul.addr %s75, 8
  %s77 = scalar_lea.vmem %s0, %s76
  %v78 = vld [vmem:[%s77] sm:$0xff]
  %v79 = vld [vmem:[%s77 + $0x8] sm:$0xff]
  %v80 = vld [vmem:[%s77 + $0x10] sm:$0xff]
  %81 = vmatpush.msra.mxu0 %v71
  %82 = vmatpush.msra.mxu0 %v68
  %83 = vmatpush.msra.mxu0 %v65
  %84 = vmatpush.msra.mxu0 %v62
  %85 = vmatpush.msra.mxu0 %v59
  %86 = vmatpush.msra.mxu0 %v56
  %87 = vmatpush.msra.mxu0 %v53
  %88 = vmatpush.msra.mxu0 %v50
  %89 = vmatpush.msra.mxu0 %v47
  %90 = vmatpush.msra.mxu0 %v44
  %91 = vmatpush.msra.mxu0 %v41
  %92 = vmatpush.msra.mxu0 %v38
  %93 = vmatpush.msra.mxu0 %v35
  %94 = vmatpush.msra.mxu0 %v32
  %95 = vmatpush.msra.mxu0 %v29
  %96 = vmatpush.msra.mxu0 %v26
  %97 = vmatmul.f32.gmra.mxu0 0.0
  %v98 = vpop.f32.mrf.mxu0
  %v99 = vadd.f32 0.0, %v98
  %100 = vdwg.mxu0
  %101 = vmatpush.msra.mxu0 %v72
  %102 = vmatpush.msra.mxu0 %v69
  %103 = vmatpush.msra.mxu0 %v66
  %104 = vmatpush.msra.mxu0 %v63
  %105 = vmatpush.msra.mxu0 %v60
  %106 = vmatpush.msra.mxu0 %v57
  %107 = vmatpush.msra.mxu0 %v54
  %108 = vmatpush.msra.mxu0 %v51
  %109 = vmatpush.msra.mxu0 %v48
  %110 = vmatpush.msra.mxu0 %v45
  %111 = vmatpush.msra.mxu0 %v42
  %112 = vmatpush.msra.mxu0 %v39
  %113 = vmatpush.msra.mxu0 %v36
  %114 = vmatpush.msra.mxu0 %v33
  %115 = vmatpush.msra.mxu0 %v30
  %116 = vmatpush.msra.mxu0 %v27
  %117 = vmatmul.f32.gmra.mxu0 0.0
  %v118 = vpop.f32.mrf.mxu0
  %v119 = vadd.f32 0.0, %v118
  %120 = vdwg.mxu0
  %121 = vmatpush.msra.mxu0 %v73
  %122 = vmatpush.msra.mxu0 %v70
  %123 = vmatpush.msra.mxu0 %v67
  %124 = vmatpush.msra.mxu0 %v64
  %125 = vmatpush.msra.mxu0 %v61
  %126 = vmatpush.msra.mxu0 %v58
  %127 = vmatpush.msra.mxu0 %v55
  %128 = vmatpush.msra.mxu0 %v52
  %129 = vmatpush.msra.mxu0 %v49
  %130 = vmatpush.msra.mxu0 %v46
  %131 = vmatpush.msra.mxu0 %v43
  %132 = vmatpush.msra.mxu0 %v40
  %133 = vmatpush.msra.mxu0 %v37
  %134 = vmatpush.msra.mxu0 %v34
  %135 = vmatpush.msra.mxu0 %v31
  %136 = vmatpush.msra.mxu0 %v28
  %137 = vmatmul.f32.gmra.mxu0 0.0
  %v138 = vpop.f32.mrf.mxu0
  %v139 = vadd.f32 0.0, %v138
  %140 = vdwg.mxu0
  %v141 = vadd.f32 %v78, %v99
  %v142 = vxor.u32 %v141, 2147483648
  %v143 = vmul.f32 %v142, 1.442695
  %v144 = vpow.pop %v143
  %v145 = vadd.f32 %v144, 1.0
  %v146 = vrcp.pop %v145
  %v147 = vmul.f32 %v145, %v146
  %v148 = vsub.f32 1.0, %v147
  %v149 = vmul.f32 %v146, %v148
  %v150 = vadd.f32 %v146, %v149
  %vm151 = vweird.f32 %v145
  %vm152 = vweird.f32 %v146
  %vm153 = vmor %vm151, %vm152
  %v154 = vsel %vm153, %v146, %v150
  %v155 = vand.u32 2147483647, %v145
  %vm156 = vcmp.eq.f32.partialorder %v155, 8.507059e+37
  %v157 = vand.u32 %v145, 2147483648
  %v158 = vor.u32 1.1754944e-38, %v157
  %v159 = vsel %vm156, %v158, %v154
  %v160 = vmul.f32 1.0, %v159
  %v161 = vadd.f32 %v79, %v119
  %v162 = vxor.u32 %v161, 2147483648
  %v163 = vmul.f32 %v162, 1.442695
  %v164 = vpow.pop %v163
  %v165 = vadd.f32 %v164, 1.0
  %v166 = vrcp.pop %v165
  %v167 = vmul.f32 %v165, %v166
  %v168 = vsub.f32 1.0, %v167
  %v169 = vmul.f32 %v166, %v168
  %v170 = vadd.f32 %v166, %v169
  %vm171 = vweird.f32 %v165
  %vm172 = vweird.f32 %v166
  %vm173 = vmor %vm171, %vm172
  %v174 = vsel %vm173, %v166, %v170
  %v175 = vand.u32 2147483647, %v165
  %vm176 = vcmp.eq.f32.partialorder %v175, 8.507059e+37
  %v177 = vand.u32 %v165, 2147483648
  %v178 = vor.u32 1.1754944e-38, %v177
  %v179 = vsel %vm176, %v178, %v174
  %v180 = vmul.f32 1.0, %v179
  %v182 = vperm.slane %v74, 0
  %v184 = vadd.f32 %v139, %v182
  %v185 = vmul.f32 %v160, %v184
  %v186 = vadd.f32 %v80, %v185
  %v187 = vtanh.pop %v186
  %v188 = vsub.f32 1.0, %v180
  %v189 = vmul.f32 %v188, %v187
  %v190 = vmul.f32 %v180, 0.0
  %v191 = vadd.f32 %v189, %v190
  %192 = vst [vmem:[#allocation2] sm:$0xff] %v191
  %s193 = smul.u32 1, 3
  %s194 = smul.addr %s193, 8
  %s195 = scalar_lea.vmem %s0, %s194
  %v196 = vld [vmem:[%s195] sm:$0xff]
  %v197 = vld [vmem:[%s195 + $0x8] sm:$0xff]
  %v198 = vld [vmem:[%s195 + $0x10] sm:$0xff]
  %199 = vmatpush.msra.mxu0 %v71
  %200 = vmatpush.msra.mxu0 %v68
  %201 = vmatpush.msra.mxu0 %v65
  %202 = vmatpush.msra.mxu0 %v62
  %203 = vmatpush.msra.mxu0 %v59
  %204 = vmatpush.msra.mxu0 %v56
  %205 = vmatpush.msra.mxu0 %v53
  %206 = vmatpush.msra.mxu0 %v50
  %207 = vmatpush.msra.mxu0 %v47
  %208 = vmatpush.msra.mxu0 %v44
  %209 = vmatpush.msra.mxu0 %v41
  %210 = vmatpush.msra.mxu0 %v38
  %211 = vmatpush.msra.mxu0 %v35
  %212 = vmatpush.msra.mxu0 %v32
  %213 = vmatpush.msra.mxu0 %v29
  %214 = vmatpush.msra.mxu0 %v26
  %215 = vmatmul.f32.gmra.mxu0 %v191
  %v216 = vpop.f32.mrf.mxu0
  %v217 = vadd.f32 0.0, %v216
  %218 = vdwg.mxu0
  %219 = vmatpush.msra.mxu0 %v72
  %220 = vmatpush.msra.mxu0 %v69
  %221 = vmatpush.msra.mxu0 %v66
  %222 = vmatpush.msra.mxu0 %v63
  %223 = vmatpush.msra.mxu0 %v60
  %224 = vmatpush.msra.mxu0 %v57
  %225 = vmatpush.msra.mxu0 %v54
  %226 = vmatpush.msra.mxu0 %v51
  %227 = vmatpush.msra.mxu0 %v48
  %228 = vmatpush.msra.mxu0 %v45
  %229 = vmatpush.msra.mxu0 %v42
  %230 = vmatpush.msra.mxu0 %v39
  %231 = vmatpush.msra.mxu0 %v36
  %232 = vmatpush.msra.mxu0 %v33
  %233 = vmatpush.msra.mxu0 %v30
  %234 = vmatpush.msra.mxu0 %v27
  %235 = vmatmul.f32.gmra.mxu0 %v191
  %v236 = vpop.f32.mrf.mxu0
  %v237 = vadd.f32 0.0, %v236
  %238 = vdwg.mxu0
  %239 = vmatpush.msra.mxu0 %v73
  %240 = vmatpush.msra.mxu0 %v70
  %241 = vmatpush.msra.mxu0 %v67
  %242 = vmatpush.msra.mxu0 %v64
  %243 = vmatpush.msra.mxu0 %v61
  %244 = vmatpush.msra.mxu0 %v58
  %245 = vmatpush.msra.mxu0 %v55
  %246 = vmatpush.msra.mxu0 %v52
  %247 = vmatpush.msra.mxu0 %v49
  %248 = vmatpush.msra.mxu0 %v46
  %249 = vmatpush.msra.mxu0 %v43
  %250 = vmatpush.msra.mxu0 %v40
  %251 = vmatpush.msra.mxu0 %v37
  %252 = vmatpush.msra.mxu0 %v34
  %253 = vmatpush.msra.mxu0 %v31
  %254 = vmatpush.msra.mxu0 %v28
  %255 = vmatmul.f32.gmra.mxu0 %v191
  %v256 = vpop.f32.mrf.mxu0
  %v257 = vadd.f32 0.0, %v256
  %258 = vdwg.mxu0
  %v259 = vadd.f32 %v196, %v217
  %v260 = vxor.u32 %v259, 2147483648
  %v261 = vmul.f32 %v260, 1.442695
  %v262 = vpow.pop %v261
  %v263 = vadd.f32 %v262, 1.0
  %v264 = vrcp.pop %v263
  %v265 = vmul.f32 %v263, %v264
  %v266 = vsub.f32 1.0, %v265
  %v267 = vmul.f32 %v264, %v266
  %v268 = vadd.f32 %v264, %v267
  %vm269 = vweird.f32 %v263
  %vm270 = vweird.f32 %v264
  %vm271 = vmor %vm269, %vm270
  %v272 = vsel %vm271, %v264, %v268
  %v273 = vand.u32 2147483647, %v263
  %vm274 = vcmp.eq.f32.partialorder %v273, 8.507059e+37
  %v275 = vand.u32 %v263, 2147483648
  %v276 = vor.u32 1.1754944e-38, %v275
  %v277 = vsel %vm274, %v276, %v272
  %v278 = vmul.f32 1.0, %v277
  %v279 = vadd.f32 %v197, %v237
  %v280 = vxor.u32 %v279, 2147483648
  %v281 = vmul.f32 %v280, 1.442695
  %v282 = vpow.pop %v281
  %v283 = vadd.f32 %v282, 1.0
  %v284 = vrcp.pop %v283
  %v285 = vmul.f32 %v283, %v284
  %v286 = vsub.f32 1.0, %v285
  %v287 = vmul.f32 %v284, %v286
  %v288 = vadd.f32 %v284, %v287
  %vm289 = vweird.f32 %v283
  %vm290 = vweird.f32 %v284
  %vm291 = vmor %vm289, %vm290
  %v292 = vsel %vm291, %v284, %v288
  %v293 = vand.u32 2147483647, %v283
  %vm294 = vcmp.eq.f32.partialorder %v293, 8.507059e+37
  %v295 = vand.u32 %v283, 2147483648
  %v296 = vor.u32 1.1754944e-38, %v295
  %v297 = vsel %vm294, %v296, %v292
  %v298 = vmul.f32 1.0, %v297
  %v299 = vadd.f32 %v257, %v182
  %v300 = vmul.f32 %v278, %v299
  %v301 = vadd.f32 %v198, %v300
  %v302 = vtanh.pop %v301
  %v303 = vsub.f32 1.0, %v298
  %v304 = vmul.f32 %v303, %v302
  %v305 = vmul.f32 %v298, %v191
  %v306 = vadd.f32 %v304, %v305
  %s307 = scalar_lea.vmem [#allocation2], 8
  %308 = vst [vmem:[%s307] sm:$0xff] %v306
  %s309 = smul.u32 2, 3
  %s310 = smul.addr %s309, 8
  %s311 = scalar_lea.vmem %s0, %s310
  %v312 = vld [vmem:[%s311] sm:$0xff]
  %v313 = vld [vmem:[%s311 + $0x8] sm:$0xff]
  %v314 = vld [vmem:[%s311 + $0x10] sm:$0xff]
  %315 = vmatpush.msra.mxu0 %v71
  %316 = vmatpush.msra.mxu0 %v68
  %317 = vmatpush.msra.mxu0 %v65
  %318 = vmatpush.msra.mxu0 %v62
  %319 = vmatpush.msra.mxu0 %v59
  %320 = vmatpush.msra.mxu0 %v56
  %321 = vmatpush.msra.mxu0 %v53
  %322 = vmatpush.msra.mxu0 %v50
  %323 = vmatpush.msra.mxu0 %v47
  %324 = vmatpush.msra.mxu0 %v44
  %325 = vmatpush.msra.mxu0 %v41
  %326 = vmatpush.msra.mxu0 %v38
  %327 = vmatpush.msra.mxu0 %v35
  %328 = vmatpush.msra.mxu0 %v32
  %329 = vmatpush.msra.mxu0 %v29
  %330 = vmatpush.msra.mxu0 %v26
  %331 = vmatmul.f32.gmra.mxu0 %v306
  %v332 = vpop.f32.mrf.mxu0
  %v333 = vadd.f32 0.0, %v332
  %334 = vdwg.mxu0
  %335 = vmatpush.msra.mxu0 %v72
  %336 = vmatpush.msra.mxu0 %v69
  %337 = vmatpush.msra.mxu0 %v66
  %338 = vmatpush.msra.mxu0 %v63
  %339 = vmatpush.msra.mxu0 %v60
  %340 = vmatpush.msra.mxu0 %v57
  %341 = vmatpush.msra.mxu0 %v54
  %342 = vmatpush.msra.mxu0 %v51
  %343 = vmatpush.msra.mxu0 %v48
  %344 = vmatpush.msra.mxu0 %v45
  %345 = vmatpush.msra.mxu0 %v42
  %346 = vmatpush.msra.mxu0 %v39
  %347 = vmatpush.msra.mxu0 %v36
  %348 = vmatpush.msra.mxu0 %v33
  %349 = vmatpush.msra.mxu0 %v30
  %350 = vmatpush.msra.mxu0 %v27
  %351 = vmatmul.f32.gmra.mxu0 %v306
  %v352 = vpop.f32.mrf.mxu0
  %v353 = vadd.f32 0.0, %v352
  %354 = vdwg.mxu0
  %355 = vmatpush.msra.mxu0 %v73
  %356 = vmatpush.msra.mxu0 %v70
  %357 = vmatpush.msra.mxu0 %v67
  %358 = vmatpush.msra.mxu0 %v64
  %359 = vmatpush.msra.mxu0 %v61
  %360 = vmatpush.msra.mxu0 %v58
  %361 = vmatpush.msra.mxu0 %v55
  %362 = vmatpush.msra.mxu0 %v52
  %363 = vmatpush.msra.mxu0 %v49
  %364 = vmatpush.msra.mxu0 %v46
  %365 = vmatpush.msra.mxu0 %v43
  %366 = vmatpush.msra.mxu0 %v40
  %367 = vmatpush.msra.mxu0 %v37
  %368 = vmatpush.msra.mxu0 %v34
  %369 = vmatpush.msra.mxu0 %v31
  %370 = vmatpush.msra.mxu0 %v28
  %371 = vmatmul.f32.gmra.mxu0 %v306
  %v372 = vpop.f32.mrf.mxu0
  %v373 = vadd.f32 0.0, %v372
  %374 = vdwg.mxu0
  %v375 = vadd.f32 %v312, %v333
  %v376 = vxor.u32 %v375, 2147483648
  %v377 = vmul.f32 %v376, 1.442695
  %v378 = vpow.pop %v377
  %v379 = vadd.f32 %v378, 1.0
  %v380 = vrcp.pop %v379
  %v381 = vmul.f32 %v379, %v380
  %v382 = vsub.f32 1.0, %v381
  %v383 = vmul.f32 %v380, %v382
  %v384 = vadd.f32 %v380, %v383
  %vm385 = vweird.f32 %v379
  %vm386 = vweird.f32 %v380
  %vm387 = vmor %vm385, %vm386
  %v388 = vsel %vm387, %v380, %v384
  %v389 = vand.u32 2147483647, %v379
  %vm390 = vcmp.eq.f32.partialorder %v389, 8.507059e+37
  %v391 = vand.u32 %v379, 2147483648
  %v392 = vor.u32 1.1754944e-38, %v391
  %v393 = vsel %vm390, %v392, %v388
  %v394 = vmul.f32 1.0, %v393
  %v395 = vadd.f32 %v313, %v353
  %v396 = vxor.u32 %v395, 2147483648
  %v397 = vmul.f32 %v396, 1.442695
  %v398 = vpow.pop %v397
  %v399 = vadd.f32 %v398, 1.0
  %v400 = vrcp.pop %v399
  %v401 = vmul.f32 %v399, %v400
  %v402 = vsub.f32 1.0, %v401
  %v403 = vmul.f32 %v400, %v402
  %v404 = vadd.f32 %v400, %v403
  %vm405 = vweird.f32 %v399
  %vm406 = vweird.f32 %v400
  %vm407 = vmor %vm405, %vm406
  %v408 = vsel %vm407, %v400, %v404
  %v409 = vand.u32 2147483647, %v399
  %vm410 = vcmp.eq.f32.partialorder %v409, 8.507059e+37
  %v411 = vand.u32 %v399, 2147483648
  %v412 = vor.u32 1.1754944e-38, %v411
  %v413 = vsel %vm410, %v412, %v408
  %v414 = vmul.f32 1.0, %v413
  %v415 = vadd.f32 %v373, %v182
  %v416 = vmul.f32 %v394, %v415
  %v417 = vadd.f32 %v314, %v416
  %v418 = vtanh.pop %v417
  %v419 = vsub.f32 1.0, %v414
  %v420 = vmul.f32 %v419, %v418
  %v421 = vmul.f32 %v414, %v306
  %v422 = vadd.f32 %v420, %v421
  %s423 = scalar_lea.vmem [#allocation2], 16
  %424 = vst [vmem:[%s423] sm:$0xff] %v422
  %s425 = smul.u32 3, 3
  %s426 = smul.addr %s425, 8
  %s427 = scalar_lea.vmem %s0, %s426
  %v428 = vld [vmem:[%s427] sm:$0xff]
  %v429 = vld [vmem:[%s427 + $0x8] sm:$0xff]
  %v430 = vld [vmem:[%s427 + $0x10] sm:$0xff]
  %431 = vmatpush.msra.mxu0 %v71
  %432 = vmatpush.msra.mxu0 %v68
  %433 = vmatpush.msra.mxu0 %v65
  %434 = vmatpush.msra.mxu0 %v62
  %435 = vmatpush.msra.mxu0 %v59
  %436 = vmatpush.msra.mxu0 %v56
  %437 = vmatpush.msra.mxu0 %v53
  %438 = vmatpush.msra.mxu0 %v50
  %439 = vmatpush.msra.mxu0 %v47
  %440 = vmatpush.msra.mxu0 %v44
  %441 = vmatpush.msra.mxu0 %v41
  %442 = vmatpush.msra.mxu0 %v38
  %443 = vmatpush.msra.mxu0 %v35
  %444 = vmatpush.msra.mxu0 %v32
  %445 = vmatpush.msra.mxu0 %v29
  %446 = vmatpush.msra.mxu0 %v26
  %447 = vmatmul.f32.gmra.mxu0 %v422
  %v448 = vpop.f32.mrf.mxu0
  %v449 = vadd.f32 0.0, %v448
  %450 = vdwg.mxu0
  %451 = vmatpush.msra.mxu0 %v72
  %452 = vmatpush.msra.mxu0 %v69
  %453 = vmatpush.msra.mxu0 %v66
  %454 = vmatpush.msra.mxu0 %v63
  %455 = vmatpush.msra.mxu0 %v60
  %456 = vmatpush.msra.mxu0 %v57
  %457 = vmatpush.msra.mxu0 %v54
  %458 = vmatpush.msra.mxu0 %v51
  %459 = vmatpush.msra.mxu0 %v48
  %460 = vmatpush.msra.mxu0 %v45
  %461 = vmatpush.msra.mxu0 %v42
  %462 = vmatpush.msra.mxu0 %v39
  %463 = vmatpush.msra.mxu0 %v36
  %464 = vmatpush.msra.mxu0 %v33
  %465 = vmatpush.msra.mxu0 %v30
  %466 = vmatpush.msra.mxu0 %v27
  %467 = vmatmul.f32.gmra.mxu0 %v422
  %v468 = vpop.f32.mrf.mxu0
  %v469 = vadd.f32 0.0, %v468
  %470 = vdwg.mxu0
  %471 = vmatpush.msra.mxu0 %v73
  %472 = vmatpush.msra.mxu0 %v70
  %473 = vmatpush.msra.mxu0 %v67
  %474 = vmatpush.msra.mxu0 %v64
  %475 = vmatpush.msra.mxu0 %v61
  %476 = vmatpush.msra.mxu0 %v58
  %477 = vmatpush.msra.mxu0 %v55
  %478 = vmatpush.msra.mxu0 %v52
  %479 = vmatpush.msra.mxu0 %v49
  %480 = vmatpush.msra.mxu0 %v46
  %481 = vmatpush.msra.mxu0 %v43
  %482 = vmatpush.msra.mxu0 %v40
  %483 = vmatpush.msra.mxu0 %v37
  %484 = vmatpush.msra.mxu0 %v34
  %485 = vmatpush.msra.mxu0 %v31
  %486 = vmatpush.msra.mxu0 %v28
  %487 = vmatmul.f32.gmra.mxu0 %v422
  %v488 = vpop.f32.mrf.mxu0
  %v489 = vadd.f32 0.0, %v488
  %490 = vdwg.mxu0
  %v491 = vadd.f32 %v428, %v449
  %v492 = vxor.u32 %v491, 2147483648
  %v493 = vmul.f32 %v492, 1.442695
  %v494 = vpow.pop %v493
  %v495 = vadd.f32 %v494, 1.0
  %v496 = vrcp.pop %v495
  %v497 = vmul.f32 %v495, %v496
  %v498 = vsub.f32 1.0, %v497
  %v499 = vmul.f32 %v496, %v498
  %v500 = vadd.f32 %v496, %v499
  %vm501 = vweird.f32 %v495
  %vm502 = vweird.f32 %v496
  %vm503 = vmor %vm501, %vm502
  %v504 = vsel %vm503, %v496, %v500
  %v505 = vand.u32 2147483647, %v495
  %vm506 = vcmp.eq.f32.partialorder %v505, 8.507059e+37
  %v507 = vand.u32 %v495, 2147483648
  %v508 = vor.u32 1.1754944e-38, %v507
  %v509 = vsel %vm506, %v508, %v504
  %v510 = vmul.f32 1.0, %v509
  %v511 = vadd.f32 %v429, %v469
  %v512 = vxor.u32 %v511, 2147483648
  %v513 = vmul.f32 %v512, 1.442695
  %v514 = vpow.pop %v513
  %v515 = vadd.f32 %v514, 1.0
  %v516 = vrcp.pop %v515
  %v517 = vmul.f32 %v515, %v516
  %v518 = vsub.f32 1.0, %v517
  %v519 = vmul.f32 %v516, %v518
  %v520 = vadd.f32 %v516, %v519
  %vm521 = vweird.f32 %v515
  %vm522 = vweird.f32 %v516
  %vm523 = vmor %vm521, %vm522
  %v524 = vsel %vm523, %v516, %v520
  %v525 = vand.u32 2147483647, %v515
  %vm526 = vcmp.eq.f32.partialorder %v525, 8.507059e+37
  %v527 = vand.u32 %v515, 2147483648
  %v528 = vor.u32 1.1754944e-38, %v527
  %v529 = vsel %vm526, %v528, %v524
  %v530 = vmul.f32 1.0, %v529
  %v531 = vadd.f32 %v489, %v182
  %v532 = vmul.f32 %v510, %v531
  %v533 = vadd.f32 %v430, %v532
  %v534 = vtanh.pop %v533
  %v535 = vsub.f32 1.0, %v530
  %v536 = vmul.f32 %v535, %v534
  %v537 = vmul.f32 %v530, %v422
  %v538 = vadd.f32 %v536, %v537
  %s539 = scalar_lea.vmem [#allocation2], 24
  %540 = vst [vmem:[%s539] sm:$0xff] %v538
  %s541 = smul.u32 4, 3
  %s542 = smul.addr %s541, 8
  %s543 = scalar_lea.vmem %s0, %s542
  %v544 = vld [vmem:[%s543] sm:$0xff]
  %v545 = vld [vmem:[%s543 + $0x8] sm:$0xff]
  %v546 = vld [vmem:[%s543 + $0x10] sm:$0xff]
  %547 = vmatpush.msra.mxu0 %v71
  %548 = vmatpush.msra.mxu0 %v68
  %549 = vmatpush.msra.mxu0 %v65
  %550 = vmatpush.msra.mxu0 %v62
  %551 = vmatpush.msra.mxu0 %v59
  %552 = vmatpush.msra.mxu0 %v56
  %553 = vmatpush.msra.mxu0 %v53
  %554 = vmatpush.msra.mxu0 %v50
  %555 = vmatpush.msra.mxu0 %v47
  %556 = vmatpush.msra.mxu0 %v44
  %557 = vmatpush.msra.mxu0 %v41
  %558 = vmatpush.msra.mxu0 %v38
  %559 = vmatpush.msra.mxu0 %v35
  %560 = vmatpush.msra.mxu0 %v32
  %561 = vmatpush.msra.mxu0 %v29
  %562 = vmatpush.msra.mxu0 %v26
  %563 = vmatmul.f32.gmra.mxu0 %v538
  %v564 = vpop.f32.mrf.mxu0
  %v565 = vadd.f32 0.0, %v564
  %566 = vdwg.mxu0
  %567 = vmatpush.msra.mxu0 %v72
  %568 = vmatpush.msra.mxu0 %v69
  %569 = vmatpush.msra.mxu0 %v66
  %570 = vmatpush.msra.mxu0 %v63
  %571 = vmatpush.msra.mxu0 %v60
  %572 = vmatpush.msra.mxu0 %v57
  %573 = vmatpush.msra.mxu0 %v54
  %574 = vmatpush.msra.mxu0 %v51
  %575 = vmatpush.msra.mxu0 %v48
  %576 = vmatpush.msra.mxu0 %v45
  %577 = vmatpush.msra.mxu0 %v42
  %578 = vmatpush.msra.mxu0 %v39
  %579 = vmatpush.msra.mxu0 %v36
  %580 = vmatpush.msra.mxu0 %v33
  %581 = vmatpush.msra.mxu0 %v30
  %582 = vmatpush.msra.mxu0 %v27
  %583 = vmatmul.f32.gmra.mxu0 %v538
  %v584 = vpop.f32.mrf.mxu0
  %v585 = vadd.f32 0.0, %v584
  %586 = vdwg.mxu0
  %587 = vmatpush.msra.mxu0 %v73
  %588 = vmatpush.msra.mxu0 %v70
  %589 = vmatpush.msra.mxu0 %v67
  %590 = vmatpush.msra.mxu0 %v64
  %591 = vmatpush.msra.mxu0 %v61
  %592 = vmatpush.msra.mxu0 %v58
  %593 = vmatpush.msra.mxu0 %v55
  %594 = vmatpush.msra.mxu0 %v52
  %595 = vmatpush.msra.mxu0 %v49
  %596 = vmatpush.msra.mxu0 %v46
  %597 = vmatpush.msra.mxu0 %v43
  %598 = vmatpush.msra.mxu0 %v40
  %599 = vmatpush.msra.mxu0 %v37
  %600 = vmatpush.msra.mxu0 %v34
  %601 = vmatpush.msra.mxu0 %v31
  %602 = vmatpush.msra.mxu0 %v28
  %603 = vmatmul.f32.gmra.mxu0 %v538
  %v604 = vpop.f32.mrf.mxu0
  %v605 = vadd.f32 0.0, %v604
  %606 = vdwg.mxu0
  %v607 = vadd.f32 %v544, %v565
  %v608 = vxor.u32 %v607, 2147483648
  %v609 = vmul.f32 %v608, 1.442695
  %v610 = vpow.pop %v609
  %v611 = vadd.f32 %v610, 1.0
  %v612 = vrcp.pop %v611
  %v613 = vmul.f32 %v611, %v612
  %v614 = vsub.f32 1.0, %v613
  %v615 = vmul.f32 %v612, %v614
  %v616 = vadd.f32 %v612, %v615
  %vm617 = vweird.f32 %v611
  %vm618 = vweird.f32 %v612
  %vm619 = vmor %vm617, %vm618
  %v620 = vsel %vm619, %v612, %v616
  %v621 = vand.u32 2147483647, %v611
  %vm622 = vcmp.eq.f32.partialorder %v621, 8.507059e+37
  %v623 = vand.u32 %v611, 2147483648
  %v624 = vor.u32 1.1754944e-38, %v623
  %v625 = vsel %vm622, %v624, %v620
  %v626 = vmul.f32 1.0, %v625
  %v627 = vadd.f32 %v545, %v585
  %v628 = vxor.u32 %v627, 2147483648
  %v629 = vmul.f32 %v628, 1.442695
  %v630 = vpow.pop %v629
  %v631 = vadd.f32 %v630, 1.0
  %v632 = vrcp.pop %v631
  %v633 = vmul.f32 %v631, %v632
  %v634 = vsub.f32 1.0, %v633
  %v635 = vmul.f32 %v632, %v634
  %v636 = vadd.f32 %v632, %v635
  %vm637 = vweird.f32 %v631
  %vm638 = vweird.f32 %v632
  %vm639 = vmor %vm637, %vm638
  %v640 = vsel %vm639, %v632, %v636
  %v641 = vand.u32 2147483647, %v631
  %vm642 = vcmp.eq.f32.partialorder %v641, 8.507059e+37
  %v643 = vand.u32 %v631, 2147483648
  %v644 = vor.u32 1.1754944e-38, %v643
  %v645 = vsel %vm642, %v644, %v640
  %v646 = vmul.f32 1.0, %v645
  %v647 = vadd.f32 %v605, %v182
  %v648 = vmul.f32 %v626, %v647
  %v649 = vadd.f32 %v546, %v648
  %v650 = vtanh.pop %v649
  %v651 = vsub.f32 1.0, %v646
  %v652 = vmul.f32 %v651, %v650
  %v653 = vmul.f32 %v646, %v538
  %v654 = vadd.f32 %v652, %v653
  %s655 = scalar_lea.vmem [#allocation2], 32
  %656 = vst [vmem:[%s655] sm:$0xff] %v654
  %s657 = smul.u32 5, 3
  %s658 = smul.addr %s657, 8
  %s659 = scalar_lea.vmem %s0, %s658
  %v660 = vld [vmem:[%s659] sm:$0xff]
  %v661 = vld [vmem:[%s659 + $0x8] sm:$0xff]
  %v662 = vld [vmem:[%s659 + $0x10] sm:$0xff]
  %663 = vmatpush.msra.mxu0 %v71
  %664 = vmatpush.msra.mxu0 %v68
  %665 = vmatpush.msra.mxu0 %v65
  %666 = vmatpush.msra.mxu0 %v62
  %667 = vmatpush.msra.mxu0 %v59
  %668 = vmatpush.msra.mxu0 %v56
  %669 = vmatpush.msra.mxu0 %v53
  %670 = vmatpush.msra.mxu0 %v50
  %671 = vmatpush.msra.mxu0 %v47
  %672 = vmatpush.msra.mxu0 %v44
  %673 = vmatpush.msra.mxu0 %v41
  %674 = vmatpush.msra.mxu0 %v38
  %675 = vmatpush.msra.mxu0 %v35
  %676 = vmatpush.msra.mxu0 %v32
  %677 = vmatpush.msra.mxu0 %v29
  %678 = vmatpush.msra.mxu0 %v26
  %679 = vmatmul.f32.gmra.mxu0 %v654
  %v680 = vpop.f32.mrf.mxu0
  %v681 = vadd.f32 0.0, %v680
  %682 = vdwg.mxu0
  %683 = vmatpush.msra.mxu0 %v72
  %684 = vmatpush.msra.mxu0 %v69
  %685 = vmatpush.msra.mxu0 %v66
  %686 = vmatpush.msra.mxu0 %v63
  %687 = vmatpush.msra.mxu0 %v60
  %688 = vmatpush.msra.mxu0 %v57
  %689 = vmatpush.msra.mxu0 %v54
  %690 = vmatpush.msra.mxu0 %v51
  %691 = vmatpush.msra.mxu0 %v48
  %692 = vmatpush.msra.mxu0 %v45
  %693 = vmatpush.msra.mxu0 %v42
  %694 = vmatpush.msra.mxu0 %v39
  %695 = vmatpush.msra.mxu0 %v36
  %696 = vmatpush.msra.mxu0 %v33
  %697 = vmatpush.msra.mxu0 %v30
  %698 = vmatpush.msra.mxu0 %v27
  %699 = vmatmul.f32.gmra.mxu0 %v654
  %v700 = vpop.f32.mrf.mxu0
  %v701 = vadd.f32 0.0, %v700
  %702 = vdwg.mxu0
  %703 = vmatpush.msra.mxu0 %v73
  %704 = vmatpush.msra.mxu0 %v70
  %705 = vmatpush.msra.mxu0 %v67
  %706 = vmatpush.msra.mxu0 %v64
  %707 = vmatpush.msra.mxu0 %v61
  %708 = vmatpush.msra.mxu0 %v58
  %709 = vmatpush.msra.mxu0 %v55
  %710 = vmatpush.msra.mxu0 %v52
  %711 = vmatpush.msra.mxu0 %v49
  %712 = vmatpush.msra.mxu0 %v46
  %713 = vmatpush.msra.mxu0 %v43
  %714 = vmatpush.msra.mxu0 %v40
  %715 = vmatpush.msra.mxu0 %v37
  %716 = vmatpush.msra.mxu0 %v34
  %717 = vmatpush.msra.mxu0 %v31
  %718 = vmatpush.msra.mxu0 %v28
  %719 = vmatmul.f32.gmra.mxu0 %v654
  %v720 = vpop.f32.mrf.mxu0
  %v721 = vadd.f32 0.0, %v720
  %722 = vdwg.mxu0
  %v723 = vadd.f32 %v660, %v681
  %v724 = vxor.u32 %v723, 2147483648
  %v725 = vmul.f32 %v724, 1.442695
  %v726 = vpow.pop %v725
  %v727 = vadd.f32 %v726, 1.0
  %v728 = vrcp.pop %v727
  %v729 = vmul.f32 %v727, %v728
  %v730 = vsub.f32 1.0, %v729
  %v731 = vmul.f32 %v728, %v730
  %v732 = vadd.f32 %v728, %v731
  %vm733 = vweird.f32 %v727
  %vm734 = vweird.f32 %v728
  %vm735 = vmor %vm733, %vm734
  %v736 = vsel %vm735, %v728, %v732
  %v737 = vand.u32 2147483647, %v727
  %vm738 = vcmp.eq.f32.partialorder %v737, 8.507059e+37
  %v739 = vand.u32 %v727, 2147483648
  %v740 = vor.u32 1.1754944e-38, %v739
  %v741 = vsel %vm738, %v740, %v736
  %v742 = vmul.f32 1.0, %v741
  %v743 = vadd.f32 %v661, %v701
  %v744 = vxor.u32 %v743, 2147483648
  %v745 = vmul.f32 %v744, 1.442695
  %v746 = vpow.pop %v745
  %v747 = vadd.f32 %v746, 1.0
  %v748 = vrcp.pop %v747
  %v749 = vmul.f32 %v747, %v748
  %v750 = vsub.f32 1.0, %v749
  %v751 = vmul.f32 %v748, %v750
  %v752 = vadd.f32 %v748, %v751
  %vm753 = vweird.f32 %v747
  %vm754 = vweird.f32 %v748
  %vm755 = vmor %vm753, %vm754
  %v756 = vsel %vm755, %v748, %v752
  %v757 = vand.u32 2147483647, %v747
  %vm758 = vcmp.eq.f32.partialorder %v757, 8.507059e+37
  %v759 = vand.u32 %v747, 2147483648
  %v760 = vor.u32 1.1754944e-38, %v759
  %v761 = vsel %vm758, %v760, %v756
  %v762 = vmul.f32 1.0, %v761
  %v763 = vadd.f32 %v721, %v182
  %v764 = vmul.f32 %v742, %v763
  %v765 = vadd.f32 %v662, %v764
  %v766 = vtanh.pop %v765
  %v767 = vsub.f32 1.0, %v762
  %v768 = vmul.f32 %v767, %v766
  %v769 = vmul.f32 %v762, %v654
  %v770 = vadd.f32 %v768, %v769
  %s771 = scalar_lea.vmem [#allocation2], 40
  %772 = vst [vmem:[%s771] sm:$0xff] %v770
  %s773 = smul.u32 6, 3
  %s774 = smul.addr %s773, 8
  %s775 = scalar_lea.vmem %s0, %s774
  %v776 = vld [vmem:[%s775] sm:$0xff]
  %v777 = vld [vmem:[%s775 + $0x8] sm:$0xff]
  %v778 = vld [vmem:[%s775 + $0x10] sm:$0xff]
  %779 = vmatpush.msra.mxu0 %v71
  %780 = vmatpush.msra.mxu0 %v68
  %781 = vmatpush.msra.mxu0 %v65
  %782 = vmatpush.msra.mxu0 %v62
  %783 = vmatpush.msra.mxu0 %v59
  %784 = vmatpush.msra.mxu0 %v56
  %785 = vmatpush.msra.mxu0 %v53
  %786 = vmatpush.msra.mxu0 %v50
  %787 = vmatpush.msra.mxu0 %v47
  %788 = vmatpush.msra.mxu0 %v44
  %789 = vmatpush.msra.mxu0 %v41
  %790 = vmatpush.msra.mxu0 %v38
  %791 = vmatpush.msra.mxu0 %v35
  %792 = vmatpush.msra.mxu0 %v32
  %793 = vmatpush.msra.mxu0 %v29
  %794 = vmatpush.msra.mxu0 %v26
  %795 = vmatmul.f32.gmra.mxu0 %v770
  %v796 = vpop.f32.mrf.mxu0
  %v797 = vadd.f32 0.0, %v796
  %798 = vdwg.mxu0
  %799 = vmatpush.msra.mxu0 %v72
  %800 = vmatpush.msra.mxu0 %v69
  %801 = vmatpush.msra.mxu0 %v66
  %802 = vmatpush.msra.mxu0 %v63
  %803 = vmatpush.msra.mxu0 %v60
  %804 = vmatpush.msra.mxu0 %v57
  %805 = vmatpush.msra.mxu0 %v54
  %806 = vmatpush.msra.mxu0 %v51
  %807 = vmatpush.msra.mxu0 %v48
  %808 = vmatpush.msra.mxu0 %v45
  %809 = vmatpush.msra.mxu0 %v42
  %810 = vmatpush.msra.mxu0 %v39
  %811 = vmatpush.msra.mxu0 %v36
  %812 = vmatpush.msra.mxu0 %v33
  %813 = vmatpush.msra.mxu0 %v30
  %814 = vmatpush.msra.mxu0 %v27
  %815 = vmatmul.f32.gmra.mxu0 %v770
  %v816 = vpop.f32.mrf.mxu0
  %v817 = vadd.f32 0.0, %v816
  %818 = vdwg.mxu0
  %819 = vmatpush.msra.mxu0 %v73
  %820 = vmatpush.msra.mxu0 %v70
  %821 = vmatpush.msra.mxu0 %v67
  %822 = vmatpush.msra.mxu0 %v64
  %823 = vmatpush.msra.mxu0 %v61
  %824 = vmatpush.msra.mxu0 %v58
  %825 = vmatpush.msra.mxu0 %v55
  %826 = vmatpush.msra.mxu0 %v52
  %827 = vmatpush.msra.mxu0 %v49
  %828 = vmatpush.msra.mxu0 %v46
  %829 = vmatpush.msra.mxu0 %v43
  %830 = vmatpush.msra.mxu0 %v40
  %831 = vmatpush.msra.mxu0 %v37
  %832 = vmatpush.msra.mxu0 %v34
  %833 = vmatpush.msra.mxu0 %v31
  %834 = vmatpush.msra.mxu0 %v28
  %835 = vmatmul.f32.gmra.mxu0 %v770
  %v836 = vpop.f32.mrf.mxu0
  %v837 = vadd.f32 0.0, %v836
  %838 = vdwg.mxu0
  %v839 = vadd.f32 %v776, %v797
  %v840 = vxor.u32 %v839, 2147483648
  %v841 = vmul.f32 %v840, 1.442695
  %v842 = vpow.pop %v841
  %v843 = vadd.f32 %v842, 1.0
  %v844 = vrcp.pop %v843
  %v845 = vmul.f32 %v843, %v844
  %v846 = vsub.f32 1.0, %v845
  %v847 = vmul.f32 %v844, %v846
  %v848 = vadd.f32 %v844, %v847
  %vm849 = vweird.f32 %v843
  %vm850 = vweird.f32 %v844
  %vm851 = vmor %vm849, %vm850
  %v852 = vsel %vm851, %v844, %v848
  %v853 = vand.u32 2147483647, %v843
  %vm854 = vcmp.eq.f32.partialorder %v853, 8.507059e+37
  %v855 = vand.u32 %v843, 2147483648
  %v856 = vor.u32 1.1754944e-38, %v855
  %v857 = vsel %vm854, %v856, %v852
  %v858 = vmul.f32 1.0, %v857
  %v859 = vadd.f32 %v777, %v817
  %v860 = vxor.u32 %v859, 2147483648
  %v861 = vmul.f32 %v860, 1.442695
  %v862 = vpow.pop %v861
  %v863 = vadd.f32 %v862, 1.0
  %v864 = vrcp.pop %v863
  %v865 = vmul.f32 %v863, %v864
  %v866 = vsub.f32 1.0, %v865
  %v867 = vmul.f32 %v864, %v866
  %v868 = vadd.f32 %v864, %v867
  %vm869 = vweird.f32 %v863
  %vm870 = vweird.f32 %v864
  %vm871 = vmor %vm869, %vm870
  %v872 = vsel %vm871, %v864, %v868
  %v873 = vand.u32 2147483647, %v863
  %vm874 = vcmp.eq.f32.partialorder %v873, 8.507059e+37
  %v875 = vand.u32 %v863, 2147483648
  %v876 = vor.u32 1.1754944e-38, %v875
  %v877 = vsel %vm874, %v876, %v872
  %v878 = vmul.f32 1.0, %v877
  %v879 = vadd.f32 %v837, %v182
  %v880 = vmul.f32 %v858, %v879
  %v881 = vadd.f32 %v778, %v880
  %v882 = vtanh.pop %v881
  %v883 = vsub.f32 1.0, %v878
  %v884 = vmul.f32 %v883, %v882
  %v885 = vmul.f32 %v878, %v770
  %v886 = vadd.f32 %v884, %v885
  %s887 = scalar_lea.vmem [#allocation2], 48
  %888 = vst [vmem:[%s887] sm:$0xff] %v886
  %s889 = smul.u32 7, 3
  %s890 = smul.addr %s889, 8
  %s891 = scalar_lea.vmem %s0, %s890
  %v892 = vld [vmem:[%s891] sm:$0xff]
  %v893 = vld [vmem:[%s891 + $0x8] sm:$0xff]
  %v894 = vld [vmem:[%s891 + $0x10] sm:$0xff]
  %895 = vmatpush.msra.mxu0 %v71
  %896 = vmatpush.msra.mxu0 %v68
  %897 = vmatpush.msra.mxu0 %v65
  %898 = vmatpush.msra.mxu0 %v62
  %899 = vmatpush.msra.mxu0 %v59
  %900 = vmatpush.msra.mxu0 %v56
  %901 = vmatpush.msra.mxu0 %v53
  %902 = vmatpush.msra.mxu0 %v50
  %903 = vmatpush.msra.mxu0 %v47
  %904 = vmatpush.msra.mxu0 %v44
  %905 = vmatpush.msra.mxu0 %v41
  %906 = vmatpush.msra.mxu0 %v38
  %907 = vmatpush.msra.mxu0 %v35
  %908 = vmatpush.msra.mxu0 %v32
  %909 = vmatpush.msra.mxu0 %v29
  %910 = vmatpush.msra.mxu0 %v26
  %911 = vmatmul.f32.gmra.mxu0 %v886
  %v912 = vpop.f32.mrf.mxu0
  %v913 = vadd.f32 0.0, %v912
  %914 = vdwg.mxu0
  %915 = vmatpush.msra.mxu0 %v72
  %916 = vmatpush.msra.mxu0 %v69
  %917 = vmatpush.msra.mxu0 %v66
  %918 = vmatpush.msra.mxu0 %v63
  %919 = vmatpush.msra.mxu0 %v60
  %920 = vmatpush.msra.mxu0 %v57
  %921 = vmatpush.msra.mxu0 %v54
  %922 = vmatpush.msra.mxu0 %v51
  %923 = vmatpush.msra.mxu0 %v48
  %924 = vmatpush.msra.mxu0 %v45
  %925 = vmatpush.msra.mxu0 %v42
  %926 = vmatpush.msra.mxu0 %v39
  %927 = vmatpush.msra.mxu0 %v36
  %928 = vmatpush.msra.mxu0 %v33
  %929 = vmatpush.msra.mxu0 %v30
  %930 = vmatpush.msra.mxu0 %v27
  %931 = vmatmul.f32.gmra.mxu0 %v886
  %v932 = vpop.f32.mrf.mxu0
  %v933 = vadd.f32 0.0, %v932
  %934 = vdwg.mxu0
  %935 = vmatpush.msra.mxu0 %v73
  %936 = vmatpush.msra.mxu0 %v70
  %937 = vmatpush.msra.mxu0 %v67
  %938 = vmatpush.msra.mxu0 %v64
  %939 = vmatpush.msra.mxu0 %v61
  %940 = vmatpush.msra.mxu0 %v58
  %941 = vmatpush.msra.mxu0 %v55
  %942 = vmatpush.msra.mxu0 %v52
  %943 = vmatpush.msra.mxu0 %v49
  %944 = vmatpush.msra.mxu0 %v46
  %945 = vmatpush.msra.mxu0 %v43
  %946 = vmatpush.msra.mxu0 %v40
  %947 = vmatpush.msra.mxu0 %v37
  %948 = vmatpush.msra.mxu0 %v34
  %949 = vmatpush.msra.mxu0 %v31
  %950 = vmatpush.msra.mxu0 %v28
  %951 = vmatmul.f32.gmra.mxu0 %v886
  %v952 = vpop.f32.mrf.mxu0
  %v953 = vadd.f32 0.0, %v952
  %954 = vdwg.mxu0
  %v955 = vadd.f32 %v892, %v913
  %v956 = vxor.u32 %v955, 2147483648
  %v957 = vmul.f32 %v956, 1.442695
  %v958 = vpow.pop %v957
  %v959 = vadd.f32 %v958, 1.0
  %v960 = vrcp.pop %v959
  %v961 = vmul.f32 %v959, %v960
  %v962 = vsub.f32 1.0, %v961
  %v963 = vmul.f32 %v960, %v962
  %v964 = vadd.f32 %v960, %v963
  %vm965 = vweird.f32 %v959
  %vm966 = vweird.f32 %v960
  %vm967 = vmor %vm965, %vm966
  %v968 = vsel %vm967, %v960, %v964
  %v969 = vand.u32 2147483647, %v959
  %vm970 = vcmp.eq.f32.partialorder %v969, 8.507059e+37
  %v971 = vand.u32 %v959, 2147483648
  %v972 = vor.u32 1.1754944e-38, %v971
  %v973 = vsel %vm970, %v972, %v968
  %v974 = vmul.f32 1.0, %v973
  %v975 = vadd.f32 %v893, %v933
  %v976 = vxor.u32 %v975, 2147483648
  %v977 = vmul.f32 %v976, 1.442695
  %v978 = vpow.pop %v977
  %v979 = vadd.f32 %v978, 1.0
  %v980 = vrcp.pop %v979
  %v981 = vmul.f32 %v979, %v980
  %v982 = vsub.f32 1.0, %v981
  %v983 = vmul.f32 %v980, %v982
  %v984 = vadd.f32 %v980, %v983
  %vm985 = vweird.f32 %v979
  %vm986 = vweird.f32 %v980
  %vm987 = vmor %vm985, %vm986
  %v988 = vsel %vm987, %v980, %v984
  %v989 = vand.u32 2147483647, %v979
  %vm990 = vcmp.eq.f32.partialorder %v989, 8.507059e+37
  %v991 = vand.u32 %v979, 2147483648
  %v992 = vor.u32 1.1754944e-38, %v991
  %v993 = vsel %vm990, %v992, %v988
  %v994 = vmul.f32 1.0, %v993
  %v995 = vadd.f32 %v953, %v182
  %v996 = vmul.f32 %v974, %v995
  %v997 = vadd.f32 %v894, %v996
  %v998 = vtanh.pop %v997
  %v999 = vsub.f32 1.0, %v994
  %v1000 = vmul.f32 %v999, %v998
  %v1001 = vmul.f32 %v994, %v886
  %v1002 = vadd.f32 %v1000, %v1001
  %s1003 = scalar_lea.vmem [#allocation2], 56
  %1004 = vst [vmem:[%s1003] sm:$0xff] %v1002
  %v1005 = vld [vmem:[#allocation2] sm:$0xff]
  %v1006 = vld [vmem:[#allocation2 + $0x8] sm:$0xff]
  %v1007 = vld [vmem:[#allocation2 + $0x10] sm:$0xff]
  %v1008 = vld [vmem:[#allocation2 + $0x18] sm:$0xff]
  %v1009 = vld [vmem:[#allocation2 + $0x20] sm:$0xff]
  %v1010 = vld [vmem:[#allocation2 + $0x28] sm:$0xff]
  %v1011 = vld [vmem:[#allocation2 + $0x30] sm:$0xff]
  %v1012 = vld [vmem:[#allocation2 + $0x38] sm:$0xff]
  %v1013 = vld [vmem:[%s3] sm:$0xff]
  %v1014 = vld [vmem:[%s3 + $0x8] sm:$0xff]
  %v1015 = vld [vmem:[%s3 + $0x10] sm:$0xff]
  %v1016 = vld [vmem:[%s3 + $0x18] sm:$0xff]
  %v1017 = vld [vmem:[%s3 + $0x20] sm:$0xff]
  %v1018 = vld [vmem:[%s3 + $0x28] sm:$0xff]
  %v1019 = vld [vmem:[%s3 + $0x30] sm:$0xff]
  %v1020 = vld [vmem:[%s3 + $0x38] sm:$0xff]
  %v1021 = vld [vmem:[%s3 + $0x40] sm:$0xff]
  %v1022 = vld [vmem:[%s3 + $0x48] sm:$0xff]
  %v1023 = vld [vmem:[%s3 + $0x50] sm:$0xff]
  %v1024 = vld [vmem:[%s3 + $0x58] sm:$0xff]
  %v1025 = vld [vmem:[%s3 + $0x60] sm:$0xff]
  %v1026 = vld [vmem:[%s3 + $0x68] sm:$0xff]
  %v1027 = vld [vmem:[%s3 + $0x70] sm:$0xff]
  %v1028 = vld [vmem:[%s3 + $0x78] sm:$0xff]
  %v1029 = vld [vmem:[%s3 + $0x80] sm:$0xff]
  %v1030 = vld [vmem:[%s3 + $0x88] sm:$0xff]
  %v1031 = vld [vmem:[%s3 + $0x90] sm:$0xff]
  %v1032 = vld [vmem:[%s3 + $0x98] sm:$0xff]
  %v1033 = vld [vmem:[%s3 + $0xa0] sm:$0xff]
  %v1034 = vld [vmem:[%s3 + $0xa8] sm:$0xff]
  %v1035 = vld [vmem:[%s3 + $0xb0] sm:$0xff]
  %v1036 = vld [vmem:[%s3 + $0xb8] sm:$0xff]
  %v1037 = vld [vmem:[%s3 + $0xc0] sm:$0xff]
  %v1038 = vld [vmem:[%s3 + $0xc8] sm:$0xff]
  %v1039 = vld [vmem:[%s3 + $0xd0] sm:$0xff]
  %v1040 = vld [vmem:[%s3 + $0xd8] sm:$0xff]
  %v1041 = vld [vmem:[%s3 + $0xe0] sm:$0xff]
  %v1042 = vld [vmem:[%s3 + $0xe8] sm:$0xff]
  %v1043 = vld [vmem:[%s3 + $0xf0] sm:$0xff]
  %v1044 = vld [vmem:[%s3 + $0xf8] sm:$0xff]
  %v1045 = vld [vmem:[%s3 + $0x100] sm:$0xff]
  %v1046 = vld [vmem:[%s3 + $0x108] sm:$0xff]
  %v1047 = vld [vmem:[%s3 + $0x110] sm:$0xff]
  %v1048 = vld [vmem:[%s3 + $0x118] sm:$0xff]
  %v1049 = vld [vmem:[%s3 + $0x120] sm:$0xff]
  %v1050 = vld [vmem:[%s3 + $0x128] sm:$0xff]
  %v1051 = vld [vmem:[%s3 + $0x130] sm:$0xff]
  %v1052 = vld [vmem:[%s3 + $0x138] sm:$0xff]
  %v1053 = vld [vmem:[%s3 + $0x140] sm:$0xff]
  %v1054 = vld [vmem:[%s3 + $0x148] sm:$0xff]
  %v1055 = vld [vmem:[%s3 + $0x150] sm:$0xff]
  %v1056 = vld [vmem:[%s3 + $0x158] sm:$0xff]
  %v1057 = vld [vmem:[%s3 + $0x160] sm:$0xff]
  %v1058 = vld [vmem:[%s3 + $0x168] sm:$0xff]
  %v1059 = vld [vmem:[%s3 + $0x170] sm:$0xff]
  %v1060 = vld [vmem:[%s3 + $0x178] sm:$0xff]
  %v1061 = vld [vmem:[%s4] sm:$0x7]
  %v1063 = vperm.slane %v1061, 0
  %v1064 = vperm.slane %v1061, 1
  %v1065 = vperm.slane %v1061, 2
  %1069 = vmatpush.msra.mxu0 %v1058
  %1070 = vmatpush.msra.mxu0 %v1055
  %1071 = vmatpush.msra.mxu0 %v1052
  %1072 = vmatpush.msra.mxu0 %v1049
  %1073 = vmatpush.msra.mxu0 %v1046
  %1074 = vmatpush.msra.mxu0 %v1043
  %1075 = vmatpush.msra.mxu0 %v1040
  %1076 = vmatpush.msra.mxu0 %v1037
  %1077 = vmatpush.msra.mxu0 %v1034
  %1078 = vmatpush.msra.mxu0 %v1031
  %1079 = vmatpush.msra.mxu0 %v1028
  %1080 = vmatpush.msra.mxu0 %v1025
  %1081 = vmatpush.msra.mxu0 %v1022
  %1082 = vmatpush.msra.mxu0 %v1019
  %1083 = vmatpush.msra.mxu0 %v1016
  %1084 = vmatpush.msra.mxu0 %v1013
  %1085 = vmatmul.f32.gmra.mxu0 %v1005
  %v1086 = vpop.f32.mrf.mxu0
  %v1087 = vadd.f32 %v1063, %v1086
  %1088 = vmatmul.f32.gmra.mxu0 %v1006
  %v1089 = vpop.f32.mrf.mxu0
  %v1090 = vadd.f32 %v1063, %v1089
  %1091 = vmatmul.f32.gmra.mxu0 %v1007
  %v1092 = vpop.f32.mrf.mxu0
  %v1093 = vadd.f32 %v1063, %v1092
  %1094 = vmatmul.f32.gmra.mxu0 %v1008
  %v1095 = vpop.f32.mrf.mxu0
  %v1096 = vadd.f32 %v1063, %v1095
  %1097 = vmatmul.f32.gmra.mxu0 %v1009
  %v1098 = vpop.f32.mrf.mxu0
  %v1099 = vadd.f32 %v1063, %v1098
  %1100 = vmatmul.f32.gmra.mxu0 %v1010
  %v1101 = vpop.f32.mrf.mxu0
  %v1102 = vadd.f32 %v1063, %v1101
  %1103 = vmatmul.f32.gmra.mxu0 %v1011
  %v1104 = vpop.f32.mrf.mxu0
  %v1105 = vadd.f32 %v1063, %v1104
  %1106 = vmatmul.f32.gmra.mxu0 %v1012
  %v1107 = vpop.f32.mrf.mxu0
  %v1108 = vadd.f32 %v1063, %v1107
  %1109 = vdwg.mxu0
  %1110 = vmatpush.msra.mxu0 %v1059
  %1111 = vmatpush.msra.mxu0 %v1056
  %1112 = vmatpush.msra.mxu0 %v1053
  %1113 = vmatpush.msra.mxu0 %v1050
  %1114 = vmatpush.msra.mxu0 %v1047
  %1115 = vmatpush.msra.mxu0 %v1044
  %1116 = vmatpush.msra.mxu0 %v1041
  %1117 = vmatpush.msra.mxu0 %v1038
  %1118 = vmatpush.msra.mxu0 %v1035
  %1119 = vmatpush.msra.mxu0 %v1032
  %1120 = vmatpush.msra.mxu0 %v1029
  %1121 = vmatpush.msra.mxu0 %v1026
  %1122 = vmatpush.msra.mxu0 %v1023
  %1123 = vmatpush.msra.mxu0 %v1020
  %1124 = vmatpush.msra.mxu0 %v1017
  %1125 = vmatpush.msra.mxu0 %v1014
  %1126 = vmatmul.f32.gmra.mxu0 %v1005
  %v1127 = vpop.f32.mrf.mxu0
  %v1128 = vadd.f32 %v1064, %v1127
  %1129 = vmatmul.f32.gmra.mxu0 %v1006
  %v1130 = vpop.f32.mrf.mxu0
  %v1131 = vadd.f32 %v1064, %v1130
  %1132 = vmatmul.f32.gmra.mxu0 %v1007
  %v1133 = vpop.f32.mrf.mxu0
  %v1134 = vadd.f32 %v1064, %v1133
  %1135 = vmatmul.f32.gmra.mxu0 %v1008
  %v1136 = vpop.f32.mrf.mxu0
  %v1137 = vadd.f32 %v1064, %v1136
  %1138 = vmatmul.f32.gmra.mxu0 %v1009
  %v1139 = vpop.f32.mrf.mxu0
  %v1140 = vadd.f32 %v1064, %v1139
  %1141 = vmatmul.f32.gmra.mxu0 %v1010
  %v1142 = vpop.f32.mrf.mxu0
  %v1143 = vadd.f32 %v1064, %v1142
  %1144 = vmatmul.f32.gmra.mxu0 %v1011
  %v1145 = vpop.f32.mrf.mxu0
  %v1146 = vadd.f32 %v1064, %v1145
  %1147 = vmatmul.f32.gmra.mxu0 %v1012
  %v1148 = vpop.f32.mrf.mxu0
  %v1149 = vadd.f32 %v1064, %v1148
  %1150 = vdwg.mxu0
  %1151 = vmatpush.msra.mxu0 %v1060
  %1152 = vmatpush.msra.mxu0 %v1057
  %1153 = vmatpush.msra.mxu0 %v1054
  %1154 = vmatpush.msra.mxu0 %v1051
  %1155 = vmatpush.msra.mxu0 %v1048
  %1156 = vmatpush.msra.mxu0 %v1045
  %1157 = vmatpush.msra.mxu0 %v1042
  %1158 = vmatpush.msra.mxu0 %v1039
  %1159 = vmatpush.msra.mxu0 %v1036
  %1160 = vmatpush.msra.mxu0 %v1033
  %1161 = vmatpush.msra.mxu0 %v1030
  %1162 = vmatpush.msra.mxu0 %v1027
  %1163 = vmatpush.msra.mxu0 %v1024
  %1164 = vmatpush.msra.mxu0 %v1021
  %1165 = vmatpush.msra.mxu0 %v1018
  %1166 = vmatpush.msra.mxu0 %v1015
  %1167 = vmatmul.f32.gmra.mxu0 %v1005
  %v1168 = vpop.f32.mrf.mxu0
  %v1169 = vadd.f32 %v1065, %v1168
  %1170 = vmatmul.f32.gmra.mxu0 %v1006
  %v1171 = vpop.f32.mrf.mxu0
  %v1172 = vadd.f32 %v1065, %v1171
  %1173 = vmatmul.f32.gmra.mxu0 %v1007
  %v1174 = vpop.f32.mrf.mxu0
  %v1175 = vadd.f32 %v1065, %v1174
  %1176 = vmatmul.f32.gmra.mxu0 %v1008
  %v1177 = vpop.f32.mrf.mxu0
  %v1178 = vadd.f32 %v1065, %v1177
  %1179 = vmatmul.f32.gmra.mxu0 %v1009
  %v1180 = vpop.f32.mrf.mxu0
  %v1181 = vadd.f32 %v1065, %v1180
  %1182 = vmatmul.f32.gmra.mxu0 %v1010
  %v1183 = vpop.f32.mrf.mxu0
  %v1184 = vadd.f32 %v1065, %v1183
  %1185 = vmatmul.f32.gmra.mxu0 %v1011
  %v1186 = vpop.f32.mrf.mxu0
  %v1187 = vadd.f32 %v1065, %v1186
  %1188 = vmatmul.f32.gmra.mxu0 %v1012
  %v1189 = vpop.f32.mrf.mxu0
  %v1190 = vadd.f32 %v1065, %v1189
  %1191 = vdwg.mxu0
  %1192 = vst [vmem:[#allocation3] sm:$0xff] %v1087
  %1193 = vst [vmem:[#allocation3 + $0x8] sm:$0xff] %v1128
  %1194 = vst [vmem:[#allocation3 + $0x10] sm:$0xff] %v1169
  %1195 = vst [vmem:[#allocation3 + $0x18] sm:$0xff] %v1090
  %1196 = vst [vmem:[#allocation3 + $0x20] sm:$0xff] %v1131
  %1197 = vst [vmem:[#allocation3 + $0x28] sm:$0xff] %v1172
  %1198 = vst [vmem:[#allocation3 + $0x30] sm:$0xff] %v1093
  %1199 = vst [vmem:[#allocation3 + $0x38] sm:$0xff] %v1134
  %1200 = vst [vmem:[#allocation3 + $0x40] sm:$0xff] %v1175
  %1201 = vst [vmem:[#allocation3 + $0x48] sm:$0xff] %v1096
  %1202 = vst [vmem:[#allocation3 + $0x50] sm:$0xff] %v1137
  %1203 = vst [vmem:[#allocation3 + $0x58] sm:$0xff] %v1178
  %1204 = vst [vmem:[#allocation3 + $0x60] sm:$0xff] %v1099
  %1205 = vst [vmem:[#allocation3 + $0x68] sm:$0xff] %v1140
  %1206 = vst [vmem:[#allocation3 + $0x70] sm:$0xff] %v1181
  %1207 = vst [vmem:[#allocation3 + $0x78] sm:$0xff] %v1102
  %1208 = vst [vmem:[#allocation3 + $0x80] sm:$0xff] %v1143
  %1209 = vst [vmem:[#allocation3 + $0x88] sm:$0xff] %v1184
  %1210 = vst [vmem:[#allocation3 + $0x90] sm:$0xff] %v1105
  %1211 = vst [vmem:[#allocation3 + $0x98] sm:$0xff] %v1146
  %1212 = vst [vmem:[#allocation3 + $0xa0] sm:$0xff] %v1187
  %1213 = vst [vmem:[#allocation3 + $0xa8] sm:$0xff] %v1108
  %1214 = vst [vmem:[#allocation3 + $0xb0] sm:$0xff] %v1149
  %1215 = vst [vmem:[#allocation3 + $0xb8] sm:$0xff] %v1190
  %v1216 = vld [vmem:[%s5] sm:$0xff]
  %v1217 = vld [vmem:[%s5 + $0x8] sm:$0xff]
  %v1218 = vld [vmem:[%s5 + $0x10] sm:$0xff]
  %v1219 = vld [vmem:[%s5 + $0x18] sm:$0xff]
  %v1220 = vld [vmem:[%s5 + $0x20] sm:$0xff]
  %v1221 = vld [vmem:[%s5 + $0x28] sm:$0xff]
  %v1222 = vld [vmem:[%s5 + $0x30] sm:$0xff]
  %v1223 = vld [vmem:[%s5 + $0x38] sm:$0xff]
  %v1224 = vld [vmem:[%s5 + $0x40] sm:$0xff]
  %v1225 = vld [vmem:[%s5 + $0x48] sm:$0xff]
  %v1226 = vld [vmem:[%s5 + $0x50] sm:$0xff]
  %v1227 = vld [vmem:[%s5 + $0x58] sm:$0xff]
  %v1228 = vld [vmem:[%s5 + $0x60] sm:$0xff]
  %v1229 = vld [vmem:[%s5 + $0x68] sm:$0xff]
  %v1230 = vld [vmem:[%s5 + $0x70] sm:$0xff]
  %v1231 = vld [vmem:[%s5 + $0x78] sm:$0xff]
  %v1232 = vld [vmem:[%s5 + $0x80] sm:$0xff]
  %v1233 = vld [vmem:[%s5 + $0x88] sm:$0xff]
  %v1234 = vld [vmem:[%s5 + $0x90] sm:$0xff]
  %v1235 = vld [vmem:[%s5 + $0x98] sm:$0xff]
  %v1236 = vld [vmem:[%s5 + $0xa0] sm:$0xff]
  %v1237 = vld [vmem:[%s5 + $0xa8] sm:$0xff]
  %v1238 = vld [vmem:[%s5 + $0xb0] sm:$0xff]
  %v1239 = vld [vmem:[%s5 + $0xb8] sm:$0xff]
  %v1240 = vld [vmem:[%s5 + $0xc0] sm:$0xff]
  %v1241 = vld [vmem:[%s5 + $0xc8] sm:$0xff]
  %v1242 = vld [vmem:[%s5 + $0xd0] sm:$0xff]
  %v1243 = vld [vmem:[%s5 + $0xd8] sm:$0xff]
  %v1244 = vld [vmem:[%s5 + $0xe0] sm:$0xff]
  %v1245 = vld [vmem:[%s5 + $0xe8] sm:$0xff]
  %v1246 = vld [vmem:[%s5 + $0xf0] sm:$0xff]
  %v1247 = vld [vmem:[%s5 + $0xf8] sm:$0xff]
  %v1248 = vld [vmem:[%s5 + $0x100] sm:$0xff]
  %v1249 = vld [vmem:[%s5 + $0x108] sm:$0xff]
  %v1250 = vld [vmem:[%s5 + $0x110] sm:$0xff]
  %v1251 = vld [vmem:[%s5 + $0x118] sm:$0xff]
  %v1252 = vld [vmem:[%s5 + $0x120] sm:$0xff]
  %v1253 = vld [vmem:[%s5 + $0x128] sm:$0xff]
  %v1254 = vld [vmem:[%s5 + $0x130] sm:$0xff]
  %v1255 = vld [vmem:[%s5 + $0x138] sm:$0xff]
  %v1256 = vld [vmem:[%s5 + $0x140] sm:$0xff]
  %v1257 = vld [vmem:[%s5 + $0x148] sm:$0xff]
  %v1258 = vld [vmem:[%s5 + $0x150] sm:$0xff]
  %v1259 = vld [vmem:[%s5 + $0x158] sm:$0xff]
  %v1260 = vld [vmem:[%s5 + $0x160] sm:$0xff]
  %v1261 = vld [vmem:[%s5 + $0x168] sm:$0xff]
  %v1262 = vld [vmem:[%s5 + $0x170] sm:$0xff]
  %v1263 = vld [vmem:[%s5 + $0x178] sm:$0xff]
  %v1264 = vld [vmem:[%s6] sm:$0x1]
  %s1265 = smul.addr %s75, 8
  %s1266 = scalar_lea.vmem [#allocation3], %s1265
  %v1267 = vld [vmem:[%s1266] sm:$0xff]
  %v1268 = vld [vmem:[%s1266 + $0x8] sm:$0xff]
  %v1269 = vld [vmem:[%s1266 + $0x10] sm:$0xff]
  %1270 = vmatpush.msra.mxu0 %v1261
  %1271 = vmatpush.msra.mxu0 %v1258
  %1272 = vmatpush.msra.mxu0 %v1255
  %1273 = vmatpush.msra.mxu0 %v1252
  %1274 = vmatpush.msra.mxu0 %v1249
  %1275 = vmatpush.msra.mxu0 %v1246
  %1276 = vmatpush.msra.mxu0 %v1243
  %1277 = vmatpush.msra.mxu0 %v1240
  %1278 = vmatpush.msra.mxu0 %v1237
  %1279 = vmatpush.msra.mxu0 %v1234
  %1280 = vmatpush.msra.mxu0 %v1231
  %1281 = vmatpush.msra.mxu0 %v1228
  %1282 = vmatpush.msra.mxu0 %v1225
  %1283 = vmatpush.msra.mxu0 %v1222
  %1284 = vmatpush.msra.mxu0 %v1219
  %1285 = vmatpush.msra.mxu0 %v1216
  %1286 = vmatmul.f32.gmra.mxu0 0.0
  %v1287 = vpop.f32.mrf.mxu0
  %v1288 = vadd.f32 0.0, %v1287
  %1289 = vdwg.mxu0
  %1290 = vmatpush.msra.mxu0 %v1262
  %1291 = vmatpush.msra.mxu0 %v1259
  %1292 = vmatpush.msra.mxu0 %v1256
  %1293 = vmatpush.msra.mxu0 %v1253
  %1294 = vmatpush.msra.mxu0 %v1250
  %1295 = vmatpush.msra.mxu0 %v1247
  %1296 = vmatpush.msra.mxu0 %v1244
  %1297 = vmatpush.msra.mxu0 %v1241
  %1298 = vmatpush.msra.mxu0 %v1238
  %1299 = vmatpush.msra.mxu0 %v1235
  %1300 = vmatpush.msra.mxu0 %v1232
  %1301 = vmatpush.msra.mxu0 %v1229
  %1302 = vmatpush.msra.mxu0 %v1226
  %1303 = vmatpush.msra.mxu0 %v1223
  %1304 = vmatpush.msra.mxu0 %v1220
  %1305 = vmatpush.msra.mxu0 %v1217
  %1306 = vmatmul.f32.gmra.mxu0 0.0
  %v1307 = vpop.f32.mrf.mxu0
  %v1308 = vadd.f32 0.0, %v1307
  %1309 = vdwg.mxu0
  %1310 = vmatpush.msra.mxu0 %v1263
  %1311 = vmatpush.msra.mxu0 %v1260
  %1312 = vmatpush.msra.mxu0 %v1257
  %1313 = vmatpush.msra.mxu0 %v1254
  %1314 = vmatpush.msra.mxu0 %v1251
  %1315 = vmatpush.msra.mxu0 %v1248
  %1316 = vmatpush.msra.mxu0 %v1245
  %1317 = vmatpush.msra.mxu0 %v1242
  %1318 = vmatpush.msra.mxu0 %v1239
  %1319 = vmatpush.msra.mxu0 %v1236
  %1320 = vmatpush.msra.mxu0 %v1233
  %1321 = vmatpush.msra.mxu0 %v1230
  %1322 = vmatpush.msra.mxu0 %v1227
  %1323 = vmatpush.msra.mxu0 %v1224
  %1324 = vmatpush.msra.mxu0 %v1221
  %1325 = vmatpush.msra.mxu0 %v1218
  %1326 = vmatmul.f32.gmra.mxu0 0.0
  %v1327 = vpop.f32.mrf.mxu0
  %v1328 = vadd.f32 0.0, %v1327
  %1329 = vdwg.mxu0
  %v1330 = vadd.f32 %v1267, %v1288
  %v1331 = vxor.u32 %v1330, 2147483648
  %v1332 = vmul.f32 %v1331, 1.442695
  %v1333 = vpow.pop %v1332
  %v1334 = vadd.f32 %v1333, 1.0
  %v1335 = vrcp.pop %v1334
  %v1336 = vmul.f32 %v1334, %v1335
  %v1337 = vsub.f32 1.0, %v1336
  %v1338 = vmul.f32 %v1335, %v1337
  %v1339 = vadd.f32 %v1335, %v1338
  %vm1340 = vweird.f32 %v1334
  %vm1341 = vweird.f32 %v1335
  %vm1342 = vmor %vm1340, %vm1341
  %v1343 = vsel %vm1342, %v1335, %v1339
  %v1344 = vand.u32 2147483647, %v1334
  %vm1345 = vcmp.eq.f32.partialorder %v1344, 8.507059e+37
  %v1346 = vand.u32 %v1334, 2147483648
  %v1347 = vor.u32 1.1754944e-38, %v1346
  %v1348 = vsel %vm1345, %v1347, %v1343
  %v1349 = vmul.f32 1.0, %v1348
  %v1350 = vadd.f32 %v1268, %v1308
  %v1351 = vxor.u32 %v1350, 2147483648
  %v1352 = vmul.f32 %v1351, 1.442695
  %v1353 = vpow.pop %v1352
  %v1354 = vadd.f32 %v1353, 1.0
  %v1355 = vrcp.pop %v1354
  %v1356 = vmul.f32 %v1354, %v1355
  %v1357 = vsub.f32 1.0, %v1356
  %v1358 = vmul.f32 %v1355, %v1357
  %v1359 = vadd.f32 %v1355, %v1358
  %vm1360 = vweird.f32 %v1354
  %vm1361 = vweird.f32 %v1355
  %vm1362 = vmor %vm1360, %vm1361
  %v1363 = vsel %vm1362, %v1355, %v1359
  %v1364 = vand.u32 2147483647, %v1354
  %vm1365 = vcmp.eq.f32.partialorder %v1364, 8.507059e+37
  %v1366 = vand.u32 %v1354, 2147483648
  %v1367 = vor.u32 1.1754944e-38, %v1366
  %v1368 = vsel %vm1365, %v1367, %v1363
  %v1369 = vmul.f32 1.0, %v1368
  %v1371 = vperm.slane %v1264, 0
  %v1373 = vadd.f32 %v1328, %v1371
  %v1374 = vmul.f32 %v1349, %v1373
  %v1375 = vadd.f32 %v1269, %v1374
  %v1376 = vtanh.pop %v1375
  %v1377 = vsub.f32 1.0, %v1369
  %v1378 = vmul.f32 %v1377, %v1376
  %v1379 = vmul.f32 %v1369, 0.0
  %v1380 = vadd.f32 %v1378, %v1379
  %s1381 = smul.addr %s193, 8
  %s1382 = scalar_lea.vmem [#allocation3], %s1381
  %v1383 = vld [vmem:[%s1382] sm:$0xff]
  %v1384 = vld [vmem:[%s1382 + $0x8] sm:$0xff]
  %v1385 = vld [vmem:[%s1382 + $0x10] sm:$0xff]
  %1386 = vmatpush.msra.mxu0 %v1261
  %1387 = vmatpush.msra.mxu0 %v1258
  %1388 = vmatpush.msra.mxu0 %v1255
  %1389 = vmatpush.msra.mxu0 %v1252
  %1390 = vmatpush.msra.mxu0 %v1249
  %1391 = vmatpush.msra.mxu0 %v1246
  %1392 = vmatpush.msra.mxu0 %v1243
  %1393 = vmatpush.msra.mxu0 %v1240
  %1394 = vmatpush.msra.mxu0 %v1237
  %1395 = vmatpush.msra.mxu0 %v1234
  %1396 = vmatpush.msra.mxu0 %v1231
  %1397 = vmatpush.msra.mxu0 %v1228
  %1398 = vmatpush.msra.mxu0 %v1225
  %1399 = vmatpush.msra.mxu0 %v1222
  %1400 = vmatpush.msra.mxu0 %v1219
  %1401 = vmatpush.msra.mxu0 %v1216
  %1402 = vmatmul.f32.gmra.mxu0 %v1380
  %v1403 = vpop.f32.mrf.mxu0
  %v1404 = vadd.f32 0.0, %v1403
  %1405 = vdwg.mxu0
  %1406 = vmatpush.msra.mxu0 %v1262
  %1407 = vmatpush.msra.mxu0 %v1259
  %1408 = vmatpush.msra.mxu0 %v1256
  %1409 = vmatpush.msra.mxu0 %v1253
  %1410 = vmatpush.msra.mxu0 %v1250
  %1411 = vmatpush.msra.mxu0 %v1247
  %1412 = vmatpush.msra.mxu0 %v1244
  %1413 = vmatpush.msra.mxu0 %v1241
  %1414 = vmatpush.msra.mxu0 %v1238
  %1415 = vmatpush.msra.mxu0 %v1235
  %1416 = vmatpush.msra.mxu0 %v1232
  %1417 = vmatpush.msra.mxu0 %v1229
  %1418 = vmatpush.msra.mxu0 %v1226
  %1419 = vmatpush.msra.mxu0 %v1223
  %1420 = vmatpush.msra.mxu0 %v1220
  %1421 = vmatpush.msra.mxu0 %v1217
  %1422 = vmatmul.f32.gmra.mxu0 %v1380
  %v1423 = vpop.f32.mrf.mxu0
  %v1424 = vadd.f32 0.0, %v1423
  %1425 = vdwg.mxu0
  %1426 = vmatpush.msra.mxu0 %v1263
  %1427 = vmatpush.msra.mxu0 %v1260
  %1428 = vmatpush.msra.mxu0 %v1257
  %1429 = vmatpush.msra.mxu0 %v1254
  %1430 = vmatpush.msra.mxu0 %v1251
  %1431 = vmatpush.msra.mxu0 %v1248
  %1432 = vmatpush.msra.mxu0 %v1245
  %1433 = vmatpush.msra.mxu0 %v1242
  %1434 = vmatpush.msra.mxu0 %v1239
  %1435 = vmatpush.msra.mxu0 %v1236
  %1436 = vmatpush.msra.mxu0 %v1233
  %1437 = vmatpush.msra.mxu0 %v1230
  %1438 = vmatpush.msra.mxu0 %v1227
  %1439 = vmatpush.msra.mxu0 %v1224
  %1440 = vmatpush.msra.mxu0 %v1221
  %1441 = vmatpush.msra.mxu0 %v1218
  %1442 = vmatmul.f32.gmra.mxu0 %v1380
  %v1443 = vpop.f32.mrf.mxu0
  %v1444 = vadd.f32 0.0, %v1443
  %1445 = vdwg.mxu0
  %v1446 = vadd.f32 %v1383, %v1404
  %v1447 = vxor.u32 %v1446, 2147483648
  %v1448 = vmul.f32 %v1447, 1.442695
  %v1449 = vpow.pop %v1448
  %v1450 = vadd.f32 %v1449, 1.0
  %v1451 = vrcp.pop %v1450
  %v1452 = vmul.f32 %v1450, %v1451
  %v1453 = vsub.f32 1.0, %v1452
  %v1454 = vmul.f32 %v1451, %v1453
  %v1455 = vadd.f32 %v1451, %v1454
  %vm1456 = vweird.f32 %v1450
  %vm1457 = vweird.f32 %v1451
  %vm1458 = vmor %vm1456, %vm1457
  %v1459 = vsel %vm1458, %v1451, %v1455
  %v1460 = vand.u32 2147483647, %v1450
  %vm1461 = vcmp.eq.f32.partialorder %v1460, 8.507059e+37
  %v1462 = vand.u32 %v1450, 2147483648
  %v1463 = vor.u32 1.1754944e-38, %v1462
  %v1464 = vsel %vm1461, %v1463, %v1459
  %v1465 = vmul.f32 1.0, %v1464
  %v1466 = vadd.f32 %v1384, %v1424
  %v1467 = vxor.u32 %v1466, 2147483648
  %v1468 = vmul.f32 %v1467, 1.442695
  %v1469 = vpow.pop %v1468
  %v1470 = vadd.f32 %v1469, 1.0
  %v1471 = vrcp.pop %v1470
  %v1472 = vmul.f32 %v1470, %v1471
  %v1473 = vsub.f32 1.0, %v1472
  %v1474 = vmul.f32 %v1471, %v1473
  %v1475 = vadd.f32 %v1471, %v1474
  %vm1476 = vweird.f32 %v1470
  %vm1477 = vweird.f32 %v1471
  %vm1478 = vmor %vm1476, %vm1477
  %v1479 = vsel %vm1478, %v1471, %v1475
  %v1480 = vand.u32 2147483647, %v1470
  %vm1481 = vcmp.eq.f32.partialorder %v1480, 8.507059e+37
  %v1482 = vand.u32 %v1470, 2147483648
  %v1483 = vor.u32 1.1754944e-38, %v1482
  %v1484 = vsel %vm1481, %v1483, %v1479
  %v1485 = vmul.f32 1.0, %v1484
  %v1486 = vadd.f32 %v1444, %v1371
  %v1487 = vmul.f32 %v1465, %v1486
  %v1488 = vadd.f32 %v1385, %v1487
  %v1489 = vtanh.pop %v1488
  %v1490 = vsub.f32 1.0, %v1485
  %v1491 = vmul.f32 %v1490, %v1489
  %v1492 = vmul.f32 %v1485, %v1380
  %v1493 = vadd.f32 %v1491, %v1492
  %s1494 = smul.addr %s309, 8
  %s1495 = scalar_lea.vmem [#allocation3], %s1494
  %v1496 = vld [vmem:[%s1495] sm:$0xff]
  %v1497 = vld [vmem:[%s1495 + $0x8] sm:$0xff]
  %v1498 = vld [vmem:[%s1495 + $0x10] sm:$0xff]
  %1499 = vmatpush.msra.mxu0 %v1261
  %1500 = vmatpush.msra.mxu0 %v1258
  %1501 = vmatpush.msra.mxu0 %v1255
  %1502 = vmatpush.msra.mxu0 %v1252
  %1503 = vmatpush.msra.mxu0 %v1249
  %1504 = vmatpush.msra.mxu0 %v1246
  %1505 = vmatpush.msra.mxu0 %v1243
  %1506 = vmatpush.msra.mxu0 %v1240
  %1507 = vmatpush.msra.mxu0 %v1237
  %1508 = vmatpush.msra.mxu0 %v1234
  %1509 = vmatpush.msra.mxu0 %v1231
  %1510 = vmatpush.msra.mxu0 %v1228
  %1511 = vmatpush.msra.mxu0 %v1225
  %1512 = vmatpush.msra.mxu0 %v1222
  %1513 = vmatpush.msra.mxu0 %v1219
  %1514 = vmatpush.msra.mxu0 %v1216
  %1515 = vmatmul.f32.gmra.mxu0 %v1493
  %v1516 = vpop.f32.mrf.mxu0
  %v1517 = vadd.f32 0.0, %v1516
  %1518 = vdwg.mxu0
  %1519 = vmatpush.msra.mxu0 %v1262
  %1520 = vmatpush.msra.mxu0 %v1259
  %1521 = vmatpush.msra.mxu0 %v1256
  %1522 = vmatpush.msra.mxu0 %v1253
  %1523 = vmatpush.msra.mxu0 %v1250
  %1524 = vmatpush.msra.mxu0 %v1247
  %1525 = vmatpush.msra.mxu0 %v1244
  %1526 = vmatpush.msra.mxu0 %v1241
  %1527 = vmatpush.msra.mxu0 %v1238
  %1528 = vmatpush.msra.mxu0 %v1235
  %1529 = vmatpush.msra.mxu0 %v1232
  %1530 = vmatpush.msra.mxu0 %v1229
  %1531 = vmatpush.msra.mxu0 %v1226
  %1532 = vmatpush.msra.mxu0 %v1223
  %1533 = vmatpush.msra.mxu0 %v1220
  %1534 = vmatpush.msra.mxu0 %v1217
  %1535 = vmatmul.f32.gmra.mxu0 %v1493
  %v1536 = vpop.f32.mrf.mxu0
  %v1537 = vadd.f32 0.0, %v1536
  %1538 = vdwg.mxu0
  %1539 = vmatpush.msra.mxu0 %v1263
  %1540 = vmatpush.msra.mxu0 %v1260
  %1541 = vmatpush.msra.mxu0 %v1257
  %1542 = vmatpush.msra.mxu0 %v1254
  %1543 = vmatpush.msra.mxu0 %v1251
  %1544 = vmatpush.msra.mxu0 %v1248
  %1545 = vmatpush.msra.mxu0 %v1245
  %1546 = vmatpush.msra.mxu0 %v1242
  %1547 = vmatpush.msra.mxu0 %v1239
  %1548 = vmatpush.msra.mxu0 %v1236
  %1549 = vmatpush.msra.mxu0 %v1233
  %1550 = vmatpush.msra.mxu0 %v1230
  %1551 = vmatpush.msra.mxu0 %v1227
  %1552 = vmatpush.msra.mxu0 %v1224
  %1553 = vmatpush.msra.mxu0 %v1221
  %1554 = vmatpush.msra.mxu0 %v1218
  %1555 = vmatmul.f32.gmra.mxu0 %v1493
  %v1556 = vpop.f32.mrf.mxu0
  %v1557 = vadd.f32 0.0, %v1556
  %1558 = vdwg.mxu0
  %v1559 = vadd.f32 %v1496, %v1517
  %v1560 = vxor.u32 %v1559, 2147483648
  %v1561 = vmul.f32 %v1560, 1.442695
  %v1562 = vpow.pop %v1561
  %v1563 = vadd.f32 %v1562, 1.0
  %v1564 = vrcp.pop %v1563
  %v1565 = vmul.f32 %v1563, %v1564
  %v1566 = vsub.f32 1.0, %v1565
  %v1567 = vmul.f32 %v1564, %v1566
  %v1568 = vadd.f32 %v1564, %v1567
  %vm1569 = vweird.f32 %v1563
  %vm1570 = vweird.f32 %v1564
  %vm1571 = vmor %vm1569, %vm1570
  %v1572 = vsel %vm1571, %v1564, %v1568
  %v1573 = vand.u32 2147483647, %v1563
  %vm1574 = vcmp.eq.f32.partialorder %v1573, 8.507059e+37
  %v1575 = vand.u32 %v1563, 2147483648
  %v1576 = vor.u32 1.1754944e-38, %v1575
  %v1577 = vsel %vm1574, %v1576, %v1572
  %v1578 = vmul.f32 1.0, %v1577
  %v1579 = vadd.f32 %v1497, %v1537
  %v1580 = vxor.u32 %v1579, 2147483648
  %v1581 = vmul.f32 %v1580, 1.442695
  %v1582 = vpow.pop %v1581
  %v1583 = vadd.f32 %v1582, 1.0
  %v1584 = vrcp.pop %v1583
  %v1585 = vmul.f32 %v1583, %v1584
  %v1586 = vsub.f32 1.0, %v1585
  %v1587 = vmul.f32 %v1584, %v1586
  %v1588 = vadd.f32 %v1584, %v1587
  %vm1589 = vweird.f32 %v1583
  %vm1590 = vweird.f32 %v1584
  %vm1591 = vmor %vm1589, %vm1590
  %v1592 = vsel %vm1591, %v1584, %v1588
  %v1593 = vand.u32 2147483647, %v1583
  %vm1594 = vcmp.eq.f32.partialorder %v1593, 8.507059e+37
  %v1595 = vand.u32 %v1583, 2147483648
  %v1596 = vor.u32 1.1754944e-38, %v1595
  %v1597 = vsel %vm1594, %v1596, %v1592
  %v1598 = vmul.f32 1.0, %v1597
  %v1599 = vadd.f32 %v1557, %v1371
  %v1600 = vmul.f32 %v1578, %v1599
  %v1601 = vadd.f32 %v1498, %v1600
  %v1602 = vtanh.pop %v1601
  %v1603 = vsub.f32 1.0, %v1598
  %v1604 = vmul.f32 %v1603, %v1602
  %v1605 = vmul.f32 %v1598, %v1493
  %v1606 = vadd.f32 %v1604, %v1605
  %s1607 = smul.addr %s425, 8
  %s1608 = scalar_lea.vmem [#allocation3], %s1607
  %v1609 = vld [vmem:[%s1608] sm:$0xff]
  %v1610 = vld [vmem:[%s1608 + $0x8] sm:$0xff]
  %v1611 = vld [vmem:[%s1608 + $0x10] sm:$0xff]
  %1612 = vmatpush.msra.mxu0 %v1261
  %1613 = vmatpush.msra.mxu0 %v1258
  %1614 = vmatpush.msra.mxu0 %v1255
  %1615 = vmatpush.msra.mxu0 %v1252
  %1616 = vmatpush.msra.mxu0 %v1249
  %1617 = vmatpush.msra.mxu0 %v1246
  %1618 = vmatpush.msra.mxu0 %v1243
  %1619 = vmatpush.msra.mxu0 %v1240
  %1620 = vmatpush.msra.mxu0 %v1237
  %1621 = vmatpush.msra.mxu0 %v1234
  %1622 = vmatpush.msra.mxu0 %v1231
  %1623 = vmatpush.msra.mxu0 %v1228
  %1624 = vmatpush.msra.mxu0 %v1225
  %1625 = vmatpush.msra.mxu0 %v1222
  %1626 = vmatpush.msra.mxu0 %v1219
  %1627 = vmatpush.msra.mxu0 %v1216
  %1628 = vmatmul.f32.gmra.mxu0 %v1606
  %v1629 = vpop.f32.mrf.mxu0
  %v1630 = vadd.f32 0.0, %v1629
  %1631 = vdwg.mxu0
  %1632 = vmatpush.msra.mxu0 %v1262
  %1633 = vmatpush.msra.mxu0 %v1259
  %1634 = vmatpush.msra.mxu0 %v1256
  %1635 = vmatpush.msra.mxu0 %v1253
  %1636 = vmatpush.msra.mxu0 %v1250
  %1637 = vmatpush.msra.mxu0 %v1247
  %1638 = vmatpush.msra.mxu0 %v1244
  %1639 = vmatpush.msra.mxu0 %v1241
  %1640 = vmatpush.msra.mxu0 %v1238
  %1641 = vmatpush.msra.mxu0 %v1235
  %1642 = vmatpush.msra.mxu0 %v1232
  %1643 = vmatpush.msra.mxu0 %v1229
  %1644 = vmatpush.msra.mxu0 %v1226
  %1645 = vmatpush.msra.mxu0 %v1223
  %1646 = vmatpush.msra.mxu0 %v1220
  %1647 = vmatpush.msra.mxu0 %v1217
  %1648 = vmatmul.f32.gmra.mxu0 %v1606
  %v1649 = vpop.f32.mrf.mxu0
  %v1650 = vadd.f32 0.0, %v1649
  %1651 = vdwg.mxu0
  %1652 = vmatpush.msra.mxu0 %v1263
  %1653 = vmatpush.msra.mxu0 %v1260
  %1654 = vmatpush.msra.mxu0 %v1257
  %1655 = vmatpush.msra.mxu0 %v1254
  %1656 = vmatpush.msra.mxu0 %v1251
  %1657 = vmatpush.msra.mxu0 %v1248
  %1658 = vmatpush.msra.mxu0 %v1245
  %1659 = vmatpush.msra.mxu0 %v1242
  %1660 = vmatpush.msra.mxu0 %v1239
  %1661 = vmatpush.msra.mxu0 %v1236
  %1662 = vmatpush.msra.mxu0 %v1233
  %1663 = vmatpush.msra.mxu0 %v1230
  %1664 = vmatpush.msra.mxu0 %v1227
  %1665 = vmatpush.msra.mxu0 %v1224
  %1666 = vmatpush.msra.mxu0 %v1221
  %1667 = vmatpush.msra.mxu0 %v1218
  %1668 = vmatmul.f32.gmra.mxu0 %v1606
  %v1669 = vpop.f32.mrf.mxu0
  %v1670 = vadd.f32 0.0, %v1669
  %1671 = vdwg.mxu0
  %v1672 = vadd.f32 %v1609, %v1630
  %v1673 = vxor.u32 %v1672, 2147483648
  %v1674 = vmul.f32 %v1673, 1.442695
  %v1675 = vpow.pop %v1674
  %v1676 = vadd.f32 %v1675, 1.0
  %v1677 = vrcp.pop %v1676
  %v1678 = vmul.f32 %v1676, %v1677
  %v1679 = vsub.f32 1.0, %v1678
  %v1680 = vmul.f32 %v1677, %v1679
  %v1681 = vadd.f32 %v1677, %v1680
  %vm1682 = vweird.f32 %v1676
  %vm1683 = vweird.f32 %v1677
  %vm1684 = vmor %vm1682, %vm1683
  %v1685 = vsel %vm1684, %v1677, %v1681
  %v1686 = vand.u32 2147483647, %v1676
  %vm1687 = vcmp.eq.f32.partialorder %v1686, 8.507059e+37
  %v1688 = vand.u32 %v1676, 2147483648
  %v1689 = vor.u32 1.1754944e-38, %v1688
  %v1690 = vsel %vm1687, %v1689, %v1685
  %v1691 = vmul.f32 1.0, %v1690
  %v1692 = vadd.f32 %v1610, %v1650
  %v1693 = vxor.u32 %v1692, 2147483648
  %v1694 = vmul.f32 %v1693, 1.442695
  %v1695 = vpow.pop %v1694
  %v1696 = vadd.f32 %v1695, 1.0
  %v1697 = vrcp.pop %v1696
  %v1698 = vmul.f32 %v1696, %v1697
  %v1699 = vsub.f32 1.0, %v1698
  %v1700 = vmul.f32 %v1697, %v1699
  %v1701 = vadd.f32 %v1697, %v1700
  %vm1702 = vweird.f32 %v1696
  %vm1703 = vweird.f32 %v1697
  %vm1704 = vmor %vm1702, %vm1703
  %v1705 = vsel %vm1704, %v1697, %v1701
  %v1706 = vand.u32 2147483647, %v1696
  %vm1707 = vcmp.eq.f32.partialorder %v1706, 8.507059e+37
  %v1708 = vand.u32 %v1696, 2147483648
  %v1709 = vor.u32 1.1754944e-38, %v1708
  %v1710 = vsel %vm1707, %v1709, %v1705
  %v1711 = vmul.f32 1.0, %v1710
  %v1712 = vadd.f32 %v1670, %v1371
  %v1713 = vmul.f32 %v1691, %v1712
  %v1714 = vadd.f32 %v1611, %v1713
  %v1715 = vtanh.pop %v1714
  %v1716 = vsub.f32 1.0, %v1711
  %v1717 = vmul.f32 %v1716, %v1715
  %v1718 = vmul.f32 %v1711, %v1606
  %v1719 = vadd.f32 %v1717, %v1718
  %s1720 = smul.addr %s541, 8
  %s1721 = scalar_lea.vmem [#allocation3], %s1720
  %v1722 = vld [vmem:[%s1721] sm:$0xff]
  %v1723 = vld [vmem:[%s1721 + $0x8] sm:$0xff]
  %v1724 = vld [vmem:[%s1721 + $0x10] sm:$0xff]
  %1725 = vmatpush.msra.mxu0 %v1261
  %1726 = vmatpush.msra.mxu0 %v1258
  %1727 = vmatpush.msra.mxu0 %v1255
  %1728 = vmatpush.msra.mxu0 %v1252
  %1729 = vmatpush.msra.mxu0 %v1249
  %1730 = vmatpush.msra.mxu0 %v1246
  %1731 = vmatpush.msra.mxu0 %v1243
  %1732 = vmatpush.msra.mxu0 %v1240
  %1733 = vmatpush.msra.mxu0 %v1237
  %1734 = vmatpush.msra.mxu0 %v1234
  %1735 = vmatpush.msra.mxu0 %v1231
  %1736 = vmatpush.msra.mxu0 %v1228
  %1737 = vmatpush.msra.mxu0 %v1225
  %1738 = vmatpush.msra.mxu0 %v1222
  %1739 = vmatpush.msra.mxu0 %v1219
  %1740 = vmatpush.msra.mxu0 %v1216
  %1741 = vmatmul.f32.gmra.mxu0 %v1719
  %v1742 = vpop.f32.mrf.mxu0
  %v1743 = vadd.f32 0.0, %v1742
  %1744 = vdwg.mxu0
  %1745 = vmatpush.msra.mxu0 %v1262
  %1746 = vmatpush.msra.mxu0 %v1259
  %1747 = vmatpush.msra.mxu0 %v1256
  %1748 = vmatpush.msra.mxu0 %v1253
  %1749 = vmatpush.msra.mxu0 %v1250
  %1750 = vmatpush.msra.mxu0 %v1247
  %1751 = vmatpush.msra.mxu0 %v1244
  %1752 = vmatpush.msra.mxu0 %v1241
  %1753 = vmatpush.msra.mxu0 %v1238
  %1754 = vmatpush.msra.mxu0 %v1235
  %1755 = vmatpush.msra.mxu0 %v1232
  %1756 = vmatpush.msra.mxu0 %v1229
  %1757 = vmatpush.msra.mxu0 %v1226
  %1758 = vmatpush.msra.mxu0 %v1223
  %1759 = vmatpush.msra.mxu0 %v1220
  %1760 = vmatpush.msra.mxu0 %v1217
  %1761 = vmatmul.f32.gmra.mxu0 %v1719
  %v1762 = vpop.f32.mrf.mxu0
  %v1763 = vadd.f32 0.0, %v1762
  %1764 = vdwg.mxu0
  %1765 = vmatpush.msra.mxu0 %v1263
  %1766 = vmatpush.msra.mxu0 %v1260
  %1767 = vmatpush.msra.mxu0 %v1257
  %1768 = vmatpush.msra.mxu0 %v1254
  %1769 = vmatpush.msra.mxu0 %v1251
  %1770 = vmatpush.msra.mxu0 %v1248
  %1771 = vmatpush.msra.mxu0 %v1245
  %1772 = vmatpush.msra.mxu0 %v1242
  %1773 = vmatpush.msra.mxu0 %v1239
  %1774 = vmatpush.msra.mxu0 %v1236
  %1775 = vmatpush.msra.mxu0 %v1233
  %1776 = vmatpush.msra.mxu0 %v1230
  %1777 = vmatpush.msra.mxu0 %v1227
  %1778 = vmatpush.msra.mxu0 %v1224
  %1779 = vmatpush.msra.mxu0 %v1221
  %1780 = vmatpush.msra.mxu0 %v1218
  %1781 = vmatmul.f32.gmra.mxu0 %v1719
  %v1782 = vpop.f32.mrf.mxu0
  %v1783 = vadd.f32 0.0, %v1782
  %1784 = vdwg.mxu0
  %v1785 = vadd.f32 %v1722, %v1743
  %v1786 = vxor.u32 %v1785, 2147483648
  %v1787 = vmul.f32 %v1786, 1.442695
  %v1788 = vpow.pop %v1787
  %v1789 = vadd.f32 %v1788, 1.0
  %v1790 = vrcp.pop %v1789
  %v1791 = vmul.f32 %v1789, %v1790
  %v1792 = vsub.f32 1.0, %v1791
  %v1793 = vmul.f32 %v1790, %v1792
  %v1794 = vadd.f32 %v1790, %v1793
  %vm1795 = vweird.f32 %v1789
  %vm1796 = vweird.f32 %v1790
  %vm1797 = vmor %vm1795, %vm1796
  %v1798 = vsel %vm1797, %v1790, %v1794
  %v1799 = vand.u32 2147483647, %v1789
  %vm1800 = vcmp.eq.f32.partialorder %v1799, 8.507059e+37
  %v1801 = vand.u32 %v1789, 2147483648
  %v1802 = vor.u32 1.1754944e-38, %v1801
  %v1803 = vsel %vm1800, %v1802, %v1798
  %v1804 = vmul.f32 1.0, %v1803
  %v1805 = vadd.f32 %v1723, %v1763
  %v1806 = vxor.u32 %v1805, 2147483648
  %v1807 = vmul.f32 %v1806, 1.442695
  %v1808 = vpow.pop %v1807
  %v1809 = vadd.f32 %v1808, 1.0
  %v1810 = vrcp.pop %v1809
  %v1811 = vmul.f32 %v1809, %v1810
  %v1812 = vsub.f32 1.0, %v1811
  %v1813 = vmul.f32 %v1810, %v1812
  %v1814 = vadd.f32 %v1810, %v1813
  %vm1815 = vweird.f32 %v1809
  %vm1816 = vweird.f32 %v1810
  %vm1817 = vmor %vm1815, %vm1816
  %v1818 = vsel %vm1817, %v1810, %v1814
  %v1819 = vand.u32 2147483647, %v1809
  %vm1820 = vcmp.eq.f32.partialorder %v1819, 8.507059e+37
  %v1821 = vand.u32 %v1809, 2147483648
  %v1822 = vor.u32 1.1754944e-38, %v1821
  %v1823 = vsel %vm1820, %v1822, %v1818
  %v1824 = vmul.f32 1.0, %v1823
  %v1825 = vadd.f32 %v1783, %v1371
  %v1826 = vmul.f32 %v1804, %v1825
  %v1827 = vadd.f32 %v1724, %v1826
  %v1828 = vtanh.pop %v1827
  %v1829 = vsub.f32 1.0, %v1824
  %v1830 = vmul.f32 %v1829, %v1828
  %v1831 = vmul.f32 %v1824, %v1719
  %v1832 = vadd.f32 %v1830, %v1831
  %s1833 = smul.addr %s657, 8
  %s1834 = scalar_lea.vmem [#allocation3], %s1833
  %v1835 = vld [vmem:[%s1834] sm:$0xff]
  %v1836 = vld [vmem:[%s1834 + $0x8] sm:$0xff]
  %v1837 = vld [vmem:[%s1834 + $0x10] sm:$0xff]
  %1838 = vmatpush.msra.mxu0 %v1261
  %1839 = vmatpush.msra.mxu0 %v1258
  %1840 = vmatpush.msra.mxu0 %v1255
  %1841 = vmatpush.msra.mxu0 %v1252
  %1842 = vmatpush.msra.mxu0 %v1249
  %1843 = vmatpush.msra.mxu0 %v1246
  %1844 = vmatpush.msra.mxu0 %v1243
  %1845 = vmatpush.msra.mxu0 %v1240
  %1846 = vmatpush.msra.mxu0 %v1237
  %1847 = vmatpush.msra.mxu0 %v1234
  %1848 = vmatpush.msra.mxu0 %v1231
  %1849 = vmatpush.msra.mxu0 %v1228
  %1850 = vmatpush.msra.mxu0 %v1225
  %1851 = vmatpush.msra.mxu0 %v1222
  %1852 = vmatpush.msra.mxu0 %v1219
  %1853 = vmatpush.msra.mxu0 %v1216
  %1854 = vmatmul.f32.gmra.mxu0 %v1832
  %v1855 = vpop.f32.mrf.mxu0
  %v1856 = vadd.f32 0.0, %v1855
  %1857 = vdwg.mxu0
  %1858 = vmatpush.msra.mxu0 %v1262
  %1859 = vmatpush.msra.mxu0 %v1259
  %1860 = vmatpush.msra.mxu0 %v1256
  %1861 = vmatpush.msra.mxu0 %v1253
  %1862 = vmatpush.msra.mxu0 %v1250
  %1863 = vmatpush.msra.mxu0 %v1247
  %1864 = vmatpush.msra.mxu0 %v1244
  %1865 = vmatpush.msra.mxu0 %v1241
  %1866 = vmatpush.msra.mxu0 %v1238
  %1867 = vmatpush.msra.mxu0 %v1235
  %1868 = vmatpush.msra.mxu0 %v1232
  %1869 = vmatpush.msra.mxu0 %v1229
  %1870 = vmatpush.msra.mxu0 %v1226
  %1871 = vmatpush.msra.mxu0 %v1223
  %1872 = vmatpush.msra.mxu0 %v1220
  %1873 = vmatpush.msra.mxu0 %v1217
  %1874 = vmatmul.f32.gmra.mxu0 %v1832
  %v1875 = vpop.f32.mrf.mxu0
  %v1876 = vadd.f32 0.0, %v1875
  %1877 = vdwg.mxu0
  %1878 = vmatpush.msra.mxu0 %v1263
  %1879 = vmatpush.msra.mxu0 %v1260
  %1880 = vmatpush.msra.mxu0 %v1257
  %1881 = vmatpush.msra.mxu0 %v1254
  %1882 = vmatpush.msra.mxu0 %v1251
  %1883 = vmatpush.msra.mxu0 %v1248
  %1884 = vmatpush.msra.mxu0 %v1245
  %1885 = vmatpush.msra.mxu0 %v1242
  %1886 = vmatpush.msra.mxu0 %v1239
  %1887 = vmatpush.msra.mxu0 %v1236
  %1888 = vmatpush.msra.mxu0 %v1233
  %1889 = vmatpush.msra.mxu0 %v1230
  %1890 = vmatpush.msra.mxu0 %v1227
  %1891 = vmatpush.msra.mxu0 %v1224
  %1892 = vmatpush.msra.mxu0 %v1221
  %1893 = vmatpush.msra.mxu0 %v1218
  %1894 = vmatmul.f32.gmra.mxu0 %v1832
  %v1895 = vpop.f32.mrf.mxu0
  %v1896 = vadd.f32 0.0, %v1895
  %1897 = vdwg.mxu0
  %v1898 = vadd.f32 %v1835, %v1856
  %v1899 = vxor.u32 %v1898, 2147483648
  %v1900 = vmul.f32 %v1899, 1.442695
  %v1901 = vpow.pop %v1900
  %v1902 = vadd.f32 %v1901, 1.0
  %v1903 = vrcp.pop %v1902
  %v1904 = vmul.f32 %v1902, %v1903
  %v1905 = vsub.f32 1.0, %v1904
  %v1906 = vmul.f32 %v1903, %v1905
  %v1907 = vadd.f32 %v1903, %v1906
  %vm1908 = vweird.f32 %v1902
  %vm1909 = vweird.f32 %v1903
  %vm1910 = vmor %vm1908, %vm1909
  %v1911 = vsel %vm1910, %v1903, %v1907
  %v1912 = vand.u32 2147483647, %v1902
  %vm1913 = vcmp.eq.f32.partialorder %v1912, 8.507059e+37
  %v1914 = vand.u32 %v1902, 2147483648
  %v1915 = vor.u32 1.1754944e-38, %v1914
  %v1916 = vsel %vm1913, %v1915, %v1911
  %v1917 = vmul.f32 1.0, %v1916
  %v1918 = vadd.f32 %v1836, %v1876
  %v1919 = vxor.u32 %v1918, 2147483648
  %v1920 = vmul.f32 %v1919, 1.442695
  %v1921 = vpow.pop %v1920
  %v1922 = vadd.f32 %v1921, 1.0
  %v1923 = vrcp.pop %v1922
  %v1924 = vmul.f32 %v1922, %v1923
  %v1925 = vsub.f32 1.0, %v1924
  %v1926 = vmul.f32 %v1923, %v1925
  %v1927 = vadd.f32 %v1923, %v1926
  %vm1928 = vweird.f32 %v1922
  %vm1929 = vweird.f32 %v1923
  %vm1930 = vmor %vm1928, %vm1929
  %v1931 = vsel %vm1930, %v1923, %v1927
  %v1932 = vand.u32 2147483647, %v1922
  %vm1933 = vcmp.eq.f32.partialorder %v1932, 8.507059e+37
  %v1934 = vand.u32 %v1922, 2147483648
  %v1935 = vor.u32 1.1754944e-38, %v1934
  %v1936 = vsel %vm1933, %v1935, %v1931
  %v1937 = vmul.f32 1.0, %v1936
  %v1938 = vadd.f32 %v1896, %v1371
  %v1939 = vmul.f32 %v1917, %v1938
  %v1940 = vadd.f32 %v1837, %v1939
  %v1941 = vtanh.pop %v1940
  %v1942 = vsub.f32 1.0, %v1937
  %v1943 = vmul.f32 %v1942, %v1941
  %v1944 = vmul.f32 %v1937, %v1832
  %v1945 = vadd.f32 %v1943, %v1944
  %s1946 = smul.addr %s773, 8
  %s1947 = scalar_lea.vmem [#allocation3], %s1946
  %v1948 = vld [vmem:[%s1947] sm:$0xff]
  %v1949 = vld [vmem:[%s1947 + $0x8] sm:$0xff]
  %v1950 = vld [vmem:[%s1947 + $0x10] sm:$0xff]
  %1951 = vmatpush.msra.mxu0 %v1261
  %1952 = vmatpush.msra.mxu0 %v1258
  %1953 = vmatpush.msra.mxu0 %v1255
  %1954 = vmatpush.msra.mxu0 %v1252
  %1955 = vmatpush.msra.mxu0 %v1249
  %1956 = vmatpush.msra.mxu0 %v1246
  %1957 = vmatpush.msra.mxu0 %v1243
  %1958 = vmatpush.msra.mxu0 %v1240
  %1959 = vmatpush.msra.mxu0 %v1237
  %1960 = vmatpush.msra.mxu0 %v1234
  %1961 = vmatpush.msra.mxu0 %v1231
  %1962 = vmatpush.msra.mxu0 %v1228
  %1963 = vmatpush.msra.mxu0 %v1225
  %1964 = vmatpush.msra.mxu0 %v1222
  %1965 = vmatpush.msra.mxu0 %v1219
  %1966 = vmatpush.msra.mxu0 %v1216
  %1967 = vmatmul.f32.gmra.mxu0 %v1945
  %v1968 = vpop.f32.mrf.mxu0
  %v1969 = vadd.f32 0.0, %v1968
  %1970 = vdwg.mxu0
  %1971 = vmatpush.msra.mxu0 %v1262
  %1972 = vmatpush.msra.mxu0 %v1259
  %1973 = vmatpush.msra.mxu0 %v1256
  %1974 = vmatpush.msra.mxu0 %v1253
  %1975 = vmatpush.msra.mxu0 %v1250
  %1976 = vmatpush.msra.mxu0 %v1247
  %1977 = vmatpush.msra.mxu0 %v1244
  %1978 = vmatpush.msra.mxu0 %v1241
  %1979 = vmatpush.msra.mxu0 %v1238
  %1980 = vmatpush.msra.mxu0 %v1235
  %1981 = vmatpush.msra.mxu0 %v1232
  %1982 = vmatpush.msra.mxu0 %v1229
  %1983 = vmatpush.msra.mxu0 %v1226
  %1984 = vmatpush.msra.mxu0 %v1223
  %1985 = vmatpush.msra.mxu0 %v1220
  %1986 = vmatpush.msra.mxu0 %v1217
  %1987 = vmatmul.f32.gmra.mxu0 %v1945
  %v1988 = vpop.f32.mrf.mxu0
  %v1989 = vadd.f32 0.0, %v1988
  %1990 = vdwg.mxu0
  %1991 = vmatpush.msra.mxu0 %v1263
  %1992 = vmatpush.msra.mxu0 %v1260
  %1993 = vmatpush.msra.mxu0 %v1257
  %1994 = vmatpush.msra.mxu0 %v1254
  %1995 = vmatpush.msra.mxu0 %v1251
  %1996 = vmatpush.msra.mxu0 %v1248
  %1997 = vmatpush.msra.mxu0 %v1245
  %1998 = vmatpush.msra.mxu0 %v1242
  %1999 = vmatpush.msra.mxu0 %v1239
  %2000 = vmatpush.msra.mxu0 %v1236
  %2001 = vmatpush.msra.mxu0 %v1233
  %2002 = vmatpush.msra.mxu0 %v1230
  %2003 = vmatpush.msra.mxu0 %v1227
  %2004 = vmatpush.msra.mxu0 %v1224
  %2005 = vmatpush.msra.mxu0 %v1221
  %2006 = vmatpush.msra.mxu0 %v1218
  %2007 = vmatmul.f32.gmra.mxu0 %v1945
  %v2008 = vpop.f32.mrf.mxu0
  %v2009 = vadd.f32 0.0, %v2008
  %2010 = vdwg.mxu0
  %v2011 = vadd.f32 %v1948, %v1969
  %v2012 = vxor.u32 %v2011, 2147483648
  %v2013 = vmul.f32 %v2012, 1.442695
  %v2014 = vpow.pop %v2013
  %v2015 = vadd.f32 %v2014, 1.0
  %v2016 = vrcp.pop %v2015
  %v2017 = vmul.f32 %v2015, %v2016
  %v2018 = vsub.f32 1.0, %v2017
  %v2019 = vmul.f32 %v2016, %v2018
  %v2020 = vadd.f32 %v2016, %v2019
  %vm2021 = vweird.f32 %v2015
  %vm2022 = vweird.f32 %v2016
  %vm2023 = vmor %vm2021, %vm2022
  %v2024 = vsel %vm2023, %v2016, %v2020
  %v2025 = vand.u32 2147483647, %v2015
  %vm2026 = vcmp.eq.f32.partialorder %v2025, 8.507059e+37
  %v2027 = vand.u32 %v2015, 2147483648
  %v2028 = vor.u32 1.1754944e-38, %v2027
  %v2029 = vsel %vm2026, %v2028, %v2024
  %v2030 = vmul.f32 1.0, %v2029
  %v2031 = vadd.f32 %v1949, %v1989
  %v2032 = vxor.u32 %v2031, 2147483648
  %v2033 = vmul.f32 %v2032, 1.442695
  %v2034 = vpow.pop %v2033
  %v2035 = vadd.f32 %v2034, 1.0
  %v2036 = vrcp.pop %v2035
  %v2037 = vmul.f32 %v2035, %v2036
  %v2038 = vsub.f32 1.0, %v2037
  %v2039 = vmul.f32 %v2036, %v2038
  %v2040 = vadd.f32 %v2036, %v2039
  %vm2041 = vweird.f32 %v2035
  %vm2042 = vweird.f32 %v2036
  %vm2043 = vmor %vm2041, %vm2042
  %v2044 = vsel %vm2043, %v2036, %v2040
  %v2045 = vand.u32 2147483647, %v2035
  %vm2046 = vcmp.eq.f32.partialorder %v2045, 8.507059e+37
  %v2047 = vand.u32 %v2035, 2147483648
  %v2048 = vor.u32 1.1754944e-38, %v2047
  %v2049 = vsel %vm2046, %v2048, %v2044
  %v2050 = vmul.f32 1.0, %v2049
  %v2051 = vadd.f32 %v2009, %v1371
  %v2052 = vmul.f32 %v2030, %v2051
  %v2053 = vadd.f32 %v1950, %v2052
  %v2054 = vtanh.pop %v2053
  %v2055 = vsub.f32 1.0, %v2050
  %v2056 = vmul.f32 %v2055, %v2054
  %v2057 = vmul.f32 %v2050, %v1945
  %v2058 = vadd.f32 %v2056, %v2057
  %s2059 = smul.addr %s889, 8
  %s2060 = scalar_lea.vmem [#allocation3], %s2059
  %v2061 = vld [vmem:[%s2060] sm:$0xff]
  %v2062 = vld [vmem:[%s2060 + $0x8] sm:$0xff]
  %v2063 = vld [vmem:[%s2060 + $0x10] sm:$0xff]
  %2064 = vmatpush.msra.mxu0 %v1261
  %2065 = vmatpush.msra.mxu0 %v1258
  %2066 = vmatpush.msra.mxu0 %v1255
  %2067 = vmatpush.msra.mxu0 %v1252
  %2068 = vmatpush.msra.mxu0 %v1249
  %2069 = vmatpush.msra.mxu0 %v1246
  %2070 = vmatpush.msra.mxu0 %v1243
  %2071 = vmatpush.msra.mxu0 %v1240
  %2072 = vmatpush.msra.mxu0 %v1237
  %2073 = vmatpush.msra.mxu0 %v1234
  %2074 = vmatpush.msra.mxu0 %v1231
  %2075 = vmatpush.msra.mxu0 %v1228
  %2076 = vmatpush.msra.mxu0 %v1225
  %2077 = vmatpush.msra.mxu0 %v1222
  %2078 = vmatpush.msra.mxu0 %v1219
  %2079 = vmatpush.msra.mxu0 %v1216
  %2080 = vmatmul.f32.gmra.mxu0 %v2058
  %v2081 = vpop.f32.mrf.mxu0
  %v2082 = vadd.f32 0.0, %v2081
  %2083 = vdwg.mxu0
  %2084 = vmatpush.msra.mxu0 %v1262
  %2085 = vmatpush.msra.mxu0 %v1259
  %2086 = vmatpush.msra.mxu0 %v1256
  %2087 = vmatpush.msra.mxu0 %v1253
  %2088 = vmatpush.msra.mxu0 %v1250
  %2089 = vmatpush.msra.mxu0 %v1247
  %2090 = vmatpush.msra.mxu0 %v1244
  %2091 = vmatpush.msra.mxu0 %v1241
  %2092 = vmatpush.msra.mxu0 %v1238
  %2093 = vmatpush.msra.mxu0 %v1235
  %2094 = vmatpush.msra.mxu0 %v1232
  %2095 = vmatpush.msra.mxu0 %v1229
  %2096 = vmatpush.msra.mxu0 %v1226
  %2097 = vmatpush.msra.mxu0 %v1223
  %2098 = vmatpush.msra.mxu0 %v1220
  %2099 = vmatpush.msra.mxu0 %v1217
  %2100 = vmatmul.f32.gmra.mxu0 %v2058
  %v2101 = vpop.f32.mrf.mxu0
  %v2102 = vadd.f32 0.0, %v2101
  %2103 = vdwg.mxu0
  %2104 = vmatpush.msra.mxu0 %v1263
  %2105 = vmatpush.msra.mxu0 %v1260
  %2106 = vmatpush.msra.mxu0 %v1257
  %2107 = vmatpush.msra.mxu0 %v1254
  %2108 = vmatpush.msra.mxu0 %v1251
  %2109 = vmatpush.msra.mxu0 %v1248
  %2110 = vmatpush.msra.mxu0 %v1245
  %2111 = vmatpush.msra.mxu0 %v1242
  %2112 = vmatpush.msra.mxu0 %v1239
  %2113 = vmatpush.msra.mxu0 %v1236
  %2114 = vmatpush.msra.mxu0 %v1233
  %2115 = vmatpush.msra.mxu0 %v1230
  %2116 = vmatpush.msra.mxu0 %v1227
  %2117 = vmatpush.msra.mxu0 %v1224
  %2118 = vmatpush.msra.mxu0 %v1221
  %2119 = vmatpush.msra.mxu0 %v1218
  %2120 = vmatmul.f32.gmra.mxu0 %v2058
  %v2121 = vpop.f32.mrf.mxu0
  %v2122 = vadd.f32 0.0, %v2121
  %2123 = vdwg.mxu0
  %v2124 = vadd.f32 %v2061, %v2082
  %v2125 = vxor.u32 %v2124, 2147483648
  %v2126 = vmul.f32 %v2125, 1.442695
  %v2127 = vpow.pop %v2126
  %v2128 = vadd.f32 %v2127, 1.0
  %v2129 = vrcp.pop %v2128
  %v2130 = vmul.f32 %v2128, %v2129
  %v2131 = vsub.f32 1.0, %v2130
  %v2132 = vmul.f32 %v2129, %v2131
  %v2133 = vadd.f32 %v2129, %v2132
  %vm2134 = vweird.f32 %v2128
  %vm2135 = vweird.f32 %v2129
  %vm2136 = vmor %vm2134, %vm2135
  %v2137 = vsel %vm2136, %v2129, %v2133
  %v2138 = vand.u32 2147483647, %v2128
  %vm2139 = vcmp.eq.f32.partialorder %v2138, 8.507059e+37
  %v2140 = vand.u32 %v2128, 2147483648
  %v2141 = vor.u32 1.1754944e-38, %v2140
  %v2142 = vsel %vm2139, %v2141, %v2137
  %v2143 = vmul.f32 1.0, %v2142
  %v2144 = vadd.f32 %v2062, %v2102
  %v2145 = vxor.u32 %v2144, 2147483648
  %v2146 = vmul.f32 %v2145, 1.442695
  %v2147 = vpow.pop %v2146
  %v2148 = vadd.f32 %v2147, 1.0
  %v2149 = vrcp.pop %v2148
  %v2150 = vmul.f32 %v2148, %v2149
  %v2151 = vsub.f32 1.0, %v2150
  %v2152 = vmul.f32 %v2149, %v2151
  %v2153 = vadd.f32 %v2149, %v2152
  %vm2154 = vweird.f32 %v2148
  %vm2155 = vweird.f32 %v2149
  %vm2156 = vmor %vm2154, %vm2155
  %v2157 = vsel %vm2156, %v2149, %v2153
  %v2158 = vand.u32 2147483647, %v2148
  %vm2159 = vcmp.eq.f32.partialorder %v2158, 8.507059e+37
  %v2160 = vand.u32 %v2148, 2147483648
  %v2161 = vor.u32 1.1754944e-38, %v2160
  %v2162 = vsel %vm2159, %v2161, %v2157
  %v2163 = vmul.f32 1.0, %v2162
  %v2164 = vadd.f32 %v2122, %v1371
  %v2165 = vmul.f32 %v2143, %v2164
  %v2166 = vadd.f32 %v2063, %v2165
  %v2167 = vtanh.pop %v2166
  %v2168 = vsub.f32 1.0, %v2163
  %v2169 = vmul.f32 %v2168, %v2167
  %v2170 = vmul.f32 %v2163, %v2058
  %v2171 = vadd.f32 %v2169, %v2170
  %2172 = vst [vmem:[%s7] sm:$0xff] %v2171
  // Predicated region
  $region30: #{rnn_encoder_forward.1} parent=0 // pred_check
    _
  $region31: #{rnn_encoder_forward.1} parent=0 // pred_check_branch
    %2174 = sbr.rel (0) target = $region33
  $region32: #{rnn_encoder_forward.1} parent=0 // pred_region
    _
  $region33: #{rnn_encoder_forward.1} parent=0 // pred_fallthru
    _
  // Predicated region
  $region34: #{rnn_encoder_forward.1} parent=0 // pred_check
    _
  $region35: #{rnn_encoder_forward.1} parent=0 // pred_check_branch
    %2176 = sbr.rel (0) target = $region37
  $region36: #{rnn_encoder_forward.1} parent=0 // pred_region
    _
  $region37: #{rnn_encoder_forward.1} parent=0 // pred_fallthru
    _

</llo_original>
